<compile_context>
chip_gen: v7x
topology: tpu7x:2x2x1
jax: 0.10.0
libtpu: 0.0.40
codegen_flags: <defaults>
</compile_context>

<pallas_src>
import functools

import jax
import jax.numpy as jnp
from jax.experimental import pallas as pl
from jax.experimental.pallas import tpu as pltpu

F32 = jnp.float32
BF16 = jnp.bfloat16
KERNEL_SIZE = 12
TCN_CHANNELS = (64, 128, 64)          # per stream; fused (block-diag) = (128, 256, 128)


def _gelu(x):
    # TODO(synk): nn.GELU() defaults to the exact erf form; erf lowering is not
    # guaranteed on Mosaic, so the tanh approximation is used (~1e-3 drift).
    return jax.nn.gelu(x, approximate=True)


def _n_taps(K, d, L):
    """Conv taps whose causal shift (K-1-k)*d lands inside a length-L window."""
    return min(K, (L - 1) // d + 1)


def _round_up(x, m):
    return (x + m - 1) // m * m


# ------------------------------ static layout -------------------------------- #

def make_layout(T, img_feat, imu_ch):
    """Static packing layout shared by the weight packer and the kernel."""
    K = KERNEL_SIZE
    n_blocks = len(TCN_CHANNELS)
    dil = tuple(2 ** i for i in range(n_blocks))                    # (1, 2, 4)
    ntaps = tuple(_n_taps(K, d, T) for d in dil)                    # (8, 4, 2) for T=8
    couts = tuple(2 * c for c in TCN_CHANNELS)                      # (128, 256, 128)
    cin0 = _round_up(img_feat + imu_ch, 16)                         # 38 -> 48 (bf16 tile)
    cins = (cin0,) + couts[:-1]                                     # (48, 128, 256)

    def offsets(rows):
        offs, acc = [], 0
        for r in rows:
            offs.append(acc)
            acc += r
        return tuple(offs), acc

    # early buffer (width couts[0]=128): block-0 conv1 / conv2 / downsample
    e_offs, e_rows = offsets((ntaps[0] * cins[0], ntaps[0] * couts[0], cins[0]))
    # late 256-wide buffer: block-1 conv1 / conv2 / downsample
    a_offs, a_rows = offsets((ntaps[1] * cins[1], ntaps[1] * couts[1], cins[1]))
    # late 128-wide buffer: block-2 conv1 / conv2 / downsample, mlp W1, mlp W2(pad)
    b_offs, b_rows = offsets((ntaps[2] * cins[2], ntaps[2] * couts[2], cins[2],
                              couts[2], couts[2]))
    return dict(img_feat=img_feat, imu_ch=imu_ch, cin0=cin0,
                cins=cins, couts=couts, dil=dil, ntaps=ntaps,
                e_offs=e_offs, e_rows=e_rows,
                a_offs=a_offs, a_rows=a_rows,
                b_offs=b_offs, b_rows=b_rows)


# ----------------------------- fused Pallas kernel --------------------------- #

def _fused_forward_kernel(img_ref, imu_ref, bbw_ref, w_early_ref,
                          w256_hbm_ref, w128_hbm_ref, bias_ref,
                          tcn_out_ref, act_ref,
                          w256_vmem, w128_vmem, dma_sem,
                          *, lo):
    T = img_ref.shape[0]
    Fdim, imu_ch, cin0 = lo["img_feat"], lo["imu_ch"], lo["cin0"]
    cins, couts, dil, ntaps = lo["cins"], lo["couts"], lo["dil"], lo["ntaps"]
    e_offs, a_offs, b_offs = lo["e_offs"], lo["a_offs"], lo["b_offs"]

    # Kick off the late-weight DMAs (block-1/2 + head, ~1.1 MB bf16) immediately
    # so they stream in underneath backbone / block-0 compute.
    cp256 = pltpu.make_async_copy(w256_hbm_ref, w256_vmem, dma_sem.at[0])
    cp128 = pltpu.make_async_copy(w128_hbm_ref, w128_vmem, dma_sem.at[1])
    cp256.start()
    cp128.start()

    def bias(row, width):                              # f32 (1, width)
        return bias_ref[row:row + 1, 0:width]

    def mxu(x_f32, w_bf16):
        # bf16 operands to the MXU, f32 accumulation; elementwise math stays f32.
        return jnp.dot(x_f32.astype(BF16), w_bf16, preferred_element_type=F32)

    def causal_conv(x, w_ref, off, n, d, cin, cout, b_row):
        """Dilated causal Conv1d (+Chomp) as ONE im2col matmul.  x: (T, cin) f32."""
        pad = (n - 1) * d
        xp = jnp.concatenate([jnp.zeros((pad, cin), F32), x], axis=0) if pad else x
        cols = [xp[j * d: j * d + T, :] for j in range(n)]            # static slices
        win = cols[0] if n == 1 else jnp.concatenate(cols, axis=1)    # (T, n*cin)
        return mxu(win, w_ref[off: off + n * cin, :]) + bias(b_row, cout)

    def temporal_block(x, w_ref, offs, d, n, cin, cout, b0):
        c1, c2, dn = offs
        h = _gelu(causal_conv(x, w_ref, c1, n, d, cin, cout, b0))
        h = _gelu(causal_conv(h, w_ref, c2, n, d, cout, cout, b0 + 1))
        # 1x1 downsample conv == Linear over channels (Cin != Cout for every block)
        res = mxu(x, w_ref[dn: dn + cin, :]) + bias(b0 + 2, cout)
        return _gelu(h + res)

    # Frozen synthetic image backbone, avg-pool folded into the expanded weight:
    # feats = img_flat @ (repeat(bbw, HW)/HW) + bb          -- one (T, C*H*W) dot.
    feats = mxu(img_ref[...], bbw_ref[...]) + bias(0, Fdim)           # (T, F)

    # Fused (block-diagonal) TCN input: [ V feats | IMU | zero pad ] -> (T, cin0).
    zpad = cin0 - Fdim - imu_ch
    x = jnp.concatenate([feats, imu_ref[...], jnp.zeros((T, zpad), F32)], axis=1)

    # Block 0: weights came in through the regular VMEM input set (already resident).
    x = temporal_block(x, w_early_ref, e_offs, dil[0], ntaps[0], cins[0], couts[0], 1)

    cp256.wait()                                                       # block-1 weights
    x = temporal_block(x, w256_vmem, a_offs, dil[1], ntaps[1], cins[1], couts[1], 4)

    cp128.wait()                                                       # block-2 + head
    x = temporal_block(x, w128_vmem, b_offs[:3], dil[2], ntaps[2], cins[2], couts[2], 7)

    tcn_out_ref[...] = x                                               # (T, 128) lane-dense

    # mlp_head: Linear(128,128) -> LeakyReLU(0.2) -> Linear(128, action_dim) padded
    # to a 128-wide lane-dense tile (sliced to action_dim in the wrapper).
    h = mxu(x, w128_vmem[b_offs[3]: b_offs[3] + couts[2], :]) + bias(10, couts[2])
    h = jnp.where(h >= 0.0, h, 0.2 * h)
    act_ref[...] = mxu(h, w128_vmem[b_offs[4]: b_offs[4] + couts[2], :]) + bias(11, 128)


# ------------------------------ JAX wrapper ----------------------------------- #

def quadrotor_forward(images, imu, packed, *, action_dim):
    """images: (T, C, H, W) NCHW; imu: (T, imu_channels). Returns (tcn_output, actions)."""
    T, C, H, W = images.shape
    img_flat = images.reshape(T, C * H * W)
    lo = make_layout(T, packed["bbw"].shape[1], imu.shape[1])

    kernel = functools.partial(_fused_forward_kernel, lo=lo)
    vmem = pl.BlockSpec(memory_space=pltpu.MemorySpace.VMEM)
    hbm = pl.BlockSpec(memory_space=pl.ANY)        # late weights: manual DMA overlap

    tcn_out, act_pad = pl.pallas_call(
        kernel,
        out_shape=(jax.ShapeDtypeStruct((T, lo["couts"][-1]), F32),
                   jax.ShapeDtypeStruct((T, 128), F32)),
        in_specs=[vmem, vmem, vmem, vmem, hbm, hbm, vmem],
        out_specs=(vmem, vmem),
        scratch_shapes=[pltpu.VMEM(packed["w_late256"].shape, BF16),
                        pltpu.VMEM(packed["w_late128"].shape, BF16),
                        pltpu.SemaphoreType.DMA((2,))],
        compiler_params=pltpu.CompilerParams(vmem_limit_bytes=32 * 1024 * 1024),
    )(img_flat, imu, packed["bbw"], packed["w_early"],
      packed["w_late256"], packed["w_late128"], packed["biases"])
    return tcn_out, act_pad[:, :action_dim]


# --------------------------- deterministic init ------------------------------- #

def _init_linear(key, cin, cout):
    kw, kb = jax.random.split(key)
    bound = 1.0 / jnp.sqrt(cin)
    w = jax.random.uniform(kw, (cin, cout), F32, -bound, bound)
    b = jax.random.uniform(kb, (1, cout), F32, -bound, bound)
    return w, b


def _init_conv(key, K, cin, cout):
    kw, kb = jax.random.split(key)
    bound = 1.0 / jnp.sqrt(cin * K)
    w = jax.random.uniform(kw, (K, cin, cout), F32, -bound, bound)    # (K, Cin, Cout)
    b = jax.random.uniform(kb, (1, cout), F32, -bound, bound)
    return w, b


def init_tcn_params(key, num_inputs, num_channels, K):
    params = []
    cin = num_inputs
    for cout in num_channels:
        key, k1, k2, k3 = jax.random.split(key, 4)
        W1, b1 = _init_conv(k1, K, cin, cout)
        W2, b2 = _init_conv(k2, K, cout, cout)
        Wd, bd = _init_linear(k3, cin, cout)                          # 1x1 downsample
        params.append((W1, b1, W2, b2, Wd, bd))
        cin = cout
    return params


# ------------------------ one-time packing (outside jit) ---------------------- #

def prepare_packed_params(raw, T, H, W):
    """Fold the avg-pool into the backbone weight, drop dead causal taps, fuse the
    two TCNs block-diagonally, im2col-flatten the conv weights, cast weights to
    bf16 and pack them into three contiguous buffers (few big DMAs)."""
    K = KERNEL_SIZE
    bbw, bbb = raw["backbone"]                                        # (C, F), (1, F)
    Fdim = bbw.shape[1]
    imu_ch = raw["imu_tcn"][0][0].shape[1]
    HW = H * W
    lo = make_layout(T, Fdim, imu_ch)
    ntaps, cins, couts = lo["ntaps"], lo["cins"], lo["couts"]

    def bd_conv(Wv, Wi, n, cin_pad):
        cvi, cvo = Wv.shape[1], Wv.shape[2]
        cii, cio = Wi.shape[1], Wi.shape[2]
        w = jnp.zeros((n, cin_pad, cvo + cio), F32)
        w = w.at[:, :cvi, :cvo].set(Wv[K - n:])                       # exact tap drop
        w = w.at[:, cvi:cvi + cii, cvo:].set(Wi[K - n:])
        return w.reshape(n * cin_pad, cvo + cio)

    def bd_dense(Wv, Wi, cin_pad):
        cvi, cvo = Wv.shape
        cii, cio = Wi.shape
        w = jnp.zeros((cin_pad, cvo + cio), F32)
        w = w.at[:cvi, :cvo].set(Wv)
        w = w.at[cvi:cvi + cii, cvo:].set(Wi)
        return w

    fused = []
    for bi in range(len(TCN_CHANNELS)):
        W1v, b1v, W2v, b2v, Wdv, bdv = raw["v_tcn"][bi]
        W1i, b1i, W2i, b2i, Wdi, bdi = raw["imu_tcn"][bi]
        fused.append((
            bd_conv(W1v, W1i, ntaps[bi], cins[bi]), jnp.concatenate([b1v, b1i], 1),
            bd_conv(W2v, W2i, ntaps[bi], couts[bi]), jnp.concatenate([b2v, b2i], 1),
            bd_dense(Wdv, Wdi, cins[bi]), jnp.concatenate([bdv, bdi], 1),
        ))

    mw1, mb1, mw2, mb2 = raw["mlp"]
    action_dim = mw2.shape[1]
    mw2p = jnp.zeros((mw2.shape[0], 128), F32).at[:, :action_dim].set(mw2)
    mb2p = jnp.zeros((1, 128), F32).at[:, :action_dim].set(mb2)

    # Backbone: fold mean pool over H*W into the linear weight (exact /HW).
    bbw_exp = (jnp.repeat(bbw, HW, axis=0) / HW).astype(BF16)         # (C*HW, F) bf16

    def pack(mats, width):
        for m in mats:
            assert m.shape[1] == width and m.shape[0] % 16 == 0
        return jnp.concatenate(mats, axis=0).astype(BF16)

    (W1_0, b1_0, W2_0, b2_0, Wd_0, bd_0) = fused[0]
    (W1_1, b1_1, W2_1, b2_1, Wd_1, bd_1) = fused[1]
    (W1_2, b1_2, W2_2, b2_2, Wd_2, bd_2) = fused[2]

    w_early = pack([W1_0, W2_0, Wd_0], couts[0])
    w_late256 = pack([W1_1, W2_1, Wd_1], couts[1])
    w_late128 = pack([W1_2, W2_2, Wd_2, mw1, mw2p], couts[2])
    assert w_early.shape[0] == lo["e_rows"]
    assert w_late256.shape[0] == lo["a_rows"]
    assert w_late128.shape[0] == lo["b_rows"]

    bias_rows = [bbb, b1_0, b2_0, bd_0, b1_1, b2_1, bd_1,
                 b1_2, b2_2, bd_2, mb1, mb2p]
    biases = jnp.zeros((16, 256), F32)
    for r, b in enumerate(bias_rows):
        biases = biases.at[r, :b.shape[1]].set(b[0])

    return dict(bbw=bbw_exp, w_early=w_early, w_late256=w_late256,
                w_late128=w_late128, biases=biases)


# ---------------------------- pure-JAX reference ------------------------------ #

def _reference_forward(images, imu, raw, K):
    """Full-K, per-stream, f32 reference (no tap dropping, no fusion, no bf16)."""
    with jax.default_matmul_precision("highest"):
        T, C, H, W = images.shape
        pooled = images.reshape(T, C, H * W).mean(axis=-1)
        bw, bb = raw["backbone"]
        feats = pooled @ bw + bb

        def conv(x, Wk, b, d):
            L, cin = x.shape
            P = (K - 1) * d
            xp = jnp.concatenate([jnp.zeros((P, cin), F32), x], axis=0)
            y = jnp.zeros((L, Wk.shape[-1]), F32) + b
            for k in range(K):
                y = y + xp[k * d: k * d + L, :] @ Wk[k]
            return y

        def tcn(x, blocks):
            for i, (W1, b1, W2, b2, Wd, bd) in enumerate(blocks):
                d = 2 ** i
                h = _gelu(conv(x, W1, b1, d))
                h = _gelu(conv(h, W2, b2, d))
                x = _gelu(h + (x @ Wd + bd))
            return x

        v = tcn(feats, raw["v_tcn"])
        u = tcn(imu, raw["imu_tcn"])
        t = jnp.concatenate([v, u], axis=1)
        w1, b1, w2, b2 = raw["mlp"]
        h = t @ w1 + b1
        h = jnp.where(h >= 0, h, 0.2 * h)
        return t, h @ w2 + b2


if __name__ == "__main__":
    # Small shapes consistent with the module: T=8 frames, images 4x16x16,
    # imu_channels=6, image_feature_dim=32, action_dim=4, TCN [64,128,64], k=12.
    T, C_IMG, H, W = 8, 4, 16, 16
    IMU_CH, IMG_FEAT, ACTION_DIM = 6, 32, 4

    key = jax.random.PRNGKey(0)
    k_img, k_imu, k_bb, k_v, k_i, k_m1, k_m2 = jax.random.split(key, 7)

    images = jax.random.normal(k_img, (T, C_IMG, H, W), F32)
    imu = jax.random.normal(k_imu, (T, IMU_CH), F32)

    raw_params = {
        # TODO(synk): the real image_backbone is an arbitrary frozen nn.Module;
        # stand-in here is global-average-pool + Linear (same as prior version).
        "backbone": _init_linear(k_bb, C_IMG, IMG_FEAT),
        "v_tcn": init_tcn_params(k_v, IMG_FEAT, list(TCN_CHANNELS), KERNEL_SIZE),
        "imu_tcn": init_tcn_params(k_i, IMU_CH, list(TCN_CHANNELS), KERNEL_SIZE),
        "mlp": (*_init_linear(k_m1, 2 * TCN_CHANNELS[-1], 2 * TCN_CHANNELS[-1]),
                *_init_linear(k_m2, 2 * TCN_CHANNELS[-1], ACTION_DIM)),
    }
    packed = prepare_packed_params(raw_params, T=T, H=H, W=W)

    fwd = jax.jit(functools.partial(quadrotor_forward, action_dim=ACTION_DIM))
    tcn_out, actions = fwd(images, imu, packed)
    jax.block_until_ready((tcn_out, actions))

    assert tcn_out.shape == (T, 2 * TCN_CHANNELS[-1]) and tcn_out.dtype == F32
    assert actions.shape == (T, ACTION_DIM) and actions.dtype == F32

    # Correctness vs. an f32, full-K, per-stream reference.  Tap dropping /
    # block-diag fusion / pool folding are exact; the tolerance covers the bf16
    # MXU operands (weights + activations, f32 accumulation).
    ref_tcn, ref_act = _reference_forward(images, imu, raw_params, KERNEL_SIZE)
    assert jnp.allclose(tcn_out, ref_tcn, atol=2.5e-2, rtol=2.5e-2)
    assert jnp.allclose(actions, ref_act, atol=2.5e-2, rtol=2.5e-2)

    print("KERNEL_OK")
</pallas_src>

<mosaic_0001>
module attributes {stable_mosaic.version = 11 : i64} {
  func.func @_fused_forward_kernel(%arg0: memref<8x1024xf32, #tpu.memory_space<vmem>>, %arg1: memref<8x6xf32, #tpu.memory_space<vmem>>, %arg2: memref<1024x32xbf16, #tpu.memory_space<vmem>>, %arg3: memref<1456x128xbf16, #tpu.memory_space<vmem>>, %arg4: memref<1664x256xbf16, #tpu.memory_space<any>>, %arg5: memref<1280x128xbf16, #tpu.memory_space<any>>, %arg6: memref<16x256xf32, #tpu.memory_space<vmem>>, %arg7: memref<8x128xf32, #tpu.memory_space<vmem>>, %arg8: memref<8x128xf32, #tpu.memory_space<vmem>>, %arg9: memref<1664x256xbf16, #tpu.memory_space<vmem>>, %arg10: memref<1280x128xbf16, #tpu.memory_space<vmem>>, %arg11: memref<2x!tpu.dma_semaphore, #tpu.memory_space<semaphore_mem>>) attributes {dimension_semantics = [], scalar_prefetch = 0 : i64, scratch_operands = 3 : i64, tpu.core_type = #tpu.core_type<tc>} {
    %c0_i32 = arith.constant 0 : i32
    %0 = tpu.memref_slice %arg11[%c0_i32] : memref<2x!tpu.dma_semaphore, #tpu.memory_space<semaphore_mem>> -> memref<1x!tpu.dma_semaphore, #tpu.memory_space<semaphore_mem>>
    %1 = tpu.memref_squeeze %0 : memref<1x!tpu.dma_semaphore, #tpu.memory_space<semaphore_mem>> -> memref<!tpu.dma_semaphore, #tpu.memory_space<semaphore_mem>>
    tpu.enqueue_dma source(%arg4 : memref<1664x256xbf16, #tpu.memory_space<any>>) target(%arg9 : memref<1664x256xbf16, #tpu.memory_space<vmem>>) target_semaphore(%1 : memref<!tpu.dma_semaphore, #tpu.memory_space<semaphore_mem>>)
    %c1_i32 = arith.constant 1 : i32
    %2 = tpu.memref_slice %arg11[%c1_i32] : memref<2x!tpu.dma_semaphore, #tpu.memory_space<semaphore_mem>> -> memref<1x!tpu.dma_semaphore, #tpu.memory_space<semaphore_mem>>
    %3 = tpu.memref_squeeze %2 : memref<1x!tpu.dma_semaphore, #tpu.memory_space<semaphore_mem>> -> memref<!tpu.dma_semaphore, #tpu.memory_space<semaphore_mem>>
    tpu.enqueue_dma source(%arg5 : memref<1280x128xbf16, #tpu.memory_space<any>>) target(%arg10 : memref<1280x128xbf16, #tpu.memory_space<vmem>>) target_semaphore(%3 : memref<!tpu.dma_semaphore, #tpu.memory_space<semaphore_mem>>)
    %c0 = arith.constant 0 : index
    %c0_0 = arith.constant 0 : index
    %4 = vector.load %arg0[%c0, %c0_0] : memref<8x1024xf32, #tpu.memory_space<vmem>>, vector<8x1024xf32>
    %c0_1 = arith.constant 0 : index
    %c0_2 = arith.constant 0 : index
    %5 = vector.load %arg2[%c0_1, %c0_2] : memref<1024x32xbf16, #tpu.memory_space<vmem>>, vector<1024x32xbf16>
    %6 = arith.truncf %4 : vector<8x1024xf32> to vector<8x1024xbf16>
    %cst = arith.constant dense<0.000000e+00> : vector<8x32xf32>
    %7 = tpu.matmul %6, %5, %cst {dimension_numbers = #tpu.dot_dimension_numbers<[1], [0], [0], [1], [0, 0, 1, 1], [], []>} : vector<8x1024xbf16>, vector<1024x32xbf16>, vector<8x32xf32> -> vector<8x32xf32>
    %c0_3 = arith.constant 0 : index
    %c0_4 = arith.constant 0 : index
    %8 = vector.load %arg6[%c0_3, %c0_4] : memref<16x256xf32, #tpu.memory_space<vmem>>, vector<1x32xf32>
    %9 = vector.broadcast %8 : vector<1x32xf32> to vector<8x32xf32>
    %10 = arith.addf %7, %9 : vector<8x32xf32>
    %c0_5 = arith.constant 0 : index
    %c0_6 = arith.constant 0 : index
    %11 = vector.load %arg1[%c0_5, %c0_6] : memref<8x6xf32, #tpu.memory_space<vmem>>, vector<8x6xf32>
    %cst_7 = arith.constant 0.000000e+00 : f32
    %12 = vector.broadcast %cst_7 : f32 to vector<8x10xf32>
    %13 = tpu.concatenate %10, %11, %12 in 1 : vector<8x32xf32>, vector<8x6xf32>, vector<8x10xf32> -> vector<8x48xf32>
    %cst_8 = arith.constant 0.000000e+00 : f32
    %14 = vector.broadcast %cst_8 : f32 to vector<7x48xf32>
    %15 = tpu.concatenate %14, %13 in 0 : vector<7x48xf32>, vector<8x48xf32> -> vector<15x48xf32>
    %16 = vector.extract_strided_slice %15 {offsets = [0, 0], sizes = [8, 48], strides = [1, 1]} : vector<15x48xf32> to vector<8x48xf32>
    %17 = vector.extract_strided_slice %15 {offsets = [1, 0], sizes = [8, 48], strides = [1, 1]} : vector<15x48xf32> to vector<8x48xf32>
    %18 = vector.extract_strided_slice %15 {offsets = [2, 0], sizes = [8, 48], strides = [1, 1]} : vector<15x48xf32> to vector<8x48xf32>
    %19 = vector.extract_strided_slice %15 {offsets = [3, 0], sizes = [8, 48], strides = [1, 1]} : vector<15x48xf32> to vector<8x48xf32>
    %20 = vector.extract_strided_slice %15 {offsets = [4, 0], sizes = [8, 48], strides = [1, 1]} : vector<15x48xf32> to vector<8x48xf32>
    %21 = vector.extract_strided_slice %15 {offsets = [5, 0], sizes = [8, 48], strides = [1, 1]} : vector<15x48xf32> to vector<8x48xf32>
    %22 = vector.extract_strided_slice %15 {offsets = [6, 0], sizes = [8, 48], strides = [1, 1]} : vector<15x48xf32> to vector<8x48xf32>
    %23 = vector.extract_strided_slice %15 {offsets = [7, 0], sizes = [8, 48], strides = [1, 1]} : vector<15x48xf32> to vector<8x48xf32>
    %24 = tpu.concatenate %16, %17, %18, %19, %20, %21, %22, %23 in 1 : vector<8x48xf32>, vector<8x48xf32>, vector<8x48xf32>, vector<8x48xf32>, vector<8x48xf32>, vector<8x48xf32>, vector<8x48xf32>, vector<8x48xf32> -> vector<8x384xf32>
    %c0_9 = arith.constant 0 : index
    %c0_10 = arith.constant 0 : index
    %25 = vector.load %arg3[%c0_9, %c0_10] : memref<1456x128xbf16, #tpu.memory_space<vmem>>, vector<384x128xbf16>
    %26 = arith.truncf %24 : vector<8x384xf32> to vector<8x384xbf16>
    %cst_11 = arith.constant dense<0.000000e+00> : vector<8x128xf32>
    %27 = tpu.matmul %26, %25, %cst_11 {dimension_numbers = #tpu.dot_dimension_numbers<[1], [0], [0], [1], [0, 0, 1, 1], [], []>} : vector<8x384xbf16>, vector<384x128xbf16>, vector<8x128xf32> -> vector<8x128xf32>
    %c1 = arith.constant 1 : index
    %c0_12 = arith.constant 0 : index
    %28 = vector.load %arg6[%c1, %c0_12] : memref<16x256xf32, #tpu.memory_space<vmem>>, vector<1x128xf32>
    %29 = vector.broadcast %28 : vector<1x128xf32> to vector<8x128xf32>
    %30 = arith.addf %27, %29 : vector<8x128xf32>
    %31 = arith.mulf %30, %30 : vector<8x128xf32>
    %32 = arith.mulf %30, %31 : vector<8x128xf32>
    %cst_13 = arith.constant 4.471500e-02 : f32
    %33 = vector.broadcast %cst_13 : f32 to vector<8x128xf32>
    %34 = arith.mulf %33, %32 : vector<8x128xf32>
    %35 = arith.addf %30, %34 : vector<8x128xf32>
    %cst_14 = arith.constant 0.797884583 : f32
    %36 = vector.broadcast %cst_14 : f32 to vector<8x128xf32>
    %37 = arith.mulf %36, %35 : vector<8x128xf32>
    %38 = math.tanh %37 : vector<8x128xf32>
    %cst_15 = arith.constant 1.000000e+00 : f32
    %39 = vector.broadcast %cst_15 : f32 to vector<8x128xf32>
    %40 = arith.addf %39, %38 : vector<8x128xf32>
    %cst_16 = arith.constant 5.000000e-01 : f32
    %41 = vector.broadcast %cst_16 : f32 to vector<8x128xf32>
    %42 = arith.mulf %41, %40 : vector<8x128xf32>
    %43 = arith.mulf %30, %42 : vector<8x128xf32>
    %cst_17 = arith.constant 0.000000e+00 : f32
    %44 = vector.broadcast %cst_17 : f32 to vector<7x128xf32>
    %45 = tpu.concatenate %44, %43 in 0 : vector<7x128xf32>, vector<8x128xf32> -> vector<15x128xf32>
    %46 = vector.extract_strided_slice %45 {offsets = [0, 0], sizes = [8, 128], strides = [1, 1]} : vector<15x128xf32> to vector<8x128xf32>
    %47 = vector.extract_strided_slice %45 {offsets = [1, 0], sizes = [8, 128], strides = [1, 1]} : vector<15x128xf32> to vector<8x128xf32>
    %48 = vector.extract_strided_slice %45 {offsets = [2, 0], sizes = [8, 128], strides = [1, 1]} : vector<15x128xf32> to vector<8x128xf32>
    %49 = vector.extract_strided_slice %45 {offsets = [3, 0], sizes = [8, 128], strides = [1, 1]} : vector<15x128xf32> to vector<8x128xf32>
    %50 = vector.extract_strided_slice %45 {offsets = [4, 0], sizes = [8, 128], strides = [1, 1]} : vector<15x128xf32> to vector<8x128xf32>
    %51 = vector.extract_strided_slice %45 {offsets = [5, 0], sizes = [8, 128], strides = [1, 1]} : vector<15x128xf32> to vector<8x128xf32>
    %52 = vector.extract_strided_slice %45 {offsets = [6, 0], sizes = [8, 128], strides = [1, 1]} : vector<15x128xf32> to vector<8x128xf32>
    %53 = vector.extract_strided_slice %45 {offsets = [7, 0], sizes = [8, 128], strides = [1, 1]} : vector<15x128xf32> to vector<8x128xf32>
    %54 = tpu.concatenate %46, %47, %48, %49, %50, %51, %52, %53 in 1 : vector<8x128xf32>, vector<8x128xf32>, vector<8x128xf32>, vector<8x128xf32>, vector<8x128xf32>, vector<8x128xf32>, vector<8x128xf32>, vector<8x128xf32> -> vector<8x1024xf32>
    %c384 = arith.constant 384 : index
    %c0_18 = arith.constant 0 : index
    %55 = vector.load %arg3[%c384, %c0_18] : memref<1456x128xbf16, #tpu.memory_space<vmem>>, vector<1024x128xbf16>
    %56 = arith.truncf %54 : vector<8x1024xf32> to vector<8x1024xbf16>
    %cst_19 = arith.constant dense<0.000000e+00> : vector<8x128xf32>
    %57 = tpu.matmul %56, %55, %cst_19 {dimension_numbers = #tpu.dot_dimension_numbers<[1], [0], [0], [1], [0, 0, 1, 1], [], []>} : vector<8x1024xbf16>, vector<1024x128xbf16>, vector<8x128xf32> -> vector<8x128xf32>
    %c2 = arith.constant 2 : index
    %c0_20 = arith.constant 0 : index
    %58 = vector.load %arg6[%c2, %c0_20] : memref<16x256xf32, #tpu.memory_space<vmem>>, vector<1x128xf32>
    %59 = vector.broadcast %58 : vector<1x128xf32> to vector<8x128xf32>
    %60 = arith.addf %57, %59 : vector<8x128xf32>
    %61 = arith.mulf %60, %60 : vector<8x128xf32>
    %62 = arith.mulf %60, %61 : vector<8x128xf32>
    %cst_21 = arith.constant 4.471500e-02 : f32
    %63 = vector.broadcast %cst_21 : f32 to vector<8x128xf32>
    %64 = arith.mulf %63, %62 : vector<8x128xf32>
    %65 = arith.addf %60, %64 : vector<8x128xf32>
    %cst_22 = arith.constant 0.797884583 : f32
    %66 = vector.broadcast %cst_22 : f32 to vector<8x128xf32>
    %67 = arith.mulf %66, %65 : vector<8x128xf32>
    %68 = math.tanh %67 : vector<8x128xf32>
    %cst_23 = arith.constant 1.000000e+00 : f32
    %69 = vector.broadcast %cst_23 : f32 to vector<8x128xf32>
    %70 = arith.addf %69, %68 : vector<8x128xf32>
    %cst_24 = arith.constant 5.000000e-01 : f32
    %71 = vector.broadcast %cst_24 : f32 to vector<8x128xf32>
    %72 = arith.mulf %71, %70 : vector<8x128xf32>
    %73 = arith.mulf %60, %72 : vector<8x128xf32>
    %c1408 = arith.constant 1408 : index
    %c0_25 = arith.constant 0 : index
    %74 = vector.load %arg3[%c1408, %c0_25] : memref<1456x128xbf16, #tpu.memory_space<vmem>>, vector<48x128xbf16>
    %75 = arith.truncf %13 : vector<8x48xf32> to vector<8x48xbf16>
    %cst_26 = arith.constant dense<0.000000e+00> : vector<8x128xf32>
    %76 = tpu.matmul %75, %74, %cst_26 {dimension_numbers = #tpu.dot_dimension_numbers<[1], [0], [0], [1], [0, 0, 1, 1], [], []>} : vector<8x48xbf16>, vector<48x128xbf16>, vector<8x128xf32> -> vector<8x128xf32>
    %c3 = arith.constant 3 : index
    %c0_27 = arith.constant 0 : index
    %77 = vector.load %arg6[%c3, %c0_27] : memref<16x256xf32, #tpu.memory_space<vmem>>, vector<1x128xf32>
    %78 = vector.broadcast %77 : vector<1x128xf32> to vector<8x128xf32>
    %79 = arith.addf %76, %78 : vector<8x128xf32>
    %80 = arith.addf %73, %79 : vector<8x128xf32>
    %81 = arith.mulf %80, %80 : vector<8x128xf32>
    %82 = arith.mulf %80, %81 : vector<8x128xf32>
    %cst_28 = arith.constant 4.471500e-02 : f32
    %83 = vector.broadcast %cst_28 : f32 to vector<8x128xf32>
    %84 = arith.mulf %83, %82 : vector<8x128xf32>
    %85 = arith.addf %80, %84 : vector<8x128xf32>
    %cst_29 = arith.constant 0.797884583 : f32
    %86 = vector.broadcast %cst_29 : f32 to vector<8x128xf32>
    %87 = arith.mulf %86, %85 : vector<8x128xf32>
    %88 = math.tanh %87 : vector<8x128xf32>
    %cst_30 = arith.constant 1.000000e+00 : f32
    %89 = vector.broadcast %cst_30 : f32 to vector<8x128xf32>
    %90 = arith.addf %89, %88 : vector<8x128xf32>
    %cst_31 = arith.constant 5.000000e-01 : f32
    %91 = vector.broadcast %cst_31 : f32 to vector<8x128xf32>
    %92 = arith.mulf %91, %90 : vector<8x128xf32>
    %93 = arith.mulf %80, %92 : vector<8x128xf32>
    %c0_i32_32 = arith.constant 0 : i32
    %94 = tpu.memref_slice %arg11[%c0_i32_32] : memref<2x!tpu.dma_semaphore, #tpu.memory_space<semaphore_mem>> -> memref<1x!tpu.dma_semaphore, #tpu.memory_space<semaphore_mem>>
    %95 = tpu.memref_squeeze %94 : memref<1x!tpu.dma_semaphore, #tpu.memory_space<semaphore_mem>> -> memref<!tpu.dma_semaphore, #tpu.memory_space<semaphore_mem>>
    tpu.wait_dma2 semaphore(%95 : memref<!tpu.dma_semaphore, #tpu.memory_space<semaphore_mem>>) src(%arg4 : memref<1664x256xbf16, #tpu.memory_space<any>>) dst(%arg9 : memref<1664x256xbf16, #tpu.memory_space<vmem>>)
    %cst_33 = arith.constant 0.000000e+00 : f32
    %96 = vector.broadcast %cst_33 : f32 to vector<6x128xf32>
    %97 = tpu.concatenate %96, %93 in 0 : vector<6x128xf32>, vector<8x128xf32> -> vector<14x128xf32>
    %98 = vector.extract_strided_slice %97 {offsets = [0, 0], sizes = [8, 128], strides = [1, 1]} : vector<14x128xf32> to vector<8x128xf32>
    %99 = vector.extract_strided_slice %97 {offsets = [2, 0], sizes = [8, 128], strides = [1, 1]} : vector<14x128xf32> to vector<8x128xf32>
    %100 = vector.extract_strided_slice %97 {offsets = [4, 0], sizes = [8, 128], strides = [1, 1]} : vector<14x128xf32> to vector<8x128xf32>
    %101 = vector.extract_strided_slice %97 {offsets = [6, 0], sizes = [8, 128], strides = [1, 1]} : vector<14x128xf32> to vector<8x128xf32>
    %102 = tpu.concatenate %98, %99, %100, %101 in 1 : vector<8x128xf32>, vector<8x128xf32>, vector<8x128xf32>, vector<8x128xf32> -> vector<8x512xf32>
    %c0_34 = arith.constant 0 : index
    %c0_35 = arith.constant 0 : index
    %103 = vector.load %arg9[%c0_34, %c0_35] : memref<1664x256xbf16, #tpu.memory_space<vmem>>, vector<512x256xbf16>
    %104 = arith.truncf %102 : vector<8x512xf32> to vector<8x512xbf16>
    %cst_36 = arith.constant dense<0.000000e+00> : vector<8x256xf32>
    %105 = tpu.matmul %104, %103, %cst_36 {dimension_numbers = #tpu.dot_dimension_numbers<[1], [0], [0], [1], [0, 0, 1, 1], [], []>} : vector<8x512xbf16>, vector<512x256xbf16>, vector<8x256xf32> -> vector<8x256xf32>
    %c4 = arith.constant 4 : index
    %c0_37 = arith.constant 0 : index
    %106 = vector.load %arg6[%c4, %c0_37] : memref<16x256xf32, #tpu.memory_space<vmem>>, vector<1x256xf32>
    %107 = vector.broadcast %106 : vector<1x256xf32> to vector<8x256xf32>
    %108 = arith.addf %105, %107 : vector<8x256xf32>
    %109 = arith.mulf %108, %108 : vector<8x256xf32>
    %110 = arith.mulf %108, %109 : vector<8x256xf32>
    %cst_38 = arith.constant 4.471500e-02 : f32
    %111 = vector.broadcast %cst_38 : f32 to vector<8x256xf32>
    %112 = arith.mulf %111, %110 : vector<8x256xf32>
    %113 = arith.addf %108, %112 : vector<8x256xf32>
    %cst_39 = arith.constant 0.797884583 : f32
    %114 = vector.broadcast %cst_39 : f32 to vector<8x256xf32>
    %115 = arith.mulf %114, %113 : vector<8x256xf32>
    %116 = math.tanh %115 : vector<8x256xf32>
    %cst_40 = arith.constant 1.000000e+00 : f32
    %117 = vector.broadcast %cst_40 : f32 to vector<8x256xf32>
    %118 = arith.addf %117, %116 : vector<8x256xf32>
    %cst_41 = arith.constant 5.000000e-01 : f32
    %119 = vector.broadcast %cst_41 : f32 to vector<8x256xf32>
    %120 = arith.mulf %119, %118 : vector<8x256xf32>
    %121 = arith.mulf %108, %120 : vector<8x256xf32>
    %cst_42 = arith.constant 0.000000e+00 : f32
    %122 = vector.broadcast %cst_42 : f32 to vector<6x256xf32>
    %123 = tpu.concatenate %122, %121 in 0 : vector<6x256xf32>, vector<8x256xf32> -> vector<14x256xf32>
    %124 = vector.extract_strided_slice %123 {offsets = [0, 0], sizes = [8, 256], strides = [1, 1]} : vector<14x256xf32> to vector<8x256xf32>
    %125 = vector.extract_strided_slice %123 {offsets = [2, 0], sizes = [8, 256], strides = [1, 1]} : vector<14x256xf32> to vector<8x256xf32>
    %126 = vector.extract_strided_slice %123 {offsets = [4, 0], sizes = [8, 256], strides = [1, 1]} : vector<14x256xf32> to vector<8x256xf32>
    %127 = vector.extract_strided_slice %123 {offsets = [6, 0], sizes = [8, 256], strides = [1, 1]} : vector<14x256xf32> to vector<8x256xf32>
    %128 = tpu.concatenate %124, %125, %126, %127 in 1 : vector<8x256xf32>, vector<8x256xf32>, vector<8x256xf32>, vector<8x256xf32> -> vector<8x1024xf32>
    %c512 = arith.constant 512 : index
    %c0_43 = arith.constant 0 : index
    %129 = vector.load %arg9[%c512, %c0_43] : memref<1664x256xbf16, #tpu.memory_space<vmem>>, vector<1024x256xbf16>
    %130 = arith.truncf %128 : vector<8x1024xf32> to vector<8x1024xbf16>
    %cst_44 = arith.constant dense<0.000000e+00> : vector<8x256xf32>
    %131 = tpu.matmul %130, %129, %cst_44 {dimension_numbers = #tpu.dot_dimension_numbers<[1], [0], [0], [1], [0, 0, 1, 1], [], []>} : vector<8x1024xbf16>, vector<1024x256xbf16>, vector<8x256xf32> -> vector<8x256xf32>
    %c5 = arith.constant 5 : index
    %c0_45 = arith.constant 0 : index
    %132 = vector.load %arg6[%c5, %c0_45] : memref<16x256xf32, #tpu.memory_space<vmem>>, vector<1x256xf32>
    %133 = vector.broadcast %132 : vector<1x256xf32> to vector<8x256xf32>
    %134 = arith.addf %131, %133 : vector<8x256xf32>
    %135 = arith.mulf %134, %134 : vector<8x256xf32>
    %136 = arith.mulf %134, %135 : vector<8x256xf32>
    %cst_46 = arith.constant 4.471500e-02 : f32
    %137 = vector.broadcast %cst_46 : f32 to vector<8x256xf32>
    %138 = arith.mulf %137, %136 : vector<8x256xf32>
    %139 = arith.addf %134, %138 : vector<8x256xf32>
    %cst_47 = arith.constant 0.797884583 : f32
    %140 = vector.broadcast %cst_47 : f32 to vector<8x256xf32>
    %141 = arith.mulf %140, %139 : vector<8x256xf32>
    %142 = math.tanh %141 : vector<8x256xf32>
    %cst_48 = arith.constant 1.000000e+00 : f32
    %143 = vector.broadcast %cst_48 : f32 to vector<8x256xf32>
    %144 = arith.addf %143, %142 : vector<8x256xf32>
    %cst_49 = arith.constant 5.000000e-01 : f32
    %145 = vector.broadcast %cst_49 : f32 to vector<8x256xf32>
    %146 = arith.mulf %145, %144 : vector<8x256xf32>
    %147 = arith.mulf %134, %146 : vector<8x256xf32>
    %c1536 = arith.constant 1536 : index
    %c0_50 = arith.constant 0 : index
    %148 = vector.load %arg9[%c1536, %c0_50] : memref<1664x256xbf16, #tpu.memory_space<vmem>>, vector<128x256xbf16>
    %149 = arith.truncf %93 : vector<8x128xf32> to vector<8x128xbf16>
    %cst_51 = arith.constant dense<0.000000e+00> : vector<8x256xf32>
    %150 = tpu.matmul %149, %148, %cst_51 {dimension_numbers = #tpu.dot_dimension_numbers<[1], [0], [0], [1], [0, 0, 1, 1], [], []>} : vector<8x128xbf16>, vector<128x256xbf16>, vector<8x256xf32> -> vector<8x256xf32>
    %c6 = arith.constant 6 : index
    %c0_52 = arith.constant 0 : index
    %151 = vector.load %arg6[%c6, %c0_52] : memref<16x256xf32, #tpu.memory_space<vmem>>, vector<1x256xf32>
    %152 = vector.broadcast %151 : vector<1x256xf32> to vector<8x256xf32>
    %153 = arith.addf %150, %152 : vector<8x256xf32>
    %154 = arith.addf %147, %153 : vector<8x256xf32>
    %155 = arith.mulf %154, %154 : vector<8x256xf32>
    %156 = arith.mulf %154, %155 : vector<8x256xf32>
    %cst_53 = arith.constant 4.471500e-02 : f32
    %157 = vector.broadcast %cst_53 : f32 to vector<8x256xf32>
    %158 = arith.mulf %157, %156 : vector<8x256xf32>
    %159 = arith.addf %154, %158 : vector<8x256xf32>
    %cst_54 = arith.constant 0.797884583 : f32
    %160 = vector.broadcast %cst_54 : f32 to vector<8x256xf32>
    %161 = arith.mulf %160, %159 : vector<8x256xf32>
    %162 = math.tanh %161 : vector<8x256xf32>
    %cst_55 = arith.constant 1.000000e+00 : f32
    %163 = vector.broadcast %cst_55 : f32 to vector<8x256xf32>
    %164 = arith.addf %163, %162 : vector<8x256xf32>
    %cst_56 = arith.constant 5.000000e-01 : f32
    %165 = vector.broadcast %cst_56 : f32 to vector<8x256xf32>
    %166 = arith.mulf %165, %164 : vector<8x256xf32>
    %167 = arith.mulf %154, %166 : vector<8x256xf32>
    %c1_i32_57 = arith.constant 1 : i32
    %168 = tpu.memref_slice %arg11[%c1_i32_57] : memref<2x!tpu.dma_semaphore, #tpu.memory_space<semaphore_mem>> -> memref<1x!tpu.dma_semaphore, #tpu.memory_space<semaphore_mem>>
    %169 = tpu.memref_squeeze %168 : memref<1x!tpu.dma_semaphore, #tpu.memory_space<semaphore_mem>> -> memref<!tpu.dma_semaphore, #tpu.memory_space<semaphore_mem>>
    tpu.wait_dma2 semaphore(%169 : memref<!tpu.dma_semaphore, #tpu.memory_space<semaphore_mem>>) src(%arg5 : memref<1280x128xbf16, #tpu.memory_space<any>>) dst(%arg10 : memref<1280x128xbf16, #tpu.memory_space<vmem>>)
    %cst_58 = arith.constant 0.000000e+00 : f32
    %170 = vector.broadcast %cst_58 : f32 to vector<4x256xf32>
    %171 = tpu.concatenate %170, %167 in 0 : vector<4x256xf32>, vector<8x256xf32> -> vector<12x256xf32>
    %172 = vector.extract_strided_slice %171 {offsets = [0, 0], sizes = [8, 256], strides = [1, 1]} : vector<12x256xf32> to vector<8x256xf32>
    %173 = vector.extract_strided_slice %171 {offsets = [4, 0], sizes = [8, 256], strides = [1, 1]} : vector<12x256xf32> to vector<8x256xf32>
    %174 = tpu.concatenate %172, %173 in 1 : vector<8x256xf32>, vector<8x256xf32> -> vector<8x512xf32>
    %c0_59 = arith.constant 0 : index
    %c0_60 = arith.constant 0 : index
    %175 = vector.load %arg10[%c0_59, %c0_60] : memref<1280x128xbf16, #tpu.memory_space<vmem>>, vector<512x128xbf16>
    %176 = arith.truncf %174 : vector<8x512xf32> to vector<8x512xbf16>
    %cst_61 = arith.constant dense<0.000000e+00> : vector<8x128xf32>
    %177 = tpu.matmul %176, %175, %cst_61 {dimension_numbers = #tpu.dot_dimension_numbers<[1], [0], [0], [1], [0, 0, 1, 1], [], []>} : vector<8x512xbf16>, vector<512x128xbf16>, vector<8x128xf32> -> vector<8x128xf32>
    %c7 = arith.constant 7 : index
    %c0_62 = arith.constant 0 : index
    %178 = vector.load %arg6[%c7, %c0_62] : memref<16x256xf32, #tpu.memory_space<vmem>>, vector<1x128xf32>
    %179 = vector.broadcast %178 : vector<1x128xf32> to vector<8x128xf32>
    %180 = arith.addf %177, %179 : vector<8x128xf32>
    %181 = arith.mulf %180, %180 : vector<8x128xf32>
    %182 = arith.mulf %180, %181 : vector<8x128xf32>
    %cst_63 = arith.constant 4.471500e-02 : f32
    %183 = vector.broadcast %cst_63 : f32 to vector<8x128xf32>
    %184 = arith.mulf %183, %182 : vector<8x128xf32>
    %185 = arith.addf %180, %184 : vector<8x128xf32>
    %cst_64 = arith.constant 0.797884583 : f32
    %186 = vector.broadcast %cst_64 : f32 to vector<8x128xf32>
    %187 = arith.mulf %186, %185 : vector<8x128xf32>
    %188 = math.tanh %187 : vector<8x128xf32>
    %cst_65 = arith.constant 1.000000e+00 : f32
    %189 = vector.broadcast %cst_65 : f32 to vector<8x128xf32>
    %190 = arith.addf %189, %188 : vector<8x128xf32>
    %cst_66 = arith.constant 5.000000e-01 : f32
    %191 = vector.broadcast %cst_66 : f32 to vector<8x128xf32>
    %192 = arith.mulf %191, %190 : vector<8x128xf32>
    %193 = arith.mulf %180, %192 : vector<8x128xf32>
    %cst_67 = arith.constant 0.000000e+00 : f32
    %194 = vector.broadcast %cst_67 : f32 to vector<4x128xf32>
    %195 = tpu.concatenate %194, %193 in 0 : vector<4x128xf32>, vector<8x128xf32> -> vector<12x128xf32>
    %196 = vector.extract_strided_slice %195 {offsets = [0, 0], sizes = [8, 128], strides = [1, 1]} : vector<12x128xf32> to vector<8x128xf32>
    %197 = vector.extract_strided_slice %195 {offsets = [4, 0], sizes = [8, 128], strides = [1, 1]} : vector<12x128xf32> to vector<8x128xf32>
    %198 = tpu.concatenate %196, %197 in 1 : vector<8x128xf32>, vector<8x128xf32> -> vector<8x256xf32>
    %c512_68 = arith.constant 512 : index
    %c0_69 = arith.constant 0 : index
    %199 = vector.load %arg10[%c512_68, %c0_69] : memref<1280x128xbf16, #tpu.memory_space<vmem>>, vector<256x128xbf16>
    %200 = arith.truncf %198 : vector<8x256xf32> to vector<8x256xbf16>
    %cst_70 = arith.constant dense<0.000000e+00> : vector<8x128xf32>
    %201 = tpu.matmul %200, %199, %cst_70 {dimension_numbers = #tpu.dot_dimension_numbers<[1], [0], [0], [1], [0, 0, 1, 1], [], []>} : vector<8x256xbf16>, vector<256x128xbf16>, vector<8x128xf32> -> vector<8x128xf32>
    %c8 = arith.constant 8 : index
    %c0_71 = arith.constant 0 : index
    %202 = vector.load %arg6[%c8, %c0_71] : memref<16x256xf32, #tpu.memory_space<vmem>>, vector<1x128xf32>
    %203 = vector.broadcast %202 : vector<1x128xf32> to vector<8x128xf32>
    %204 = arith.addf %201, %203 : vector<8x128xf32>
    %205 = arith.mulf %204, %204 : vector<8x128xf32>
    %206 = arith.mulf %204, %205 : vector<8x128xf32>
    %cst_72 = arith.constant 4.471500e-02 : f32
    %207 = vector.broadcast %cst_72 : f32 to vector<8x128xf32>
    %208 = arith.mulf %207, %206 : vector<8x128xf32>
    %209 = arith.addf %204, %208 : vector<8x128xf32>
    %cst_73 = arith.constant 0.797884583 : f32
    %210 = vector.broadcast %cst_73 : f32 to vector<8x128xf32>
    %211 = arith.mulf %210, %209 : vector<8x128xf32>
    %212 = math.tanh %211 : vector<8x128xf32>
    %cst_74 = arith.constant 1.000000e+00 : f32
    %213 = vector.broadcast %cst_74 : f32 to vector<8x128xf32>
    %214 = arith.addf %213, %212 : vector<8x128xf32>
    %cst_75 = arith.constant 5.000000e-01 : f32
    %215 = vector.broadcast %cst_75 : f32 to vector<8x128xf32>
    %216 = arith.mulf %215, %214 : vector<8x128xf32>
    %217 = arith.mulf %204, %216 : vector<8x128xf32>
    %c768 = arith.constant 768 : index
    %c0_76 = arith.constant 0 : index
    %218 = vector.load %arg10[%c768, %c0_76] : memref<1280x128xbf16, #tpu.memory_space<vmem>>, vector<256x128xbf16>
    %219 = arith.truncf %167 : vector<8x256xf32> to vector<8x256xbf16>
    %cst_77 = arith.constant dense<0.000000e+00> : vector<8x128xf32>
    %220 = tpu.matmul %219, %218, %cst_77 {dimension_numbers = #tpu.dot_dimension_numbers<[1], [0], [0], [1], [0, 0, 1, 1], [], []>} : vector<8x256xbf16>, vector<256x128xbf16>, vector<8x128xf32> -> vector<8x128xf32>
    %c9 = arith.constant 9 : index
    %c0_78 = arith.constant 0 : index
    %221 = vector.load %arg6[%c9, %c0_78] : memref<16x256xf32, #tpu.memory_space<vmem>>, vector<1x128xf32>
    %222 = vector.broadcast %221 : vector<1x128xf32> to vector<8x128xf32>
    %223 = arith.addf %220, %222 : vector<8x128xf32>
    %224 = arith.addf %217, %223 : vector<8x128xf32>
    %225 = arith.mulf %224, %224 : vector<8x128xf32>
    %226 = arith.mulf %224, %225 : vector<8x128xf32>
    %cst_79 = arith.constant 4.471500e-02 : f32
    %227 = vector.broadcast %cst_79 : f32 to vector<8x128xf32>
    %228 = arith.mulf %227, %226 : vector<8x128xf32>
    %229 = arith.addf %224, %228 : vector<8x128xf32>
    %cst_80 = arith.constant 0.797884583 : f32
    %230 = vector.broadcast %cst_80 : f32 to vector<8x128xf32>
    %231 = arith.mulf %230, %229 : vector<8x128xf32>
    %232 = math.tanh %231 : vector<8x128xf32>
    %cst_81 = arith.constant 1.000000e+00 : f32
    %233 = vector.broadcast %cst_81 : f32 to vector<8x128xf32>
    %234 = arith.addf %233, %232 : vector<8x128xf32>
    %cst_82 = arith.constant 5.000000e-01 : f32
    %235 = vector.broadcast %cst_82 : f32 to vector<8x128xf32>
    %236 = arith.mulf %235, %234 : vector<8x128xf32>
    %237 = arith.mulf %224, %236 : vector<8x128xf32>
    %c0_83 = arith.constant 0 : index
    %c0_84 = arith.constant 0 : index
    %238 = vector.load %arg7[%c0_83, %c0_84] : memref<8x128xf32, #tpu.memory_space<vmem>>, vector<8x128xf32>
    tpu.vector_store %arg7[%c0_83, %c0_84], %237 {strides = array<i32>} : memref<8x128xf32, #tpu.memory_space<vmem>>, vector<8x128xf32>,
    %c1024 = arith.constant 1024 : index
    %c0_85 = arith.constant 0 : index
    %239 = vector.load %arg10[%c1024, %c0_85] : memref<1280x128xbf16, #tpu.memory_space<vmem>>, vector<128x128xbf16>
    %240 = arith.truncf %237 : vector<8x128xf32> to vector<8x128xbf16>
    %cst_86 = arith.constant dense<0.000000e+00> : vector<8x128xf32>
    %241 = tpu.matmul %240, %239, %cst_86 {dimension_numbers = #tpu.dot_dimension_numbers<[1], [0], [0], [1], [0, 0, 1, 1], [], []>} : vector<8x128xbf16>, vector<128x128xbf16>, vector<8x128xf32> -> vector<8x128xf32>
    %c10 = arith.constant 10 : index
    %c0_87 = arith.constant 0 : index
    %242 = vector.load %arg6[%c10, %c0_87] : memref<16x256xf32, #tpu.memory_space<vmem>>, vector<1x128xf32>
    %243 = vector.broadcast %242 : vector<1x128xf32> to vector<8x128xf32>
    %244 = arith.addf %241, %243 : vector<8x128xf32>
    %cst_88 = arith.constant 0.000000e+00 : f32
    %245 = vector.broadcast %cst_88 : f32 to vector<8x128xf32>
    %246 = arith.cmpf oge, %244, %245 : vector<8x128xf32>
    %cst_89 = arith.constant 2.000000e-01 : f32
    %247 = vector.broadcast %cst_89 : f32 to vector<8x128xf32>
    %248 = arith.mulf %247, %244 : vector<8x128xf32>
    %249 = arith.select %246, %244, %248 : vector<8x128xi1>, vector<8x128xf32>
    %c1152 = arith.constant 1152 : index
    %c0_90 = arith.constant 0 : index
    %250 = vector.load %arg10[%c1152, %c0_90] : memref<1280x128xbf16, #tpu.memory_space<vmem>>, vector<128x128xbf16>
    %251 = arith.truncf %249 : vector<8x128xf32> to vector<8x128xbf16>
    %cst_91 = arith.constant dense<0.000000e+00> : vector<8x128xf32>
    %252 = tpu.matmul %251, %250, %cst_91 {dimension_numbers = #tpu.dot_dimension_numbers<[1], [0], [0], [1], [0, 0, 1, 1], [], []>} : vector<8x128xbf16>, vector<128x128xbf16>, vector<8x128xf32> -> vector<8x128xf32>
    %c11 = arith.constant 11 : index
    %c0_92 = arith.constant 0 : index
    %253 = vector.load %arg6[%c11, %c0_92] : memref<16x256xf32, #tpu.memory_space<vmem>>, vector<1x128xf32>
    %254 = vector.broadcast %253 : vector<1x128xf32> to vector<8x128xf32>
    %255 = arith.addf %252, %254 : vector<8x128xf32>
    %c0_93 = arith.constant 0 : index
    %c0_94 = arith.constant 0 : index
    %256 = vector.load %arg8[%c0_93, %c0_94] : memref<8x128xf32, #tpu.memory_space<vmem>>, vector<8x128xf32>
    tpu.vector_store %arg8[%c0_93, %c0_94], %255 {strides = array<i32>} : memref<8x128xf32, #tpu.memory_space<vmem>>, vector<8x128xf32>,
    return
  }
}

</mosaic_0001>

<llo_original>
// kernel: quadrotor_forward.1
$region0: #{quadrotor_forward.1}
  #allocation0 [shape = 'u32[]', space=smem, size = 0x4, offset = 0x4, fixed_abs, tag = 'smem constant byte address 0x4 - core index']
  #allocation1 [shape = 'u32[144,128]{1,0:T(1,128)}', space=vmem, size = 0x12000, scoped, tag = 'internal scratch']
  #allocation2 [shape = 'bf16[1664,256]{1,0:T(16,128)(2,1)}', space=vmem, size = 0xd0000, scoped, tag = 'scratch operand']
  #allocation3 [shape = 'bf16[1280,128]{1,0:T(16,128)(2,1)}', space=vmem, size = 0x50000, scoped, tag = 'scratch operand']
  #allocation4 [shape = 's32[2]{0}', space=sflag, size = 0x8, scoped, tag = 'scratch operand']
  #allocation7 [shape = 's32[]', space=sflag, size = 0x4, offset = 0, fixed_abs, tag = 'sflag constant byte address 0x0 - dummy sync flag']
  #allocation9 [shape = 's32[]', space=sflag, size = 0x4, offset = 0, fixed_abs, tag = 'sflag constant byte address 0x0 - dummy sync flag']
  #allocation10 [shape = 's32[]', space=sflag, size = 0x4, offset = 0, fixed_abs, tag = 'sflag constant byte address 0x0 - dummy sync flag']
  #allocation11 [shape = 'u32[]', space=smem, size = 0x4, offset = 0x44, fixed_abs, tag = 'smem constant byte address 0x44 - assertion arg 0']
  #allocation12 [shape = 'u32[]', space=smem, size = 0x4, offset = 0x48, fixed_abs, tag = 'smem constant byte address 0x48 - assertion arg 1']
  %s0 = inlined_call_operand.vmem [shape: f32[8,1024], index: 0, kind: input, shape index: {}]
  %s1 = inlined_call_operand.vmem [shape: f32[8,6], index: 1, kind: input, shape index: {}]
  %s2 = inlined_call_operand.vmem [shape: bf16[1024,32], index: 2, kind: input, shape index: {}]
  %s3 = inlined_call_operand.vmem [shape: bf16[1456,128], index: 3, kind: input, shape index: {}]
  %s4 = inlined_call_operand.hbm [shape: bf16[1664,256], index: 4, kind: input, shape index: {}]
  %s5 = inlined_call_operand.hbm [shape: bf16[1280,128], index: 5, kind: input, shape index: {}]
  %s6 = inlined_call_operand.vmem [shape: f32[16,256], index: 6, kind: input, shape index: {}]
  %s7 = inlined_call_operand.hbm [shape: f32[8,128], index: 7, kind: output, shape index: {0}]
  %s8 = inlined_call_operand.vmem [shape: f32[8,128], index: 8, kind: output, shape index: {1}]
  %9 = xla_tuple %s7, %s8
  %s10 = sld [smem:[#allocation0]]
  $region42: #{quadrotor_forward.1} parent=0
    _
  %s12 = ssub.s32 1, %s10
  %s13 = scalar_select 0, %s12, %s10
  $region1: #{quadrotor_forward.1} parent=0
    #allocation5 [shape = 'u8[4096]{0}', space=vmem, size = 0x1000, scoped, tag = 'output window, operand 0, single buffered']
    #allocation6 [shape = 's32[1]{0}', space=sflag, size = 0x4, scoped, tag = 'scoped memory for quadrotor_forward.1']
    #allocation8 [shape = 'u32[9]{0}', space=smem, size = 0x24, scoped, tag = 'DMA stride descriptor']
    %14 = vsyncpa [#allocation6], 0
    // Predicated region
    $region2: #{quadrotor_forward.1} parent=1 // pred_check
      _
    $region3: #{quadrotor_forward.1} parent=1 // pred_check_branch
      %16 = sbr.rel (0) target = $region5
    $region4: #{quadrotor_forward.1} parent=1 // pred_region
      _
    $region5: #{quadrotor_forward.1} parent=1 // pred_fallthru
      _
    // Predicated region
    $region6: #{quadrotor_forward.1} parent=1 // pred_check
      _
    $region7: #{quadrotor_forward.1} parent=1 // pred_check_branch
      %18 = sbr.rel (0) target = $region9
    $region8: #{quadrotor_forward.1} parent=1 // pred_region
      _
    $region9: #{quadrotor_forward.1} parent=1 // pred_fallthru
      _
    // Predicated region
    $region10: #{quadrotor_forward.1} parent=1 // pred_check
      _
    $region11: #{quadrotor_forward.1} parent=1 // pred_check_branch
      %20 = sbr.rel (0) target = $region13
    $region12: #{quadrotor_forward.1} parent=1 // pred_region
      _
    $region13: #{quadrotor_forward.1} parent=1 // pred_fallthru
      _
    // Predicated region
    $region14: #{quadrotor_forward.1} parent=1 // pred_check
      _
    $region15: #{quadrotor_forward.1} parent=1 // pred_check_branch
      %22 = sbr.rel (0) target = $region17
    $region16: #{quadrotor_forward.1} parent=1 // pred_region
      _
    $region17: #{quadrotor_forward.1} parent=1 // pred_fallthru
      _
    // Predicated region
    $region18: #{quadrotor_forward.1} parent=1 // pred_check
      _
    $region19: #{quadrotor_forward.1} parent=1 // pred_check_branch
      %24 = sbr.rel (0) target = $region21
    $region20: #{quadrotor_forward.1} parent=1 // pred_region
      _
    $region21: #{quadrotor_forward.1} parent=1 // pred_fallthru
      _
    %s27 = sshll.u32 1, 14
    %s28 = sxor.u32 4294967295, %s27
    %s30 = sld [smem:[#allocation0]]
    %s31 = sadd.s32 2, %s30
    %s33 = sshll.u32 7, 26
    %s34 = sxor.u32 4294967295, %s33
    %s35 = sand.u32 0, %s34
    %s36 = sshll.u32 %s31, 26
    %s37 = sor.u32 %s35, %s36
    %s38 = sshll.u32 [#allocation2], 4
    %s39 = int_to_ptr.vmem [resolvable:$true] %s38
    %42 = sst [smem:[#allocation8]] 256
    %s43 = scalar_lea.smem [#allocation8], 1
    %44 = sst [smem:[%s43]] 256
    %s45 = scalar_lea.smem [#allocation8], 2
    %46 = sst [smem:[%s45]] 2
    %s47 = scalar_lea.smem [#allocation8], 3
    %48 = sst [smem:[%s47]] 64
    %s49 = scalar_lea.smem [#allocation8], 4
    %50 = sst [smem:[%s49]] 128
    %s51 = scalar_lea.smem [#allocation8], 5
    %52 = sst [smem:[%s51]] 2
    %s53 = scalar_lea.smem [#allocation8], 6
    %54 = sst [smem:[%s53]] 128
    %s55 = scalar_lea.smem [#allocation8], 7
    %56 = sst [smem:[%s55]] 64
    %s57 = scalar_lea.smem [#allocation8], 8
    %58 = sst [smem:[%s57]] 4
    %60 = dma.general %s4, 26624, %s39, [#allocation4], [#allocation7], [#allocation8], %s37, 0
    %s61 = scalar_lea.sflag [#allocation4], 1
    // Predicated region
    $region22: #{quadrotor_forward.1} parent=1 // pred_check
      _
    $region23: #{quadrotor_forward.1} parent=1 // pred_check_branch
      %63 = sbr.rel target = $region25
    $region24: #{quadrotor_forward.1} parent=1 // pred_region
      %64 = sst [smem:[#allocation11]] [#allocation10]
      %65 = sst [smem:[#allocation12]] [#allocation9]
    $region25: #{quadrotor_forward.1} parent=1 // pred_fallthru
      _
    %67 = shalt.err (0)
    %s69 = sshll.u32 [#allocation3], 4
    %s70 = int_to_ptr.vmem [resolvable:$true] %s69
    %72 = dma.hbm_to_vmem [thread:$0]  %s5, 10240, %s70, %s61
    %v73 = vld [vmem:[%s0] sm:$0xff]
    %v74 = vld [vmem:[%s0 + $0x8] sm:$0xff]
    %v75 = vld [vmem:[%s0 + $0x10] sm:$0xff]
    %v76 = vld [vmem:[%s0 + $0x18] sm:$0xff]
    %v77 = vld [vmem:[%s0 + $0x20] sm:$0xff]
    %v78 = vld [vmem:[%s0 + $0x28] sm:$0xff]
    %v79 = vld [vmem:[%s0 + $0x30] sm:$0xff]
    %v80 = vld [vmem:[%s0 + $0x38] sm:$0xff]
    %v81 = vld [vmem:[%s2] sm:$0xf]
    %v82 = vld [vmem:[%s2 + $0x4] sm:$0xf]
    %v83 = vld [vmem:[%s2 + $0x8] sm:$0xf]
    %v84 = vld [vmem:[%s2 + $0xc] sm:$0xf]
    %v85 = vld [vmem:[%s2 + $0x10] sm:$0xf]
    %v86 = vld [vmem:[%s2 + $0x14] sm:$0xf]
    %v87 = vld [vmem:[%s2 + $0x18] sm:$0xf]
    %v88 = vld [vmem:[%s2 + $0x1c] sm:$0xf]
    %v89 = vld [vmem:[%s2 + $0x20] sm:$0xf]
    %v90 = vld [vmem:[%s2 + $0x24] sm:$0xf]
    %v91 = vld [vmem:[%s2 + $0x28] sm:$0xf]
    %v92 = vld [vmem:[%s2 + $0x2c] sm:$0xf]
    %v93 = vld [vmem:[%s2 + $0x30] sm:$0xf]
    %v94 = vld [vmem:[%s2 + $0x34] sm:$0xf]
    %v95 = vld [vmem:[%s2 + $0x38] sm:$0xf]
    %v96 = vld [vmem:[%s2 + $0x3c] sm:$0xf]
    %v97 = vld [vmem:[%s2 + $0x40] sm:$0xf]
    %v98 = vld [vmem:[%s2 + $0x44] sm:$0xf]
    %v99 = vld [vmem:[%s2 + $0x48] sm:$0xf]
    %v100 = vld [vmem:[%s2 + $0x4c] sm:$0xf]
    %v101 = vld [vmem:[%s2 + $0x50] sm:$0xf]
    %v102 = vld [vmem:[%s2 + $0x54] sm:$0xf]
    %v103 = vld [vmem:[%s2 + $0x58] sm:$0xf]
    %v104 = vld [vmem:[%s2 + $0x5c] sm:$0xf]
    %v105 = vld [vmem:[%s2 + $0x60] sm:$0xf]
    %v106 = vld [vmem:[%s2 + $0x64] sm:$0xf]
    %v107 = vld [vmem:[%s2 + $0x68] sm:$0xf]
    %v108 = vld [vmem:[%s2 + $0x6c] sm:$0xf]
    %v109 = vld [vmem:[%s2 + $0x70] sm:$0xf]
    %v110 = vld [vmem:[%s2 + $0x74] sm:$0xf]
    %v111 = vld [vmem:[%s2 + $0x78] sm:$0xf]
    %v112 = vld [vmem:[%s2 + $0x7c] sm:$0xf]
    %v113 = vld [vmem:[%s2 + $0x80] sm:$0xf]
    %v114 = vld [vmem:[%s2 + $0x84] sm:$0xf]
    %v115 = vld [vmem:[%s2 + $0x88] sm:$0xf]
    %v116 = vld [vmem:[%s2 + $0x8c] sm:$0xf]
    %v117 = vld [vmem:[%s2 + $0x90] sm:$0xf]
    %v118 = vld [vmem:[%s2 + $0x94] sm:$0xf]
    %v119 = vld [vmem:[%s2 + $0x98] sm:$0xf]
    %v120 = vld [vmem:[%s2 + $0x9c] sm:$0xf]
    %v121 = vld [vmem:[%s2 + $0xa0] sm:$0xf]
    %v122 = vld [vmem:[%s2 + $0xa4] sm:$0xf]
    %v123 = vld [vmem:[%s2 + $0xa8] sm:$0xf]
    %v124 = vld [vmem:[%s2 + $0xac] sm:$0xf]
    %v125 = vld [vmem:[%s2 + $0xb0] sm:$0xf]
    %v126 = vld [vmem:[%s2 + $0xb4] sm:$0xf]
    %v127 = vld [vmem:[%s2 + $0xb8] sm:$0xf]
    %v128 = vld [vmem:[%s2 + $0xbc] sm:$0xf]
    %v129 = vld [vmem:[%s2 + $0xc0] sm:$0xf]
    %v130 = vld [vmem:[%s2 + $0xc4] sm:$0xf]
    %v131 = vld [vmem:[%s2 + $0xc8] sm:$0xf]
    %v132 = vld [vmem:[%s2 + $0xcc] sm:$0xf]
    %v133 = vld [vmem:[%s2 + $0xd0] sm:$0xf]
    %v134 = vld [vmem:[%s2 + $0xd4] sm:$0xf]
    %v135 = vld [vmem:[%s2 + $0xd8] sm:$0xf]
    %v136 = vld [vmem:[%s2 + $0xdc] sm:$0xf]
    %v137 = vld [vmem:[%s2 + $0xe0] sm:$0xf]
    %v138 = vld [vmem:[%s2 + $0xe4] sm:$0xf]
    %v139 = vld [vmem:[%s2 + $0xe8] sm:$0xf]
    %v140 = vld [vmem:[%s2 + $0xec] sm:$0xf]
    %v141 = vld [vmem:[%s2 + $0xf0] sm:$0xf]
    %v142 = vld [vmem:[%s2 + $0xf4] sm:$0xf]
    %v143 = vld [vmem:[%s2 + $0xf8] sm:$0xf]
    %v144 = vld [vmem:[%s2 + $0xfc] sm:$0xf]
    %v145 = vld [vmem:[%s2 + $0x100] sm:$0xf]
    %v146 = vld [vmem:[%s2 + $0x104] sm:$0xf]
    %v147 = vld [vmem:[%s2 + $0x108] sm:$0xf]
    %v148 = vld [vmem:[%s2 + $0x10c] sm:$0xf]
    %v149 = vld [vmem:[%s2 + $0x110] sm:$0xf]
    %v150 = vld [vmem:[%s2 + $0x114] sm:$0xf]
    %v151 = vld [vmem:[%s2 + $0x118] sm:$0xf]
    %v152 = vld [vmem:[%s2 + $0x11c] sm:$0xf]
    %v153 = vld [vmem:[%s2 + $0x120] sm:$0xf]
    %v154 = vld [vmem:[%s2 + $0x124] sm:$0xf]
    %v155 = vld [vmem:[%s2 + $0x128] sm:$0xf]
    %v156 = vld [vmem:[%s2 + $0x12c] sm:$0xf]
    %v157 = vld [vmem:[%s2 + $0x130] sm:$0xf]
    %v158 = vld [vmem:[%s2 + $0x134] sm:$0xf]
    %v159 = vld [vmem:[%s2 + $0x138] sm:$0xf]
    %v160 = vld [vmem:[%s2 + $0x13c] sm:$0xf]
    %v161 = vld [vmem:[%s2 + $0x140] sm:$0xf]
    %v162 = vld [vmem:[%s2 + $0x144] sm:$0xf]
    %v163 = vld [vmem:[%s2 + $0x148] sm:$0xf]
    %v164 = vld [vmem:[%s2 + $0x14c] sm:$0xf]
    %v165 = vld [vmem:[%s2 + $0x150] sm:$0xf]
    %v166 = vld [vmem:[%s2 + $0x154] sm:$0xf]
    %v167 = vld [vmem:[%s2 + $0x158] sm:$0xf]
    %v168 = vld [vmem:[%s2 + $0x15c] sm:$0xf]
    %v169 = vld [vmem:[%s2 + $0x160] sm:$0xf]
    %v170 = vld [vmem:[%s2 + $0x164] sm:$0xf]
    %v171 = vld [vmem:[%s2 + $0x168] sm:$0xf]
    %v172 = vld [vmem:[%s2 + $0x16c] sm:$0xf]
    %v173 = vld [vmem:[%s2 + $0x170] sm:$0xf]
    %v174 = vld [vmem:[%s2 + $0x174] sm:$0xf]
    %v175 = vld [vmem:[%s2 + $0x178] sm:$0xf]
    %v176 = vld [vmem:[%s2 + $0x17c] sm:$0xf]
    %v177 = vld [vmem:[%s2 + $0x180] sm:$0xf]
    %v178 = vld [vmem:[%s2 + $0x184] sm:$0xf]
    %v179 = vld [vmem:[%s2 + $0x188] sm:$0xf]
    %v180 = vld [vmem:[%s2 + $0x18c] sm:$0xf]
    %v181 = vld [vmem:[%s2 + $0x190] sm:$0xf]
    %v182 = vld [vmem:[%s2 + $0x194] sm:$0xf]
    %v183 = vld [vmem:[%s2 + $0x198] sm:$0xf]
    %v184 = vld [vmem:[%s2 + $0x19c] sm:$0xf]
    %v185 = vld [vmem:[%s2 + $0x1a0] sm:$0xf]
    %v186 = vld [vmem:[%s2 + $0x1a4] sm:$0xf]
    %v187 = vld [vmem:[%s2 + $0x1a8] sm:$0xf]
    %v188 = vld [vmem:[%s2 + $0x1ac] sm:$0xf]
    %v189 = vld [vmem:[%s2 + $0x1b0] sm:$0xf]
    %v190 = vld [vmem:[%s2 + $0x1b4] sm:$0xf]
    %v191 = vld [vmem:[%s2 + $0x1b8] sm:$0xf]
    %v192 = vld [vmem:[%s2 + $0x1bc] sm:$0xf]
    %v193 = vld [vmem:[%s2 + $0x1c0] sm:$0xf]
    %v194 = vld [vmem:[%s2 + $0x1c4] sm:$0xf]
    %v195 = vld [vmem:[%s2 + $0x1c8] sm:$0xf]
    %v196 = vld [vmem:[%s2 + $0x1cc] sm:$0xf]
    %v197 = vld [vmem:[%s2 + $0x1d0] sm:$0xf]
    %v198 = vld [vmem:[%s2 + $0x1d4] sm:$0xf]
    %v199 = vld [vmem:[%s2 + $0x1d8] sm:$0xf]
    %v200 = vld [vmem:[%s2 + $0x1dc] sm:$0xf]
    %v201 = vld [vmem:[%s2 + $0x1e0] sm:$0xf]
    %v202 = vld [vmem:[%s2 + $0x1e4] sm:$0xf]
    %v203 = vld [vmem:[%s2 + $0x1e8] sm:$0xf]
    %v204 = vld [vmem:[%s2 + $0x1ec] sm:$0xf]
    %v205 = vld [vmem:[%s2 + $0x1f0] sm:$0xf]
    %v206 = vld [vmem:[%s2 + $0x1f4] sm:$0xf]
    %v207 = vld [vmem:[%s2 + $0x1f8] sm:$0xf]
    %v208 = vld [vmem:[%s2 + $0x1fc] sm:$0xf]
    %v209 = vpack.c.bf16 %v73, %v73
    %v210 = vpack.c.bf16 %v74, %v74
    %v211 = vpack.c.bf16 %v75, %v75
    %v212 = vpack.c.bf16 %v76, %v76
    %v213 = vpack.c.bf16 %v77, %v77
    %v214 = vpack.c.bf16 %v78, %v78
    %v215 = vpack.c.bf16 %v79, %v79
    %v216 = vpack.c.bf16 %v80, %v80
    %v217 = vld [vmem:[%s6] ss:$0 sm:$0xff]
    %v346 = vunpack.c.l.b16 %v81
    %v347 = vunpack.c.l.b16 %v82
    %v348 = vunpack.c.l.b16 %v83
    %v349 = vunpack.c.l.b16 %v84
    %v350 = vunpack.c.l.b16 %v85
    %v351 = vunpack.c.l.b16 %v86
    %v352 = vunpack.c.l.b16 %v87
    %v353 = vunpack.c.l.b16 %v88
    %v354 = vunpack.c.l.b16 %v89
    %v355 = vunpack.c.l.b16 %v90
    %v356 = vunpack.c.l.b16 %v91
    %v357 = vunpack.c.l.b16 %v92
    %v358 = vunpack.c.l.b16 %v93
    %v359 = vunpack.c.l.b16 %v94
    %v360 = vunpack.c.l.b16 %v95
    %v361 = vunpack.c.l.b16 %v96
    %v362 = vunpack.c.l.b16 %v97
    %v363 = vunpack.c.l.b16 %v98
    %v364 = vunpack.c.l.b16 %v99
    %v365 = vunpack.c.l.b16 %v100
    %v366 = vunpack.c.l.b16 %v101
    %v367 = vunpack.c.l.b16 %v102
    %v368 = vunpack.c.l.b16 %v103
    %v369 = vunpack.c.l.b16 %v104
    %v370 = vunpack.c.l.b16 %v105
    %v371 = vunpack.c.l.b16 %v106
    %v372 = vunpack.c.l.b16 %v107
    %v373 = vunpack.c.l.b16 %v108
    %v374 = vunpack.c.l.b16 %v109
    %v375 = vunpack.c.l.b16 %v110
    %v376 = vunpack.c.l.b16 %v111
    %v377 = vunpack.c.l.b16 %v112
    %v378 = vunpack.c.l.b16 %v113
    %v379 = vunpack.c.l.b16 %v114
    %v380 = vunpack.c.l.b16 %v115
    %v381 = vunpack.c.l.b16 %v116
    %v382 = vunpack.c.l.b16 %v117
    %v383 = vunpack.c.l.b16 %v118
    %v384 = vunpack.c.l.b16 %v119
    %v385 = vunpack.c.l.b16 %v120
    %v386 = vunpack.c.l.b16 %v121
    %v387 = vunpack.c.l.b16 %v122
    %v388 = vunpack.c.l.b16 %v123
    %v389 = vunpack.c.l.b16 %v124
    %v390 = vunpack.c.l.b16 %v125
    %v391 = vunpack.c.l.b16 %v126
    %v392 = vunpack.c.l.b16 %v127
    %v393 = vunpack.c.l.b16 %v128
    %v394 = vunpack.c.l.b16 %v129
    %v395 = vunpack.c.l.b16 %v130
    %v396 = vunpack.c.l.b16 %v131
    %v397 = vunpack.c.l.b16 %v132
    %v398 = vunpack.c.l.b16 %v133
    %v399 = vunpack.c.l.b16 %v134
    %v400 = vunpack.c.l.b16 %v135
    %v401 = vunpack.c.l.b16 %v136
    %v402 = vunpack.c.l.b16 %v137
    %v403 = vunpack.c.l.b16 %v138
    %v404 = vunpack.c.l.b16 %v139
    %v405 = vunpack.c.l.b16 %v140
    %v406 = vunpack.c.l.b16 %v141
    %v407 = vunpack.c.l.b16 %v142
    %v408 = vunpack.c.l.b16 %v143
    %v409 = vunpack.c.l.b16 %v144
    %v410 = vunpack.c.l.b16 %v145
    %v411 = vunpack.c.l.b16 %v146
    %v412 = vunpack.c.l.b16 %v147
    %v413 = vunpack.c.l.b16 %v148
    %v414 = vunpack.c.l.b16 %v149
    %v415 = vunpack.c.l.b16 %v150
    %v416 = vunpack.c.l.b16 %v151
    %v417 = vunpack.c.l.b16 %v152
    %v418 = vunpack.c.l.b16 %v153
    %v419 = vunpack.c.l.b16 %v154
    %v420 = vunpack.c.l.b16 %v155
    %v421 = vunpack.c.l.b16 %v156
    %v422 = vunpack.c.l.b16 %v157
    %v423 = vunpack.c.l.b16 %v158
    %v424 = vunpack.c.l.b16 %v159
    %v425 = vunpack.c.l.b16 %v160
    %v426 = vunpack.c.l.b16 %v161
    %v427 = vunpack.c.l.b16 %v162
    %v428 = vunpack.c.l.b16 %v163
    %v429 = vunpack.c.l.b16 %v164
    %v430 = vunpack.c.l.b16 %v165
    %v431 = vunpack.c.l.b16 %v166
    %v432 = vunpack.c.l.b16 %v167
    %v433 = vunpack.c.l.b16 %v168
    %v434 = vunpack.c.l.b16 %v169
    %v435 = vunpack.c.l.b16 %v170
    %v436 = vunpack.c.l.b16 %v171
    %v437 = vunpack.c.l.b16 %v172
    %v438 = vunpack.c.l.b16 %v173
    %v439 = vunpack.c.l.b16 %v174
    %v440 = vunpack.c.l.b16 %v175
    %v441 = vunpack.c.l.b16 %v176
    %v442 = vunpack.c.l.b16 %v177
    %v443 = vunpack.c.l.b16 %v178
    %v444 = vunpack.c.l.b16 %v179
    %v445 = vunpack.c.l.b16 %v180
    %v446 = vunpack.c.l.b16 %v181
    %v447 = vunpack.c.l.b16 %v182
    %v448 = vunpack.c.l.b16 %v183
    %v449 = vunpack.c.l.b16 %v184
    %v450 = vunpack.c.l.b16 %v185
    %v451 = vunpack.c.l.b16 %v186
    %v452 = vunpack.c.l.b16 %v187
    %v453 = vunpack.c.l.b16 %v188
    %v454 = vunpack.c.l.b16 %v189
    %v455 = vunpack.c.l.b16 %v190
    %v456 = vunpack.c.l.b16 %v191
    %v457 = vunpack.c.l.b16 %v192
    %v458 = vunpack.c.l.b16 %v193
    %v459 = vunpack.c.l.b16 %v194
    %v460 = vunpack.c.l.b16 %v195
    %v461 = vunpack.c.l.b16 %v196
    %v462 = vunpack.c.l.b16 %v197
    %v463 = vunpack.c.l.b16 %v198
    %v464 = vunpack.c.l.b16 %v199
    %v465 = vunpack.c.l.b16 %v200
    %v466 = vunpack.c.l.b16 %v201
    %v467 = vunpack.c.l.b16 %v202
    %v468 = vunpack.c.l.b16 %v203
    %v469 = vunpack.c.l.b16 %v204
    %v470 = vunpack.c.l.b16 %v205
    %v471 = vunpack.c.l.b16 %v206
    %v472 = vunpack.c.l.b16 %v207
    %v473 = vunpack.c.l.b16 %v208
    %v474 = vpack.c.b16 %v347, %v346
    %v475 = vpack.c.b16 %v349, %v348
    %v476 = vpack.c.b16 %v351, %v350
    %v477 = vpack.c.b16 %v353, %v352
    %v478 = vpack.c.b16 %v355, %v354
    %v479 = vpack.c.b16 %v357, %v356
    %v480 = vpack.c.b16 %v359, %v358
    %v481 = vpack.c.b16 %v361, %v360
    %v482 = vpack.c.b16 %v363, %v362
    %v483 = vpack.c.b16 %v365, %v364
    %v484 = vpack.c.b16 %v367, %v366
    %v485 = vpack.c.b16 %v369, %v368
    %v486 = vpack.c.b16 %v371, %v370
    %v487 = vpack.c.b16 %v373, %v372
    %v488 = vpack.c.b16 %v375, %v374
    %v489 = vpack.c.b16 %v377, %v376
    %v490 = vpack.c.b16 %v379, %v378
    %v491 = vpack.c.b16 %v381, %v380
    %v492 = vpack.c.b16 %v383, %v382
    %v493 = vpack.c.b16 %v385, %v384
    %v494 = vpack.c.b16 %v387, %v386
    %v495 = vpack.c.b16 %v389, %v388
    %v496 = vpack.c.b16 %v391, %v390
    %v497 = vpack.c.b16 %v393, %v392
    %v498 = vpack.c.b16 %v395, %v394
    %v499 = vpack.c.b16 %v397, %v396
    %v500 = vpack.c.b16 %v399, %v398
    %v501 = vpack.c.b16 %v401, %v400
    %v502 = vpack.c.b16 %v403, %v402
    %v503 = vpack.c.b16 %v405, %v404
    %v504 = vpack.c.b16 %v407, %v406
    %v505 = vpack.c.b16 %v409, %v408
    %v506 = vpack.c.b16 %v411, %v410
    %v507 = vpack.c.b16 %v413, %v412
    %v508 = vpack.c.b16 %v415, %v414
    %v509 = vpack.c.b16 %v417, %v416
    %v510 = vpack.c.b16 %v419, %v418
    %v511 = vpack.c.b16 %v421, %v420
    %v512 = vpack.c.b16 %v423, %v422
    %v513 = vpack.c.b16 %v425, %v424
    %v514 = vpack.c.b16 %v427, %v426
    %v515 = vpack.c.b16 %v429, %v428
    %v516 = vpack.c.b16 %v431, %v430
    %v517 = vpack.c.b16 %v433, %v432
    %v518 = vpack.c.b16 %v435, %v434
    %v519 = vpack.c.b16 %v437, %v436
    %v520 = vpack.c.b16 %v439, %v438
    %v521 = vpack.c.b16 %v441, %v440
    %v522 = vpack.c.b16 %v443, %v442
    %v523 = vpack.c.b16 %v445, %v444
    %v524 = vpack.c.b16 %v447, %v446
    %v525 = vpack.c.b16 %v449, %v448
    %v526 = vpack.c.b16 %v451, %v450
    %v527 = vpack.c.b16 %v453, %v452
    %v528 = vpack.c.b16 %v455, %v454
    %v529 = vpack.c.b16 %v457, %v456
    %v530 = vpack.c.b16 %v459, %v458
    %v531 = vpack.c.b16 %v461, %v460
    %v532 = vpack.c.b16 %v463, %v462
    %v533 = vpack.c.b16 %v465, %v464
    %v534 = vpack.c.b16 %v467, %v466
    %v535 = vpack.c.b16 %v469, %v468
    %v536 = vpack.c.b16 %v471, %v470
    %v537 = vpack.c.b16 %v473, %v472
    %602 = vmatprep.subr.bf16.mxu0 0
    %603 = vmatpush1.bf16.msra.mxu0 %v474
    %604 = vmatprep.subr.bf16.mxu0 0
    %605 = vmatpush1.bf16.msra.mxu0 %v475
    %606 = vmatprep.subr.bf16.mxu0 0
    %607 = vmatpush1.bf16.msra.mxu0 %v476
    %608 = vmatprep.subr.bf16.mxu0 0
    %609 = vmatpush1.bf16.msra.mxu0 %v477
    %610 = vmatprep.subr.bf16.mxu0 0
    %611 = vmatpush1.bf16.msra.mxu0 %v478
    %612 = vmatprep.subr.bf16.mxu0 0
    %613 = vmatpush1.bf16.msra.mxu0 %v479
    %614 = vmatprep.subr.bf16.mxu0 0
    %615 = vmatpush1.bf16.msra.mxu0 %v480
    %616 = vmatprep.subr.bf16.mxu0 0
    %617 = vmatpush1.bf16.msra.mxu0 %v481
    %618 = vmatprep.subr.bf16.mxu0 0
    %619 = vmatpush1.bf16.msra.mxu0 %v482
    %620 = vmatprep.subr.bf16.mxu0 0
    %621 = vmatpush1.bf16.msra.mxu0 %v483
    %622 = vmatprep.subr.bf16.mxu0 0
    %623 = vmatpush1.bf16.msra.mxu0 %v484
    %624 = vmatprep.subr.bf16.mxu0 0
    %625 = vmatpush1.bf16.msra.mxu0 %v485
    %626 = vmatprep.subr.bf16.mxu0 0
    %627 = vmatpush1.bf16.msra.mxu0 %v486
    %628 = vmatprep.subr.bf16.mxu0 0
    %629 = vmatpush1.bf16.msra.mxu0 %v487
    %630 = vmatprep.subr.bf16.mxu0 0
    %631 = vmatpush1.bf16.msra.mxu0 %v488
    %632 = vmatprep.subr.bf16.mxu0 0
    %633 = vmatpush1.bf16.msra.mxu0 %v489
    %634 = vmatprep.mubr.bf16.mxu0 %v210
    %635 = vmatmul.mubr.bf16.gmra.mrb[0].mxu0 %v209
    %v636 = vpop.f32.mrb[0].mxu0
    %v637 = vadd.f32 %v217, %v636
    %v638 = vpop.f32.mrb[0].mxu0
    %v639 = vpop.f32.mrb[0].mxu0
    %v640 = vpop.f32.mrb[0].mxu0
    %641 = vdwg.mxu0
    %642 = vmatprep.subr.bf16.mxu0 0
    %643 = vmatpush1.bf16.msra.mxu0 %v490
    %644 = vmatprep.subr.bf16.mxu0 0
    %645 = vmatpush1.bf16.msra.mxu0 %v491
    %646 = vmatprep.subr.bf16.mxu0 0
    %647 = vmatpush1.bf16.msra.mxu0 %v492
    %648 = vmatprep.subr.bf16.mxu0 0
    %649 = vmatpush1.bf16.msra.mxu0 %v493
    %650 = vmatprep.subr.bf16.mxu0 0
    %651 = vmatpush1.bf16.msra.mxu0 %v494
    %652 = vmatprep.subr.bf16.mxu0 0
    %653 = vmatpush1.bf16.msra.mxu0 %v495
    %654 = vmatprep.subr.bf16.mxu0 0
    %655 = vmatpush1.bf16.msra.mxu0 %v496
    %656 = vmatprep.subr.bf16.mxu0 0
    %657 = vmatpush1.bf16.msra.mxu0 %v497
    %658 = vmatprep.subr.bf16.mxu0 0
    %659 = vmatpush1.bf16.msra.mxu0 %v498
    %660 = vmatprep.subr.bf16.mxu0 0
    %661 = vmatpush1.bf16.msra.mxu0 %v499
    %662 = vmatprep.subr.bf16.mxu0 0
    %663 = vmatpush1.bf16.msra.mxu0 %v500
    %664 = vmatprep.subr.bf16.mxu0 0
    %665 = vmatpush1.bf16.msra.mxu0 %v501
    %666 = vmatprep.subr.bf16.mxu0 0
    %667 = vmatpush1.bf16.msra.mxu0 %v502
    %668 = vmatprep.subr.bf16.mxu0 0
    %669 = vmatpush1.bf16.msra.mxu0 %v503
    %670 = vmatprep.subr.bf16.mxu0 0
    %671 = vmatpush1.bf16.msra.mxu0 %v504
    %672 = vmatprep.subr.bf16.mxu0 0
    %673 = vmatpush1.bf16.msra.mxu0 %v505
    %674 = vmatprep.mubr.bf16.mxu0 %v212
    %675 = vmatmul.mubr.bf16.gmra.mrb[0].mxu0 %v211
    %v676 = vpop.f32.mrb[0].mxu0
    %v677 = vadd.f32 %v637, %v676
    %v678 = vpop.f32.mrb[0].mxu0
    %v679 = vpop.f32.mrb[0].mxu0
    %v680 = vpop.f32.mrb[0].mxu0
    %681 = vdwg.mxu0
    %682 = vmatprep.subr.bf16.mxu0 0
    %683 = vmatpush1.bf16.msra.mxu0 %v506
    %684 = vmatprep.subr.bf16.mxu0 0
    %685 = vmatpush1.bf16.msra.mxu0 %v507
    %686 = vmatprep.subr.bf16.mxu0 0
    %687 = vmatpush1.bf16.msra.mxu0 %v508
    %688 = vmatprep.subr.bf16.mxu0 0
    %689 = vmatpush1.bf16.msra.mxu0 %v509
    %690 = vmatprep.subr.bf16.mxu0 0
    %691 = vmatpush1.bf16.msra.mxu0 %v510
    %692 = vmatprep.subr.bf16.mxu0 0
    %693 = vmatpush1.bf16.msra.mxu0 %v511
    %694 = vmatprep.subr.bf16.mxu0 0
    %695 = vmatpush1.bf16.msra.mxu0 %v512
    %696 = vmatprep.subr.bf16.mxu0 0
    %697 = vmatpush1.bf16.msra.mxu0 %v513
    %698 = vmatprep.subr.bf16.mxu0 0
    %699 = vmatpush1.bf16.msra.mxu0 %v514
    %700 = vmatprep.subr.bf16.mxu0 0
    %701 = vmatpush1.bf16.msra.mxu0 %v515
    %702 = vmatprep.subr.bf16.mxu0 0
    %703 = vmatpush1.bf16.msra.mxu0 %v516
    %704 = vmatprep.subr.bf16.mxu0 0
    %705 = vmatpush1.bf16.msra.mxu0 %v517
    %706 = vmatprep.subr.bf16.mxu0 0
    %707 = vmatpush1.bf16.msra.mxu0 %v518
    %708 = vmatprep.subr.bf16.mxu0 0
    %709 = vmatpush1.bf16.msra.mxu0 %v519
    %710 = vmatprep.subr.bf16.mxu0 0
    %711 = vmatpush1.bf16.msra.mxu0 %v520
    %712 = vmatprep.subr.bf16.mxu0 0
    %713 = vmatpush1.bf16.msra.mxu0 %v521
    %714 = vmatprep.mubr.bf16.mxu0 %v214
    %715 = vmatmul.mubr.bf16.gmra.mrb[0].mxu0 %v213
    %v716 = vpop.f32.mrb[0].mxu0
    %v717 = vadd.f32 %v677, %v716
    %v718 = vpop.f32.mrb[0].mxu0
    %v719 = vpop.f32.mrb[0].mxu0
    %v720 = vpop.f32.mrb[0].mxu0
    %721 = vdwg.mxu0
    %722 = vmatprep.subr.bf16.mxu0 0
    %723 = vmatpush1.bf16.msra.mxu0 %v522
    %724 = vmatprep.subr.bf16.mxu0 0
    %725 = vmatpush1.bf16.msra.mxu0 %v523
    %726 = vmatprep.subr.bf16.mxu0 0
    %727 = vmatpush1.bf16.msra.mxu0 %v524
    %728 = vmatprep.subr.bf16.mxu0 0
    %729 = vmatpush1.bf16.msra.mxu0 %v525
    %730 = vmatprep.subr.bf16.mxu0 0
    %731 = vmatpush1.bf16.msra.mxu0 %v526
    %732 = vmatprep.subr.bf16.mxu0 0
    %733 = vmatpush1.bf16.msra.mxu0 %v527
    %734 = vmatprep.subr.bf16.mxu0 0
    %735 = vmatpush1.bf16.msra.mxu0 %v528
    %736 = vmatprep.subr.bf16.mxu0 0
    %737 = vmatpush1.bf16.msra.mxu0 %v529
    %738 = vmatprep.subr.bf16.mxu0 0
    %739 = vmatpush1.bf16.msra.mxu0 %v530
    %740 = vmatprep.subr.bf16.mxu0 0
    %741 = vmatpush1.bf16.msra.mxu0 %v531
    %742 = vmatprep.subr.bf16.mxu0 0
    %743 = vmatpush1.bf16.msra.mxu0 %v532
    %744 = vmatprep.subr.bf16.mxu0 0
    %745 = vmatpush1.bf16.msra.mxu0 %v533
    %746 = vmatprep.subr.bf16.mxu0 0
    %747 = vmatpush1.bf16.msra.mxu0 %v534
    %748 = vmatprep.subr.bf16.mxu0 0
    %749 = vmatpush1.bf16.msra.mxu0 %v535
    %750 = vmatprep.subr.bf16.mxu0 0
    %751 = vmatpush1.bf16.msra.mxu0 %v536
    %752 = vmatprep.subr.bf16.mxu0 0
    %753 = vmatpush1.bf16.msra.mxu0 %v537
    %754 = vmatprep.mubr.bf16.mxu0 %v216
    %755 = vmatmul.mubr.bf16.gmra.mrb[0].mxu0 %v215
    %v756 = vpop.f32.mrb[0].mxu0
    %v757 = vadd.f32 %v717, %v756
    %v758 = vpop.f32.mrb[0].mxu0
    %v759 = vpop.f32.mrb[0].mxu0
    %v760 = vpop.f32.mrb[0].mxu0
    %761 = vdwg.mxu0
    %v762 = vld [vmem:[%s1] sm:$0xff]
    %764 = vrot.lane.b32.xlu0 %v762, 32
    %v765 = vpop.permute.xlu0 %764
    %vm767 = vcmask 261120
    %v768 = vsel %vm767, %v757, %v765
    %vm769 = vcmask 310272
    %v770 = vsel %vm769, %v768, 0.0
    %v772 = vrot.slane %v770, 1
    %vm774 = vcmask 1046528
    %v775 = vsel %vm774, 0.0, %v772
    %v777 = vrot.slane %v775, 1
    %v778 = vrot.slane %v772, 1
    %v779 = vsel %vm774, %v777, %v778
    %780 = vrot.lane.b32.xlu0 %v779, 48
    %v781 = vpop.permute.xlu0 %780
    %vm783 = vcmask 1045504
    %v784 = vrot.slane %v775, 2
    %v785 = vrot.slane %v772, 2
    %v786 = vsel %vm783, %v784, %v785
    %787 = vrot.lane.b32.xlu0 %v786, 96
    %v788 = vpop.permute.xlu0 %787
    %vm790 = vcmask 1044480
    %v791 = vrot.slane %v775, 3
    %v792 = vrot.slane %v772, 3
    %v793 = vsel %vm790, %v791, %v792
    %794 = vrot.lane.b32.xlu0 %v793, 16
    %v795 = vpop.permute.xlu0 %794
    %vm797 = vcmask 1043456
    %v798 = vrot.slane %v775, 4
    %v799 = vrot.slane %v772, 4
    %v800 = vsel %vm797, %v798, %v799
    %801 = vrot.lane.b32.xlu0 %v800, 64
    %v802 = vpop.permute.xlu0 %801
    %vm804 = vcmask 1042432
    %v805 = vrot.slane %v775, 5
    %v806 = vrot.slane %v772, 5
    %v807 = vsel %vm804, %v805, %v806
    %808 = vrot.lane.b32.xlu0 %v807, 112
    %v809 = vpop.permute.xlu0 %808
    %vm811 = vcmask 1041408
    %v812 = vrot.slane %v775, 6
    %v813 = vrot.slane %v772, 6
    %v814 = vsel %vm811, %v812, %v813
    %815 = vrot.lane.b32.xlu0 %v814, 32
    %v816 = vpop.permute.xlu0 %815
    %vm818 = vcmask 1040384
    %v819 = vrot.slane %v775, 7
    %v820 = vrot.slane %v772, 7
    %v821 = vsel %vm818, %v819, %v820
    %822 = vrot.lane.b32.xlu0 %v821, 80
    %v823 = vpop.permute.xlu0 %822
    %vm825 = vcmask 392192
    %v826 = vsel %vm825, %v775, %v781
    %vm827 = vcmask 785408
    %v828 = vsel %vm827, %v826, %v788
    %vm829 = vcmask 130048
    %v830 = vsel %vm829, %v788, %v795
    %vm831 = vcmask 523264
    %v832 = vsel %vm831, %v830, %v802
    %vm833 = vcmask 916480
    %v834 = vsel %vm833, %v832, %v809
    %v835 = vsel %vm767, %v809, %v816
    %vm836 = vcmask 654336
    %v837 = vsel %vm836, %v835, %v823
    %v838 = vld [vmem:[%s3] sm:$0xf]
    %v839 = vld [vmem:[%s3 + $0x4] sm:$0xf]
    %v840 = vld [vmem:[%s3 + $0x8] sm:$0xf]
    %v841 = vld [vmem:[%s3 + $0xc] sm:$0xf]
    %v842 = vld [vmem:[%s3 + $0x10] sm:$0xf]
    %v843 = vld [vmem:[%s3 + $0x14] sm:$0xf]
    %v844 = vld [vmem:[%s3 + $0x18] sm:$0xf]
    %v845 = vld [vmem:[%s3 + $0x1c] sm:$0xf]
    %v846 = vld [vmem:[%s3 + $0x20] sm:$0xf]
    %v847 = vld [vmem:[%s3 + $0x24] sm:$0xf]
    %v848 = vld [vmem:[%s3 + $0x28] sm:$0xf]
    %v849 = vld [vmem:[%s3 + $0x2c] sm:$0xf]
    %v850 = vld [vmem:[%s3 + $0x30] sm:$0xf]
    %v851 = vld [vmem:[%s3 + $0x34] sm:$0xf]
    %v852 = vld [vmem:[%s3 + $0x38] sm:$0xf]
    %v853 = vld [vmem:[%s3 + $0x3c] sm:$0xf]
    %v854 = vld [vmem:[%s3 + $0x40] sm:$0xf]
    %v855 = vld [vmem:[%s3 + $0x44] sm:$0xf]
    %v856 = vld [vmem:[%s3 + $0x48] sm:$0xf]
    %v857 = vld [vmem:[%s3 + $0x4c] sm:$0xf]
    %v858 = vld [vmem:[%s3 + $0x50] sm:$0xf]
    %v859 = vld [vmem:[%s3 + $0x54] sm:$0xf]
    %v860 = vld [vmem:[%s3 + $0x58] sm:$0xf]
    %v861 = vld [vmem:[%s3 + $0x5c] sm:$0xf]
    %v862 = vld [vmem:[%s3 + $0x60] sm:$0xf]
    %v863 = vld [vmem:[%s3 + $0x64] sm:$0xf]
    %v864 = vld [vmem:[%s3 + $0x68] sm:$0xf]
    %v865 = vld [vmem:[%s3 + $0x6c] sm:$0xf]
    %v866 = vld [vmem:[%s3 + $0x70] sm:$0xf]
    %v867 = vld [vmem:[%s3 + $0x74] sm:$0xf]
    %v868 = vld [vmem:[%s3 + $0x78] sm:$0xf]
    %v869 = vld [vmem:[%s3 + $0x7c] sm:$0xf]
    %v870 = vld [vmem:[%s3 + $0x80] sm:$0xf]
    %v871 = vld [vmem:[%s3 + $0x84] sm:$0xf]
    %v872 = vld [vmem:[%s3 + $0x88] sm:$0xf]
    %v873 = vld [vmem:[%s3 + $0x8c] sm:$0xf]
    %v874 = vld [vmem:[%s3 + $0x90] sm:$0xf]
    %v875 = vld [vmem:[%s3 + $0x94] sm:$0xf]
    %v876 = vld [vmem:[%s3 + $0x98] sm:$0xf]
    %v877 = vld [vmem:[%s3 + $0x9c] sm:$0xf]
    %v878 = vld [vmem:[%s3 + $0xa0] sm:$0xf]
    %v879 = vld [vmem:[%s3 + $0xa4] sm:$0xf]
    %v880 = vld [vmem:[%s3 + $0xa8] sm:$0xf]
    %v881 = vld [vmem:[%s3 + $0xac] sm:$0xf]
    %v882 = vld [vmem:[%s3 + $0xb0] sm:$0xf]
    %v883 = vld [vmem:[%s3 + $0xb4] sm:$0xf]
    %v884 = vld [vmem:[%s3 + $0xb8] sm:$0xf]
    %v885 = vld [vmem:[%s3 + $0xbc] sm:$0xf]
    %v886 = vpack.c.bf16 %v828, %v828
    %v887 = vpack.c.bf16 %v834, %v834
    %v888 = vpack.c.bf16 %v837, %v837
    %v889 = vld [vmem:[%s6 + $0x1] ss:$0 sm:$0xff]
    %v938 = vunpack.c.l.b16 %v838
    %v939 = vunpack.c.l.b16 %v839
    %v940 = vunpack.c.l.b16 %v840
    %v941 = vunpack.c.l.b16 %v841
    %v942 = vunpack.c.l.b16 %v842
    %v943 = vunpack.c.l.b16 %v843
    %v944 = vunpack.c.l.b16 %v844
    %v945 = vunpack.c.l.b16 %v845
    %v946 = vunpack.c.l.b16 %v846
    %v947 = vunpack.c.l.b16 %v847
    %v948 = vunpack.c.l.b16 %v848
    %v949 = vunpack.c.l.b16 %v849
    %v950 = vunpack.c.l.b16 %v850
    %v951 = vunpack.c.l.b16 %v851
    %v952 = vunpack.c.l.b16 %v852
    %v953 = vunpack.c.l.b16 %v853
    %v954 = vunpack.c.l.b16 %v854
    %v955 = vunpack.c.l.b16 %v855
    %v956 = vunpack.c.l.b16 %v856
    %v957 = vunpack.c.l.b16 %v857
    %v958 = vunpack.c.l.b16 %v858
    %v959 = vunpack.c.l.b16 %v859
    %v960 = vunpack.c.l.b16 %v860
    %v961 = vunpack.c.l.b16 %v861
    %v962 = vunpack.c.l.b16 %v862
    %v963 = vunpack.c.l.b16 %v863
    %v964 = vunpack.c.l.b16 %v864
    %v965 = vunpack.c.l.b16 %v865
    %v966 = vunpack.c.l.b16 %v866
    %v967 = vunpack.c.l.b16 %v867
    %v968 = vunpack.c.l.b16 %v868
    %v969 = vunpack.c.l.b16 %v869
    %v970 = vunpack.c.l.b16 %v870
    %v971 = vunpack.c.l.b16 %v871
    %v972 = vunpack.c.l.b16 %v872
    %v973 = vunpack.c.l.b16 %v873
    %v974 = vunpack.c.l.b16 %v874
    %v975 = vunpack.c.l.b16 %v875
    %v976 = vunpack.c.l.b16 %v876
    %v977 = vunpack.c.l.b16 %v877
    %v978 = vunpack.c.l.b16 %v878
    %v979 = vunpack.c.l.b16 %v879
    %v980 = vunpack.c.l.b16 %v880
    %v981 = vunpack.c.l.b16 %v881
    %v982 = vunpack.c.l.b16 %v882
    %v983 = vunpack.c.l.b16 %v883
    %v984 = vunpack.c.l.b16 %v884
    %v985 = vunpack.c.l.b16 %v885
    %v986 = vpack.c.b16 %v939, %v938
    %v987 = vpack.c.b16 %v941, %v940
    %v988 = vpack.c.b16 %v943, %v942
    %v989 = vpack.c.b16 %v945, %v944
    %v990 = vpack.c.b16 %v947, %v946
    %v991 = vpack.c.b16 %v949, %v948
    %v992 = vpack.c.b16 %v951, %v950
    %v993 = vpack.c.b16 %v953, %v952
    %v994 = vpack.c.b16 %v955, %v954
    %v995 = vpack.c.b16 %v957, %v956
    %v996 = vpack.c.b16 %v959, %v958
    %v997 = vpack.c.b16 %v961, %v960
    %v998 = vpack.c.b16 %v963, %v962
    %v999 = vpack.c.b16 %v965, %v964
    %v1000 = vpack.c.b16 %v967, %v966
    %v1001 = vpack.c.b16 %v969, %v968
    %v1002 = vpack.c.b16 %v971, %v970
    %v1003 = vpack.c.b16 %v973, %v972
    %v1004 = vpack.c.b16 %v975, %v974
    %v1005 = vpack.c.b16 %v977, %v976
    %v1006 = vpack.c.b16 %v979, %v978
    %v1007 = vpack.c.b16 %v981, %v980
    %v1008 = vpack.c.b16 %v983, %v982
    %v1009 = vpack.c.b16 %v985, %v984
    %1034 = vmatprep.subr.bf16.mxu0 0
    %1035 = vmatpush1.bf16.msra.mxu0 %v986
    %1036 = vmatprep.subr.bf16.mxu0 0
    %1037 = vmatpush1.bf16.msra.mxu0 %v987
    %1038 = vmatprep.subr.bf16.mxu0 0
    %1039 = vmatpush1.bf16.msra.mxu0 %v988
    %1040 = vmatprep.subr.bf16.mxu0 0
    %1041 = vmatpush1.bf16.msra.mxu0 %v989
    %1042 = vmatprep.subr.bf16.mxu0 0
    %1043 = vmatpush1.bf16.msra.mxu0 %v990
    %1044 = vmatprep.subr.bf16.mxu0 0
    %1045 = vmatpush1.bf16.msra.mxu0 %v991
    %1046 = vmatprep.subr.bf16.mxu0 0
    %1047 = vmatpush1.bf16.msra.mxu0 %v992
    %1048 = vmatprep.subr.bf16.mxu0 0
    %1049 = vmatpush1.bf16.msra.mxu0 %v993
    %1050 = vmatprep.subr.bf16.mxu0 0
    %1051 = vmatpush1.bf16.msra.mxu0 %v994
    %1052 = vmatprep.subr.bf16.mxu0 0
    %1053 = vmatpush1.bf16.msra.mxu0 %v995
    %1054 = vmatprep.subr.bf16.mxu0 0
    %1055 = vmatpush1.bf16.msra.mxu0 %v996
    %1056 = vmatprep.subr.bf16.mxu0 0
    %1057 = vmatpush1.bf16.msra.mxu0 %v997
    %1058 = vmatprep.subr.bf16.mxu0 0
    %1059 = vmatpush1.bf16.msra.mxu0 %v998
    %1060 = vmatprep.subr.bf16.mxu0 0
    %1061 = vmatpush1.bf16.msra.mxu0 %v999
    %1062 = vmatprep.subr.bf16.mxu0 0
    %1063 = vmatpush1.bf16.msra.mxu0 %v1000
    %1064 = vmatprep.subr.bf16.mxu0 0
    %1065 = vmatpush1.bf16.msra.mxu0 %v1001
    %1066 = vmatprep.mubr.bf16.mxu0 %v887
    %1067 = vmatmul.mubr.bf16.gmra.mrb[0].mxu0 %v886
    %v1068 = vpop.f32.mrb[0].mxu0
    %v1069 = vadd.f32 %v889, %v1068
    %v1070 = vpop.f32.mrb[0].mxu0
    %v1071 = vpop.f32.mrb[0].mxu0
    %v1072 = vpop.f32.mrb[0].mxu0
    %1073 = vdwg.mxu0
    %1074 = vmatprep.subr.bf16.mxu0 0
    %1075 = vmatpush1.bf16.msra.mxu0 %v1002
    %1076 = vmatprep.subr.bf16.mxu0 0
    %1077 = vmatpush1.bf16.msra.mxu0 %v1003
    %1078 = vmatprep.subr.bf16.mxu0 0
    %1079 = vmatpush1.bf16.msra.mxu0 %v1004
    %1080 = vmatprep.subr.bf16.mxu0 0
    %1081 = vmatpush1.bf16.msra.mxu0 %v1005
    %1082 = vmatprep.subr.bf16.mxu0 0
    %1083 = vmatpush1.bf16.msra.mxu0 %v1006
    %1084 = vmatprep.subr.bf16.mxu0 0
    %1085 = vmatpush1.bf16.msra.mxu0 %v1007
    %1086 = vmatprep.subr.bf16.mxu0 0
    %1087 = vmatpush1.bf16.msra.mxu0 %v1008
    %1088 = vmatprep.subr.bf16.mxu0 0
    %1089 = vmatpush1.bf16.msra.mxu0 %v1009
    %1090 = vmatprep.subr.bf16.mxu0 0
    %1091 = vmatpush1.bf16.msra.mxu0 0
    %1092 = vmatprep.subr.bf16.mxu0 0
    %1093 = vmatpush1.bf16.msra.mxu0 0
    %1094 = vmatprep.subr.bf16.mxu0 0
    %1095 = vmatpush1.bf16.msra.mxu0 0
    %1096 = vmatprep.subr.bf16.mxu0 0
    %1097 = vmatpush1.bf16.msra.mxu0 0
    %1098 = vmatprep.subr.bf16.mxu0 0
    %1099 = vmatpush1.bf16.msra.mxu0 0
    %1100 = vmatprep.subr.bf16.mxu0 0
    %1101 = vmatpush1.bf16.msra.mxu0 0
    %1102 = vmatprep.subr.bf16.mxu0 0
    %1103 = vmatpush1.bf16.msra.mxu0 0
    %1104 = vmatprep.subr.bf16.mxu0 0
    %1105 = vmatpush1.bf16.msra.mxu0 0
    %1106 = vmatprep.mubr.bf16.mxu0 0
    %1107 = vmatmul.mubr.bf16.gmra.mrb[0].mxu0 %v888
    %v1108 = vpop.f32.mrb[0].mxu0
    %v1109 = vadd.f32 %v1069, %v1108
    %v1110 = vpop.f32.mrb[0].mxu0
    %v1111 = vpop.f32.mrb[0].mxu0
    %v1112 = vpop.f32.mrb[0].mxu0
    %1113 = vdwg.mxu0
    %v1114 = vmul.f32 %v1109, %v1109
    %v1115 = vmul.f32 %v1109, %v1114
    %v1116 = vmul.f32 %v1115, 0.044715
    %v1117 = vadd.f32 %v1109, %v1116
    %v1118 = vmul.f32 %v1117, 0.7978846
    %v1119 = vtanh.pop %v1118
    %v1120 = vadd.f32 %v1119, 1.0
    %v1121 = vmul.f32 %v1120, 0.5
    %v1122 = vmul.f32 %v1109, %v1121
    %v1124 = vrot.slane %v1122, 1
    %v1126 = vsel %vm774, 0.0, %v1124
    %v1128 = vrot.slane %v1126, 1
    %v1129 = vrot.slane %v1124, 1
    %v1130 = vsel %vm774, %v1128, %v1129
    %v1132 = vrot.slane %v1126, 2
    %v1133 = vrot.slane %v1124, 2
    %v1134 = vsel %vm783, %v1132, %v1133
    %v1136 = vrot.slane %v1126, 3
    %v1137 = vrot.slane %v1124, 3
    %v1138 = vsel %vm790, %v1136, %v1137
    %v1140 = vrot.slane %v1126, 4
    %v1141 = vrot.slane %v1124, 4
    %v1142 = vsel %vm797, %v1140, %v1141
    %v1144 = vrot.slane %v1126, 5
    %v1145 = vrot.slane %v1124, 5
    %v1146 = vsel %vm804, %v1144, %v1145
    %v1148 = vrot.slane %v1126, 6
    %v1149 = vrot.slane %v1124, 6
    %v1150 = vsel %vm811, %v1148, %v1149
    %v1152 = vrot.slane %v1126, 7
    %v1153 = vrot.slane %v1124, 7
    %v1154 = vsel %vm818, %v1152, %v1153
    %v1156 = vld [vmem:[%s3 + $0xc0] sm:$0xf]
    %v1157 = vld [vmem:[%s3 + $0xc4] sm:$0xf]
    %v1158 = vld [vmem:[%s3 + $0xc8] sm:$0xf]
    %v1159 = vld [vmem:[%s3 + $0xcc] sm:$0xf]
    %v1160 = vld [vmem:[%s3 + $0xd0] sm:$0xf]
    %v1161 = vld [vmem:[%s3 + $0xd4] sm:$0xf]
    %v1162 = vld [vmem:[%s3 + $0xd8] sm:$0xf]
    %v1163 = vld [vmem:[%s3 + $0xdc] sm:$0xf]
    %v1164 = vld [vmem:[%s3 + $0xe0] sm:$0xf]
    %v1165 = vld [vmem:[%s3 + $0xe4] sm:$0xf]
    %v1166 = vld [vmem:[%s3 + $0xe8] sm:$0xf]
    %v1167 = vld [vmem:[%s3 + $0xec] sm:$0xf]
    %v1168 = vld [vmem:[%s3 + $0xf0] sm:$0xf]
    %v1169 = vld [vmem:[%s3 + $0xf4] sm:$0xf]
    %v1170 = vld [vmem:[%s3 + $0xf8] sm:$0xf]
    %v1171 = vld [vmem:[%s3 + $0xfc] sm:$0xf]
    %v1172 = vld [vmem:[%s3 + $0x100] sm:$0xf]
    %v1173 = vld [vmem:[%s3 + $0x104] sm:$0xf]
    %v1174 = vld [vmem:[%s3 + $0x108] sm:$0xf]
    %v1175 = vld [vmem:[%s3 + $0x10c] sm:$0xf]
    %v1176 = vld [vmem:[%s3 + $0x110] sm:$0xf]
    %v1177 = vld [vmem:[%s3 + $0x114] sm:$0xf]
    %v1178 = vld [vmem:[%s3 + $0x118] sm:$0xf]
    %v1179 = vld [vmem:[%s3 + $0x11c] sm:$0xf]
    %v1180 = vld [vmem:[%s3 + $0x120] sm:$0xf]
    %v1181 = vld [vmem:[%s3 + $0x124] sm:$0xf]
    %v1182 = vld [vmem:[%s3 + $0x128] sm:$0xf]
    %v1183 = vld [vmem:[%s3 + $0x12c] sm:$0xf]
    %v1184 = vld [vmem:[%s3 + $0x130] sm:$0xf]
    %v1185 = vld [vmem:[%s3 + $0x134] sm:$0xf]
    %v1186 = vld [vmem:[%s3 + $0x138] sm:$0xf]
    %v1187 = vld [vmem:[%s3 + $0x13c] sm:$0xf]
    %v1188 = vld [vmem:[%s3 + $0x140] sm:$0xf]
    %v1189 = vld [vmem:[%s3 + $0x144] sm:$0xf]
    %v1190 = vld [vmem:[%s3 + $0x148] sm:$0xf]
    %v1191 = vld [vmem:[%s3 + $0x14c] sm:$0xf]
    %v1192 = vld [vmem:[%s3 + $0x150] sm:$0xf]
    %v1193 = vld [vmem:[%s3 + $0x154] sm:$0xf]
    %v1194 = vld [vmem:[%s3 + $0x158] sm:$0xf]
    %v1195 = vld [vmem:[%s3 + $0x15c] sm:$0xf]
    %v1196 = vld [vmem:[%s3 + $0x160] sm:$0xf]
    %v1197 = vld [vmem:[%s3 + $0x164] sm:$0xf]
    %v1198 = vld [vmem:[%s3 + $0x168] sm:$0xf]
    %v1199 = vld [vmem:[%s3 + $0x16c] sm:$0xf]
    %v1200 = vld [vmem:[%s3 + $0x170] sm:$0xf]
    %v1201 = vld [vmem:[%s3 + $0x174] sm:$0xf]
    %v1202 = vld [vmem:[%s3 + $0x178] sm:$0xf]
    %v1203 = vld [vmem:[%s3 + $0x17c] sm:$0xf]
    %v1204 = vld [vmem:[%s3 + $0x180] sm:$0xf]
    %v1205 = vld [vmem:[%s3 + $0x184] sm:$0xf]
    %v1206 = vld [vmem:[%s3 + $0x188] sm:$0xf]
    %v1207 = vld [vmem:[%s3 + $0x18c] sm:$0xf]
    %v1208 = vld [vmem:[%s3 + $0x190] sm:$0xf]
    %v1209 = vld [vmem:[%s3 + $0x194] sm:$0xf]
    %v1210 = vld [vmem:[%s3 + $0x198] sm:$0xf]
    %v1211 = vld [vmem:[%s3 + $0x19c] sm:$0xf]
    %v1212 = vld [vmem:[%s3 + $0x1a0] sm:$0xf]
    %v1213 = vld [vmem:[%s3 + $0x1a4] sm:$0xf]
    %v1214 = vld [vmem:[%s3 + $0x1a8] sm:$0xf]
    %v1215 = vld [vmem:[%s3 + $0x1ac] sm:$0xf]
    %v1216 = vld [vmem:[%s3 + $0x1b0] sm:$0xf]
    %v1217 = vld [vmem:[%s3 + $0x1b4] sm:$0xf]
    %v1218 = vld [vmem:[%s3 + $0x1b8] sm:$0xf]
    %v1219 = vld [vmem:[%s3 + $0x1bc] sm:$0xf]
    %v1220 = vld [vmem:[%s3 + $0x1c0] sm:$0xf]
    %v1221 = vld [vmem:[%s3 + $0x1c4] sm:$0xf]
    %v1222 = vld [vmem:[%s3 + $0x1c8] sm:$0xf]
    %v1223 = vld [vmem:[%s3 + $0x1cc] sm:$0xf]
    %v1224 = vld [vmem:[%s3 + $0x1d0] sm:$0xf]
    %v1225 = vld [vmem:[%s3 + $0x1d4] sm:$0xf]
    %v1226 = vld [vmem:[%s3 + $0x1d8] sm:$0xf]
    %v1227 = vld [vmem:[%s3 + $0x1dc] sm:$0xf]
    %v1228 = vld [vmem:[%s3 + $0x1e0] sm:$0xf]
    %v1229 = vld [vmem:[%s3 + $0x1e4] sm:$0xf]
    %v1230 = vld [vmem:[%s3 + $0x1e8] sm:$0xf]
    %v1231 = vld [vmem:[%s3 + $0x1ec] sm:$0xf]
    %v1232 = vld [vmem:[%s3 + $0x1f0] sm:$0xf]
    %v1233 = vld [vmem:[%s3 + $0x1f4] sm:$0xf]
    %v1234 = vld [vmem:[%s3 + $0x1f8] sm:$0xf]
    %v1235 = vld [vmem:[%s3 + $0x1fc] sm:$0xf]
    %v1236 = vld [vmem:[%s3 + $0x200] sm:$0xf]
    %v1237 = vld [vmem:[%s3 + $0x204] sm:$0xf]
    %v1238 = vld [vmem:[%s3 + $0x208] sm:$0xf]
    %v1239 = vld [vmem:[%s3 + $0x20c] sm:$0xf]
    %v1240 = vld [vmem:[%s3 + $0x210] sm:$0xf]
    %v1241 = vld [vmem:[%s3 + $0x214] sm:$0xf]
    %v1242 = vld [vmem:[%s3 + $0x218] sm:$0xf]
    %v1243 = vld [vmem:[%s3 + $0x21c] sm:$0xf]
    %v1244 = vld [vmem:[%s3 + $0x220] sm:$0xf]
    %v1245 = vld [vmem:[%s3 + $0x224] sm:$0xf]
    %v1246 = vld [vmem:[%s3 + $0x228] sm:$0xf]
    %v1247 = vld [vmem:[%s3 + $0x22c] sm:$0xf]
    %v1248 = vld [vmem:[%s3 + $0x230] sm:$0xf]
    %v1249 = vld [vmem:[%s3 + $0x234] sm:$0xf]
    %v1250 = vld [vmem:[%s3 + $0x238] sm:$0xf]
    %v1251 = vld [vmem:[%s3 + $0x23c] sm:$0xf]
    %v1252 = vld [vmem:[%s3 + $0x240] sm:$0xf]
    %v1253 = vld [vmem:[%s3 + $0x244] sm:$0xf]
    %v1254 = vld [vmem:[%s3 + $0x248] sm:$0xf]
    %v1255 = vld [vmem:[%s3 + $0x24c] sm:$0xf]
    %v1256 = vld [vmem:[%s3 + $0x250] sm:$0xf]
    %v1257 = vld [vmem:[%s3 + $0x254] sm:$0xf]
    %v1258 = vld [vmem:[%s3 + $0x258] sm:$0xf]
    %v1259 = vld [vmem:[%s3 + $0x25c] sm:$0xf]
    %v1260 = vld [vmem:[%s3 + $0x260] sm:$0xf]
    %v1261 = vld [vmem:[%s3 + $0x264] sm:$0xf]
    %v1262 = vld [vmem:[%s3 + $0x268] sm:$0xf]
    %v1263 = vld [vmem:[%s3 + $0x26c] sm:$0xf]
    %v1264 = vld [vmem:[%s3 + $0x270] sm:$0xf]
    %v1265 = vld [vmem:[%s3 + $0x274] sm:$0xf]
    %v1266 = vld [vmem:[%s3 + $0x278] sm:$0xf]
    %v1267 = vld [vmem:[%s3 + $0x27c] sm:$0xf]
    %v1268 = vld [vmem:[%s3 + $0x280] sm:$0xf]
    %v1269 = vld [vmem:[%s3 + $0x284] sm:$0xf]
    %v1270 = vld [vmem:[%s3 + $0x288] sm:$0xf]
    %v1271 = vld [vmem:[%s3 + $0x28c] sm:$0xf]
    %v1272 = vld [vmem:[%s3 + $0x290] sm:$0xf]
    %v1273 = vld [vmem:[%s3 + $0x294] sm:$0xf]
    %v1274 = vld [vmem:[%s3 + $0x298] sm:$0xf]
    %v1275 = vld [vmem:[%s3 + $0x29c] sm:$0xf]
    %v1276 = vld [vmem:[%s3 + $0x2a0] sm:$0xf]
    %v1277 = vld [vmem:[%s3 + $0x2a4] sm:$0xf]
    %v1278 = vld [vmem:[%s3 + $0x2a8] sm:$0xf]
    %v1279 = vld [vmem:[%s3 + $0x2ac] sm:$0xf]
    %v1280 = vld [vmem:[%s3 + $0x2b0] sm:$0xf]
    %v1281 = vld [vmem:[%s3 + $0x2b4] sm:$0xf]
    %v1282 = vld [vmem:[%s3 + $0x2b8] sm:$0xf]
    %v1283 = vld [vmem:[%s3 + $0x2bc] sm:$0xf]
    %v1284 = vpack.c.bf16 %v1126, %v1126
    %v1285 = vpack.c.bf16 %v1130, %v1130
    %v1286 = vpack.c.bf16 %v1134, %v1134
    %v1287 = vpack.c.bf16 %v1138, %v1138
    %v1288 = vpack.c.bf16 %v1142, %v1142
    %v1289 = vpack.c.bf16 %v1146, %v1146
    %v1290 = vpack.c.bf16 %v1150, %v1150
    %v1291 = vpack.c.bf16 %v1154, %v1154
    %v1292 = vld [vmem:[%s6 + $0x2] ss:$0 sm:$0xff]
    %v1421 = vunpack.c.l.b16 %v1156
    %v1422 = vunpack.c.l.b16 %v1157
    %v1423 = vunpack.c.l.b16 %v1158
    %v1424 = vunpack.c.l.b16 %v1159
    %v1425 = vunpack.c.l.b16 %v1160
    %v1426 = vunpack.c.l.b16 %v1161
    %v1427 = vunpack.c.l.b16 %v1162
    %v1428 = vunpack.c.l.b16 %v1163
    %v1429 = vunpack.c.l.b16 %v1164
    %v1430 = vunpack.c.l.b16 %v1165
    %v1431 = vunpack.c.l.b16 %v1166
    %v1432 = vunpack.c.l.b16 %v1167
    %v1433 = vunpack.c.l.b16 %v1168
    %v1434 = vunpack.c.l.b16 %v1169
    %v1435 = vunpack.c.l.b16 %v1170
    %v1436 = vunpack.c.l.b16 %v1171
    %v1437 = vunpack.c.l.b16 %v1172
    %v1438 = vunpack.c.l.b16 %v1173
    %v1439 = vunpack.c.l.b16 %v1174
    %v1440 = vunpack.c.l.b16 %v1175
    %v1441 = vunpack.c.l.b16 %v1176
    %v1442 = vunpack.c.l.b16 %v1177
    %v1443 = vunpack.c.l.b16 %v1178
    %v1444 = vunpack.c.l.b16 %v1179
    %v1445 = vunpack.c.l.b16 %v1180
    %v1446 = vunpack.c.l.b16 %v1181
    %v1447 = vunpack.c.l.b16 %v1182
    %v1448 = vunpack.c.l.b16 %v1183
    %v1449 = vunpack.c.l.b16 %v1184
    %v1450 = vunpack.c.l.b16 %v1185
    %v1451 = vunpack.c.l.b16 %v1186
    %v1452 = vunpack.c.l.b16 %v1187
    %v1453 = vunpack.c.l.b16 %v1188
    %v1454 = vunpack.c.l.b16 %v1189
    %v1455 = vunpack.c.l.b16 %v1190
    %v1456 = vunpack.c.l.b16 %v1191
    %v1457 = vunpack.c.l.b16 %v1192
    %v1458 = vunpack.c.l.b16 %v1193
    %v1459 = vunpack.c.l.b16 %v1194
    %v1460 = vunpack.c.l.b16 %v1195
    %v1461 = vunpack.c.l.b16 %v1196
    %v1462 = vunpack.c.l.b16 %v1197
    %v1463 = vunpack.c.l.b16 %v1198
    %v1464 = vunpack.c.l.b16 %v1199
    %v1465 = vunpack.c.l.b16 %v1200
    %v1466 = vunpack.c.l.b16 %v1201
    %v1467 = vunpack.c.l.b16 %v1202
    %v1468 = vunpack.c.l.b16 %v1203
    %v1469 = vunpack.c.l.b16 %v1204
    %v1470 = vunpack.c.l.b16 %v1205
    %v1471 = vunpack.c.l.b16 %v1206
    %v1472 = vunpack.c.l.b16 %v1207
    %v1473 = vunpack.c.l.b16 %v1208
    %v1474 = vunpack.c.l.b16 %v1209
    %v1475 = vunpack.c.l.b16 %v1210
    %v1476 = vunpack.c.l.b16 %v1211
    %v1477 = vunpack.c.l.b16 %v1212
    %v1478 = vunpack.c.l.b16 %v1213
    %v1479 = vunpack.c.l.b16 %v1214
    %v1480 = vunpack.c.l.b16 %v1215
    %v1481 = vunpack.c.l.b16 %v1216
    %v1482 = vunpack.c.l.b16 %v1217
    %v1483 = vunpack.c.l.b16 %v1218
    %v1484 = vunpack.c.l.b16 %v1219
    %v1485 = vunpack.c.l.b16 %v1220
    %v1486 = vunpack.c.l.b16 %v1221
    %v1487 = vunpack.c.l.b16 %v1222
    %v1488 = vunpack.c.l.b16 %v1223
    %v1489 = vunpack.c.l.b16 %v1224
    %v1490 = vunpack.c.l.b16 %v1225
    %v1491 = vunpack.c.l.b16 %v1226
    %v1492 = vunpack.c.l.b16 %v1227
    %v1493 = vunpack.c.l.b16 %v1228
    %v1494 = vunpack.c.l.b16 %v1229
    %v1495 = vunpack.c.l.b16 %v1230
    %v1496 = vunpack.c.l.b16 %v1231
    %v1497 = vunpack.c.l.b16 %v1232
    %v1498 = vunpack.c.l.b16 %v1233
    %v1499 = vunpack.c.l.b16 %v1234
    %v1500 = vunpack.c.l.b16 %v1235
    %v1501 = vunpack.c.l.b16 %v1236
    %v1502 = vunpack.c.l.b16 %v1237
    %v1503 = vunpack.c.l.b16 %v1238
    %v1504 = vunpack.c.l.b16 %v1239
    %v1505 = vunpack.c.l.b16 %v1240
    %v1506 = vunpack.c.l.b16 %v1241
    %v1507 = vunpack.c.l.b16 %v1242
    %v1508 = vunpack.c.l.b16 %v1243
    %v1509 = vunpack.c.l.b16 %v1244
    %v1510 = vunpack.c.l.b16 %v1245
    %v1511 = vunpack.c.l.b16 %v1246
    %v1512 = vunpack.c.l.b16 %v1247
    %v1513 = vunpack.c.l.b16 %v1248
    %v1514 = vunpack.c.l.b16 %v1249
    %v1515 = vunpack.c.l.b16 %v1250
    %v1516 = vunpack.c.l.b16 %v1251
    %v1517 = vunpack.c.l.b16 %v1252
    %v1518 = vunpack.c.l.b16 %v1253
    %v1519 = vunpack.c.l.b16 %v1254
    %v1520 = vunpack.c.l.b16 %v1255
    %v1521 = vunpack.c.l.b16 %v1256
    %v1522 = vunpack.c.l.b16 %v1257
    %v1523 = vunpack.c.l.b16 %v1258
    %v1524 = vunpack.c.l.b16 %v1259
    %v1525 = vunpack.c.l.b16 %v1260
    %v1526 = vunpack.c.l.b16 %v1261
    %v1527 = vunpack.c.l.b16 %v1262
    %v1528 = vunpack.c.l.b16 %v1263
    %v1529 = vunpack.c.l.b16 %v1264
    %v1530 = vunpack.c.l.b16 %v1265
    %v1531 = vunpack.c.l.b16 %v1266
    %v1532 = vunpack.c.l.b16 %v1267
    %v1533 = vunpack.c.l.b16 %v1268
    %v1534 = vunpack.c.l.b16 %v1269
    %v1535 = vunpack.c.l.b16 %v1270
    %v1536 = vunpack.c.l.b16 %v1271
    %v1537 = vunpack.c.l.b16 %v1272
    %v1538 = vunpack.c.l.b16 %v1273
    %v1539 = vunpack.c.l.b16 %v1274
    %v1540 = vunpack.c.l.b16 %v1275
    %v1541 = vunpack.c.l.b16 %v1276
    %v1542 = vunpack.c.l.b16 %v1277
    %v1543 = vunpack.c.l.b16 %v1278
    %v1544 = vunpack.c.l.b16 %v1279
    %v1545 = vunpack.c.l.b16 %v1280
    %v1546 = vunpack.c.l.b16 %v1281
    %v1547 = vunpack.c.l.b16 %v1282
    %v1548 = vunpack.c.l.b16 %v1283
    %v1549 = vpack.c.b16 %v1422, %v1421
    %v1550 = vpack.c.b16 %v1424, %v1423
    %v1551 = vpack.c.b16 %v1426, %v1425
    %v1552 = vpack.c.b16 %v1428, %v1427
    %v1553 = vpack.c.b16 %v1430, %v1429
    %v1554 = vpack.c.b16 %v1432, %v1431
    %v1555 = vpack.c.b16 %v1434, %v1433
    %v1556 = vpack.c.b16 %v1436, %v1435
    %v1557 = vpack.c.b16 %v1438, %v1437
    %v1558 = vpack.c.b16 %v1440, %v1439
    %v1559 = vpack.c.b16 %v1442, %v1441
    %v1560 = vpack.c.b16 %v1444, %v1443
    %v1561 = vpack.c.b16 %v1446, %v1445
    %v1562 = vpack.c.b16 %v1448, %v1447
    %v1563 = vpack.c.b16 %v1450, %v1449
    %v1564 = vpack.c.b16 %v1452, %v1451
    %v1565 = vpack.c.b16 %v1454, %v1453
    %v1566 = vpack.c.b16 %v1456, %v1455
    %v1567 = vpack.c.b16 %v1458, %v1457
    %v1568 = vpack.c.b16 %v1460, %v1459
    %v1569 = vpack.c.b16 %v1462, %v1461
    %v1570 = vpack.c.b16 %v1464, %v1463
    %v1571 = vpack.c.b16 %v1466, %v1465
    %v1572 = vpack.c.b16 %v1468, %v1467
    %v1573 = vpack.c.b16 %v1470, %v1469
    %v1574 = vpack.c.b16 %v1472, %v1471
    %v1575 = vpack.c.b16 %v1474, %v1473
    %v1576 = vpack.c.b16 %v1476, %v1475
    %v1577 = vpack.c.b16 %v1478, %v1477
    %v1578 = vpack.c.b16 %v1480, %v1479
    %v1579 = vpack.c.b16 %v1482, %v1481
    %v1580 = vpack.c.b16 %v1484, %v1483
    %v1581 = vpack.c.b16 %v1486, %v1485
    %v1582 = vpack.c.b16 %v1488, %v1487
    %v1583 = vpack.c.b16 %v1490, %v1489
    %v1584 = vpack.c.b16 %v1492, %v1491
    %v1585 = vpack.c.b16 %v1494, %v1493
    %v1586 = vpack.c.b16 %v1496, %v1495
    %v1587 = vpack.c.b16 %v1498, %v1497
    %v1588 = vpack.c.b16 %v1500, %v1499
    %v1589 = vpack.c.b16 %v1502, %v1501
    %v1590 = vpack.c.b16 %v1504, %v1503
    %v1591 = vpack.c.b16 %v1506, %v1505
    %v1592 = vpack.c.b16 %v1508, %v1507
    %v1593 = vpack.c.b16 %v1510, %v1509
    %v1594 = vpack.c.b16 %v1512, %v1511
    %v1595 = vpack.c.b16 %v1514, %v1513
    %v1596 = vpack.c.b16 %v1516, %v1515
    %v1597 = vpack.c.b16 %v1518, %v1517
    %v1598 = vpack.c.b16 %v1520, %v1519
    %v1599 = vpack.c.b16 %v1522, %v1521
    %v1600 = vpack.c.b16 %v1524, %v1523
    %v1601 = vpack.c.b16 %v1526, %v1525
    %v1602 = vpack.c.b16 %v1528, %v1527
    %v1603 = vpack.c.b16 %v1530, %v1529
    %v1604 = vpack.c.b16 %v1532, %v1531
    %v1605 = vpack.c.b16 %v1534, %v1533
    %v1606 = vpack.c.b16 %v1536, %v1535
    %v1607 = vpack.c.b16 %v1538, %v1537
    %v1608 = vpack.c.b16 %v1540, %v1539
    %v1609 = vpack.c.b16 %v1542, %v1541
    %v1610 = vpack.c.b16 %v1544, %v1543
    %v1611 = vpack.c.b16 %v1546, %v1545
    %v1612 = vpack.c.b16 %v1548, %v1547
    %1677 = vmatprep.subr.bf16.mxu0 0
    %1678 = vmatpush1.bf16.msra.mxu0 %v1549
    %1679 = vmatprep.subr.bf16.mxu0 0
    %1680 = vmatpush1.bf16.msra.mxu0 %v1550
    %1681 = vmatprep.subr.bf16.mxu0 0
    %1682 = vmatpush1.bf16.msra.mxu0 %v1551
    %1683 = vmatprep.subr.bf16.mxu0 0
    %1684 = vmatpush1.bf16.msra.mxu0 %v1552
    %1685 = vmatprep.subr.bf16.mxu0 0
    %1686 = vmatpush1.bf16.msra.mxu0 %v1553
    %1687 = vmatprep.subr.bf16.mxu0 0
    %1688 = vmatpush1.bf16.msra.mxu0 %v1554
    %1689 = vmatprep.subr.bf16.mxu0 0
    %1690 = vmatpush1.bf16.msra.mxu0 %v1555
    %1691 = vmatprep.subr.bf16.mxu0 0
    %1692 = vmatpush1.bf16.msra.mxu0 %v1556
    %1693 = vmatprep.subr.bf16.mxu0 0
    %1694 = vmatpush1.bf16.msra.mxu0 %v1557
    %1695 = vmatprep.subr.bf16.mxu0 0
    %1696 = vmatpush1.bf16.msra.mxu0 %v1558
    %1697 = vmatprep.subr.bf16.mxu0 0
    %1698 = vmatpush1.bf16.msra.mxu0 %v1559
    %1699 = vmatprep.subr.bf16.mxu0 0
    %1700 = vmatpush1.bf16.msra.mxu0 %v1560
    %1701 = vmatprep.subr.bf16.mxu0 0
    %1702 = vmatpush1.bf16.msra.mxu0 %v1561
    %1703 = vmatprep.subr.bf16.mxu0 0
    %1704 = vmatpush1.bf16.msra.mxu0 %v1562
    %1705 = vmatprep.subr.bf16.mxu0 0
    %1706 = vmatpush1.bf16.msra.mxu0 %v1563
    %1707 = vmatprep.subr.bf16.mxu0 0
    %1708 = vmatpush1.bf16.msra.mxu0 %v1564
    %1709 = vmatprep.mubr.bf16.mxu0 %v1285
    %1710 = vmatmul.mubr.bf16.gmra.mrb[0].mxu0 %v1284
    %v1711 = vpop.f32.mrb[0].mxu0
    %v1712 = vadd.f32 %v1292, %v1711
    %v1713 = vpop.f32.mrb[0].mxu0
    %v1714 = vpop.f32.mrb[0].mxu0
    %v1715 = vpop.f32.mrb[0].mxu0
    %1716 = vdwg.mxu0
    %1717 = vmatprep.subr.bf16.mxu0 0
    %1718 = vmatpush1.bf16.msra.mxu0 %v1565
    %1719 = vmatprep.subr.bf16.mxu0 0
    %1720 = vmatpush1.bf16.msra.mxu0 %v1566
    %1721 = vmatprep.subr.bf16.mxu0 0
    %1722 = vmatpush1.bf16.msra.mxu0 %v1567
    %1723 = vmatprep.subr.bf16.mxu0 0
    %1724 = vmatpush1.bf16.msra.mxu0 %v1568
    %1725 = vmatprep.subr.bf16.mxu0 0
    %1726 = vmatpush1.bf16.msra.mxu0 %v1569
    %1727 = vmatprep.subr.bf16.mxu0 0
    %1728 = vmatpush1.bf16.msra.mxu0 %v1570
    %1729 = vmatprep.subr.bf16.mxu0 0
    %1730 = vmatpush1.bf16.msra.mxu0 %v1571
    %1731 = vmatprep.subr.bf16.mxu0 0
    %1732 = vmatpush1.bf16.msra.mxu0 %v1572
    %1733 = vmatprep.subr.bf16.mxu0 0
    %1734 = vmatpush1.bf16.msra.mxu0 %v1573
    %1735 = vmatprep.subr.bf16.mxu0 0
    %1736 = vmatpush1.bf16.msra.mxu0 %v1574
    %1737 = vmatprep.subr.bf16.mxu0 0
    %1738 = vmatpush1.bf16.msra.mxu0 %v1575
    %1739 = vmatprep.subr.bf16.mxu0 0
    %1740 = vmatpush1.bf16.msra.mxu0 %v1576
    %1741 = vmatprep.subr.bf16.mxu0 0
    %1742 = vmatpush1.bf16.msra.mxu0 %v1577
    %1743 = vmatprep.subr.bf16.mxu0 0
    %1744 = vmatpush1.bf16.msra.mxu0 %v1578
    %1745 = vmatprep.subr.bf16.mxu0 0
    %1746 = vmatpush1.bf16.msra.mxu0 %v1579
    %1747 = vmatprep.subr.bf16.mxu0 0
    %1748 = vmatpush1.bf16.msra.mxu0 %v1580
    %1749 = vmatprep.mubr.bf16.mxu0 %v1287
    %1750 = vmatmul.mubr.bf16.gmra.mrb[0].mxu0 %v1286
    %v1751 = vpop.f32.mrb[0].mxu0
    %v1752 = vadd.f32 %v1712, %v1751
    %v1753 = vpop.f32.mrb[0].mxu0
    %v1754 = vpop.f32.mrb[0].mxu0
    %v1755 = vpop.f32.mrb[0].mxu0
    %1756 = vdwg.mxu0
    %1757 = vmatprep.subr.bf16.mxu0 0
    %1758 = vmatpush1.bf16.msra.mxu0 %v1581
    %1759 = vmatprep.subr.bf16.mxu0 0
    %1760 = vmatpush1.bf16.msra.mxu0 %v1582
    %1761 = vmatprep.subr.bf16.mxu0 0
    %1762 = vmatpush1.bf16.msra.mxu0 %v1583
    %1763 = vmatprep.subr.bf16.mxu0 0
    %1764 = vmatpush1.bf16.msra.mxu0 %v1584
    %1765 = vmatprep.subr.bf16.mxu0 0
    %1766 = vmatpush1.bf16.msra.mxu0 %v1585
    %1767 = vmatprep.subr.bf16.mxu0 0
    %1768 = vmatpush1.bf16.msra.mxu0 %v1586
    %1769 = vmatprep.subr.bf16.mxu0 0
    %1770 = vmatpush1.bf16.msra.mxu0 %v1587
    %1771 = vmatprep.subr.bf16.mxu0 0
    %1772 = vmatpush1.bf16.msra.mxu0 %v1588
    %1773 = vmatprep.subr.bf16.mxu0 0
    %1774 = vmatpush1.bf16.msra.mxu0 %v1589
    %1775 = vmatprep.subr.bf16.mxu0 0
    %1776 = vmatpush1.bf16.msra.mxu0 %v1590
    %1777 = vmatprep.subr.bf16.mxu0 0
    %1778 = vmatpush1.bf16.msra.mxu0 %v1591
    %1779 = vmatprep.subr.bf16.mxu0 0
    %1780 = vmatpush1.bf16.msra.mxu0 %v1592
    %1781 = vmatprep.subr.bf16.mxu0 0
    %1782 = vmatpush1.bf16.msra.mxu0 %v1593
    %1783 = vmatprep.subr.bf16.mxu0 0
    %1784 = vmatpush1.bf16.msra.mxu0 %v1594
    %1785 = vmatprep.subr.bf16.mxu0 0
    %1786 = vmatpush1.bf16.msra.mxu0 %v1595
    %1787 = vmatprep.subr.bf16.mxu0 0
    %1788 = vmatpush1.bf16.msra.mxu0 %v1596
    %1789 = vmatprep.mubr.bf16.mxu0 %v1289
    %1790 = vmatmul.mubr.bf16.gmra.mrb[0].mxu0 %v1288
    %v1791 = vpop.f32.mrb[0].mxu0
    %v1792 = vadd.f32 %v1752, %v1791
    %v1793 = vpop.f32.mrb[0].mxu0
    %v1794 = vpop.f32.mrb[0].mxu0
    %v1795 = vpop.f32.mrb[0].mxu0
    %1796 = vdwg.mxu0
    %1797 = vmatprep.subr.bf16.mxu0 0
    %1798 = vmatpush1.bf16.msra.mxu0 %v1597
    %1799 = vmatprep.subr.bf16.mxu0 0
    %1800 = vmatpush1.bf16.msra.mxu0 %v1598
    %1801 = vmatprep.subr.bf16.mxu0 0
    %1802 = vmatpush1.bf16.msra.mxu0 %v1599
    %1803 = vmatprep.subr.bf16.mxu0 0
    %1804 = vmatpush1.bf16.msra.mxu0 %v1600
    %1805 = vmatprep.subr.bf16.mxu0 0
    %1806 = vmatpush1.bf16.msra.mxu0 %v1601
    %1807 = vmatprep.subr.bf16.mxu0 0
    %1808 = vmatpush1.bf16.msra.mxu0 %v1602
    %1809 = vmatprep.subr.bf16.mxu0 0
    %1810 = vmatpush1.bf16.msra.mxu0 %v1603
    %1811 = vmatprep.subr.bf16.mxu0 0
    %1812 = vmatpush1.bf16.msra.mxu0 %v1604
    %1813 = vmatprep.subr.bf16.mxu0 0
    %1814 = vmatpush1.bf16.msra.mxu0 %v1605
    %1815 = vmatprep.subr.bf16.mxu0 0
    %1816 = vmatpush1.bf16.msra.mxu0 %v1606
    %1817 = vmatprep.subr.bf16.mxu0 0
    %1818 = vmatpush1.bf16.msra.mxu0 %v1607
    %1819 = vmatprep.subr.bf16.mxu0 0
    %1820 = vmatpush1.bf16.msra.mxu0 %v1608
    %1821 = vmatprep.subr.bf16.mxu0 0
    %1822 = vmatpush1.bf16.msra.mxu0 %v1609
    %1823 = vmatprep.subr.bf16.mxu0 0
    %1824 = vmatpush1.bf16.msra.mxu0 %v1610
    %1825 = vmatprep.subr.bf16.mxu0 0
    %1826 = vmatpush1.bf16.msra.mxu0 %v1611
    %1827 = vmatprep.subr.bf16.mxu0 0
    %1828 = vmatpush1.bf16.msra.mxu0 %v1612
    %1829 = vmatprep.mubr.bf16.mxu0 %v1291
    %1830 = vmatmul.mubr.bf16.gmra.mrb[0].mxu0 %v1290
    %v1831 = vpop.f32.mrb[0].mxu0
    %v1832 = vadd.f32 %v1792, %v1831
    %v1833 = vpop.f32.mrb[0].mxu0
    %v1834 = vpop.f32.mrb[0].mxu0
    %v1835 = vpop.f32.mrb[0].mxu0
    %1836 = vdwg.mxu0
    %v1837 = vmul.f32 %v1832, %v1832
    %v1838 = vmul.f32 %v1832, %v1837
    %v1839 = vmul.f32 %v1838, 0.044715
    %v1840 = vadd.f32 %v1832, %v1839
    %v1841 = vmul.f32 %v1840, 0.7978846
    %v1842 = vtanh.pop %v1841
    %v1843 = vadd.f32 %v1842, 1.0
    %v1844 = vmul.f32 %v1843, 0.5
    %v1845 = vmul.f32 %v1832, %v1844
    %v1846 = vld [vmem:[%s3 + $0x2c0] sm:$0xf]
    %v1847 = vld [vmem:[%s3 + $0x2c4] sm:$0xf]
    %v1848 = vld [vmem:[%s3 + $0x2c8] sm:$0xf]
    %v1849 = vld [vmem:[%s3 + $0x2cc] sm:$0xf]
    %v1850 = vld [vmem:[%s3 + $0x2d0] sm:$0xf]
    %v1851 = vld [vmem:[%s3 + $0x2d4] sm:$0xf]
    %v1852 = vpack.c.bf16 %v770, %v770
    %v1853 = vld [vmem:[%s6 + $0x3] ss:$0 sm:$0xff]
    %v1860 = vunpack.c.l.b16 %v1846
    %v1861 = vunpack.c.l.b16 %v1847
    %v1862 = vunpack.c.l.b16 %v1848
    %v1863 = vunpack.c.l.b16 %v1849
    %v1864 = vunpack.c.l.b16 %v1850
    %v1865 = vunpack.c.l.b16 %v1851
    %v1866 = vpack.c.b16 %v1861, %v1860
    %v1867 = vpack.c.b16 %v1863, %v1862
    %v1868 = vpack.c.b16 %v1865, %v1864
    %v1873 = vsel %vm825, %v1852, 0
    %1875 = vmatprep.subr.bf16.mxu0 0
    %1876 = vmatpush1.bf16.msra.mxu0 %v1866
    %1877 = vmatprep.subr.bf16.mxu0 0
    %1878 = vmatpush1.bf16.msra.mxu0 %v1867
    %1879 = vmatprep.subr.bf16.mxu0 0
    %1880 = vmatpush1.bf16.msra.mxu0 %v1868
    %1881 = vmatprep.subr.bf16.mxu0 0
    %1882 = vmatpush1.bf16.msra.mxu0 0
    %1883 = vmatprep.subr.bf16.mxu0 0
    %1884 = vmatpush1.bf16.msra.mxu0 0
    %1885 = vmatprep.subr.bf16.mxu0 0
    %1886 = vmatpush1.bf16.msra.mxu0 0
    %1887 = vmatprep.subr.bf16.mxu0 0
    %1888 = vmatpush1.bf16.msra.mxu0 0
    %1889 = vmatprep.subr.bf16.mxu0 0
    %1890 = vmatpush1.bf16.msra.mxu0 0
    %1891 = vmatprep.subr.bf16.mxu0 0
    %1892 = vmatpush1.bf16.msra.mxu0 0
    %1893 = vmatprep.subr.bf16.mxu0 0
    %1894 = vmatpush1.bf16.msra.mxu0 0
    %1895 = vmatprep.subr.bf16.mxu0 0
    %1896 = vmatpush1.bf16.msra.mxu0 0
    %1897 = vmatprep.subr.bf16.mxu0 0
    %1898 = vmatpush1.bf16.msra.mxu0 0
    %1899 = vmatprep.subr.bf16.mxu0 0
    %1900 = vmatpush1.bf16.msra.mxu0 0
    %1901 = vmatprep.subr.bf16.mxu0 0
    %1902 = vmatpush1.bf16.msra.mxu0 0
    %1903 = vmatprep.subr.bf16.mxu0 0
    %1904 = vmatpush1.bf16.msra.mxu0 0
    %1905 = vmatprep.subr.bf16.mxu0 0
    %1906 = vmatpush1.bf16.msra.mxu0 0
    %1907 = vmatprep.mubr.bf16.mxu0 0
    %1908 = vmatmul.mubr.bf16.gmra.mrb[0].mxu0 %v1873
    %v1909 = vpop.f32.mrb[0].mxu0
    %v1910 = vadd.f32 %v1853, %v1909
    %v1911 = vpop.f32.mrb[0].mxu0
    %v1912 = vpop.f32.mrb[0].mxu0
    %v1913 = vpop.f32.mrb[0].mxu0
    %1914 = vdwg.mxu0
    %v1915 = vadd.f32 %v1845, %v1910
    %v1916 = vmul.f32 %v1915, %v1915
    %v1917 = vmul.f32 %v1915, %v1916
    %v1918 = vmul.f32 %v1917, 0.044715
    %v1919 = vadd.f32 %v1915, %v1918
    %v1920 = vmul.f32 %v1919, 0.7978846
    %v1921 = vtanh.pop %v1920
    %v1922 = vadd.f32 %v1921, 1.0
    %v1923 = vmul.f32 %v1922, 0.5
    %v1924 = vmul.f32 %v1915, %v1923
    %s1925 = smul.u32 4, 208
    %s1926 = smul.u32 %s1925, 2
    %s1927 = sshll.u32 %s1926, 4
    %1928 = dma.done [#allocation4], %s1927
    %v1930 = vrot.slane %v1924, 2
    %v1932 = vsel %vm783, 0.0, %v1930
    %v1934 = vrot.slane %v1932, 2
    %v1935 = vrot.slane %v1930, 2
    %v1936 = vsel %vm783, %v1934, %v1935
    %v1938 = vrot.slane %v1932, 4
    %v1939 = vrot.slane %v1930, 4
    %v1940 = vsel %vm797, %v1938, %v1939
    %v1942 = vrot.slane %v1932, 6
    %v1943 = vrot.slane %v1930, 6
    %v1944 = vsel %vm811, %v1942, %v1943
    %v1946 = vld [vmem:[#allocation2] sm:$0xff]
    %v1947 = vld [vmem:[#allocation2 + $0x8] sm:$0xff]
    %v1948 = vld [vmem:[#allocation2 + $0x10] sm:$0xff]
    %v1949 = vld [vmem:[#allocation2 + $0x18] sm:$0xff]
    %v1950 = vld [vmem:[#allocation2 + $0x20] sm:$0xff]
    %v1951 = vld [vmem:[#allocation2 + $0x28] sm:$0xff]
    %v1952 = vld [vmem:[#allocation2 + $0x30] sm:$0xff]
    %v1953 = vld [vmem:[#allocation2 + $0x38] sm:$0xff]
    %v1954 = vld [vmem:[#allocation2 + $0x40] sm:$0xff]
    %v1955 = vld [vmem:[#allocation2 + $0x48] sm:$0xff]
    %v1956 = vld [vmem:[#allocation2 + $0x50] sm:$0xff]
    %v1957 = vld [vmem:[#allocation2 + $0x58] sm:$0xff]
    %v1958 = vld [vmem:[#allocation2 + $0x60] sm:$0xff]
    %v1959 = vld [vmem:[#allocation2 + $0x68] sm:$0xff]
    %v1960 = vld [vmem:[#allocation2 + $0x70] sm:$0xff]
    %v1961 = vld [vmem:[#allocation2 + $0x78] sm:$0xff]
    %v1962 = vld [vmem:[#allocation2 + $0x80] sm:$0xff]
    %v1963 = vld [vmem:[#allocation2 + $0x88] sm:$0xff]
    %v1964 = vld [vmem:[#allocation2 + $0x90] sm:$0xff]
    %v1965 = vld [vmem:[#allocation2 + $0x98] sm:$0xff]
    %v1966 = vld [vmem:[#allocation2 + $0xa0] sm:$0xff]
    %v1967 = vld [vmem:[#allocation2 + $0xa8] sm:$0xff]
    %v1968 = vld [vmem:[#allocation2 + $0xb0] sm:$0xff]
    %v1969 = vld [vmem:[#allocation2 + $0xb8] sm:$0xff]
    %v1970 = vld [vmem:[#allocation2 + $0xc0] sm:$0xff]
    %v1971 = vld [vmem:[#allocation2 + $0xc8] sm:$0xff]
    %v1972 = vld [vmem:[#allocation2 + $0xd0] sm:$0xff]
    %v1973 = vld [vmem:[#allocation2 + $0xd8] sm:$0xff]
    %v1974 = vld [vmem:[#allocation2 + $0xe0] sm:$0xff]
    %v1975 = vld [vmem:[#allocation2 + $0xe8] sm:$0xff]
    %v1976 = vld [vmem:[#allocation2 + $0xf0] sm:$0xff]
    %v1977 = vld [vmem:[#allocation2 + $0xf8] sm:$0xff]
    %v1978 = vld [vmem:[#allocation2 + $0x100] sm:$0xff]
    %v1979 = vld [vmem:[#allocation2 + $0x108] sm:$0xff]
    %v1980 = vld [vmem:[#allocation2 + $0x110] sm:$0xff]
    %v1981 = vld [vmem:[#allocation2 + $0x118] sm:$0xff]
    %v1982 = vld [vmem:[#allocation2 + $0x120] sm:$0xff]
    %v1983 = vld [vmem:[#allocation2 + $0x128] sm:$0xff]
    %v1984 = vld [vmem:[#allocation2 + $0x130] sm:$0xff]
    %v1985 = vld [vmem:[#allocation2 + $0x138] sm:$0xff]
    %v1986 = vld [vmem:[#allocation2 + $0x140] sm:$0xff]
    %v1987 = vld [vmem:[#allocation2 + $0x148] sm:$0xff]
    %v1988 = vld [vmem:[#allocation2 + $0x150] sm:$0xff]
    %v1989 = vld [vmem:[#allocation2 + $0x158] sm:$0xff]
    %v1990 = vld [vmem:[#allocation2 + $0x160] sm:$0xff]
    %v1991 = vld [vmem:[#allocation2 + $0x168] sm:$0xff]
    %v1992 = vld [vmem:[#allocation2 + $0x170] sm:$0xff]
    %v1993 = vld [vmem:[#allocation2 + $0x178] sm:$0xff]
    %v1994 = vld [vmem:[#allocation2 + $0x180] sm:$0xff]
    %v1995 = vld [vmem:[#allocation2 + $0x188] sm:$0xff]
    %v1996 = vld [vmem:[#allocation2 + $0x190] sm:$0xff]
    %v1997 = vld [vmem:[#allocation2 + $0x198] sm:$0xff]
    %v1998 = vld [vmem:[#allocation2 + $0x1a0] sm:$0xff]
    %v1999 = vld [vmem:[#allocation2 + $0x1a8] sm:$0xff]
    %v2000 = vld [vmem:[#allocation2 + $0x1b0] sm:$0xff]
    %v2001 = vld [vmem:[#allocation2 + $0x1b8] sm:$0xff]
    %v2002 = vld [vmem:[#allocation2 + $0x1c0] sm:$0xff]
    %v2003 = vld [vmem:[#allocation2 + $0x1c8] sm:$0xff]
    %v2004 = vld [vmem:[#allocation2 + $0x1d0] sm:$0xff]
    %v2005 = vld [vmem:[#allocation2 + $0x1d8] sm:$0xff]
    %v2006 = vld [vmem:[#allocation2 + $0x1e0] sm:$0xff]
    %v2007 = vld [vmem:[#allocation2 + $0x1e8] sm:$0xff]
    %v2008 = vld [vmem:[#allocation2 + $0x1f0] sm:$0xff]
    %v2009 = vld [vmem:[#allocation2 + $0x1f8] sm:$0xff]
    %v2010 = vpack.c.bf16 %v1932, %v1932
    %v2011 = vpack.c.bf16 %v1936, %v1936
    %v2012 = vpack.c.bf16 %v1940, %v1940
    %v2013 = vpack.c.bf16 %v1944, %v1944
    %s2014 = scalar_lea.vmem %s6, 4
    %v2015 = vld [vmem:[%s2014] ss:$8 sm:$0x3]
    %v2017 = vlaneseq
    %v2018 = vshrl.u32 %v2017, 7
    %v2019 = vsub.s32 0, %v2018
    %v2020 = vrot.slane %v2015, %v2019
    %v2021 = vlaneseq
    %v2022 = vshrl.u32 %v2021, 7
    %v2023 = vsub.s32 1, %v2022
    %v2024 = vrot.slane %v2015, %v2023
    %2027 = vmatprep.subr.bf16.mxu0 %v1947
    %2028 = vmatpush1.bf16.msra.mxu0 %v1946
    %2029 = vmatprep.subr.bf16.mxu0 %v1949
    %2030 = vmatpush1.bf16.msra.mxu0 %v1948
    %2031 = vmatprep.subr.bf16.mxu0 %v1951
    %2032 = vmatpush1.bf16.msra.mxu0 %v1950
    %2033 = vmatprep.subr.bf16.mxu0 %v1953
    %2034 = vmatpush1.bf16.msra.mxu0 %v1952
    %2035 = vmatprep.subr.bf16.mxu0 %v1955
    %2036 = vmatpush1.bf16.msra.mxu0 %v1954
    %2037 = vmatprep.subr.bf16.mxu0 %v1957
    %2038 = vmatpush1.bf16.msra.mxu0 %v1956
    %2039 = vmatprep.subr.bf16.mxu0 %v1959
    %2040 = vmatpush1.bf16.msra.mxu0 %v1958
    %2041 = vmatprep.subr.bf16.mxu0 %v1961
    %2042 = vmatpush1.bf16.msra.mxu0 %v1960
    %2043 = vmatprep.subr.bf16.mxu0 %v1963
    %2044 = vmatpush1.bf16.msra.mxu0 %v1962
    %2045 = vmatprep.subr.bf16.mxu0 %v1965
    %2046 = vmatpush1.bf16.msra.mxu0 %v1964
    %2047 = vmatprep.subr.bf16.mxu0 %v1967
    %2048 = vmatpush1.bf16.msra.mxu0 %v1966
    %2049 = vmatprep.subr.bf16.mxu0 %v1969
    %2050 = vmatpush1.bf16.msra.mxu0 %v1968
    %2051 = vmatprep.subr.bf16.mxu0 %v1971
    %2052 = vmatpush1.bf16.msra.mxu0 %v1970
    %2053 = vmatprep.subr.bf16.mxu0 %v1973
    %2054 = vmatpush1.bf16.msra.mxu0 %v1972
    %2055 = vmatprep.subr.bf16.mxu0 %v1975
    %2056 = vmatpush1.bf16.msra.mxu0 %v1974
    %2057 = vmatprep.subr.bf16.mxu0 %v1977
    %2058 = vmatpush1.bf16.msra.mxu0 %v1976
    %2059 = vmatprep.mubr.bf16.mxu0 %v2011
    %2060 = vmatmul.mubr.bf16.gmra.mrb[0].mxu0 %v2010
    %v2061 = vpop.f32.mrb[0].mxu0
    %v2062 = vadd.f32 %v2020, %v2061
    %v2063 = vpop.f32.mrb[0].mxu0
    %v2064 = vadd.f32 %v2024, %v2063
    %v2065 = vpop.f32.mrb[0].mxu0
    %v2066 = vpop.f32.mrb[0].mxu0
    %2067 = vdwg.mxu0
    %2068 = vmatprep.subr.bf16.mxu0 %v1979
    %2069 = vmatpush1.bf16.msra.mxu0 %v1978
    %2070 = vmatprep.subr.bf16.mxu0 %v1981
    %2071 = vmatpush1.bf16.msra.mxu0 %v1980
    %2072 = vmatprep.subr.bf16.mxu0 %v1983
    %2073 = vmatpush1.bf16.msra.mxu0 %v1982
    %2074 = vmatprep.subr.bf16.mxu0 %v1985
    %2075 = vmatpush1.bf16.msra.mxu0 %v1984
    %2076 = vmatprep.subr.bf16.mxu0 %v1987
    %2077 = vmatpush1.bf16.msra.mxu0 %v1986
    %2078 = vmatprep.subr.bf16.mxu0 %v1989
    %2079 = vmatpush1.bf16.msra.mxu0 %v1988
    %2080 = vmatprep.subr.bf16.mxu0 %v1991
    %2081 = vmatpush1.bf16.msra.mxu0 %v1990
    %2082 = vmatprep.subr.bf16.mxu0 %v1993
    %2083 = vmatpush1.bf16.msra.mxu0 %v1992
    %2084 = vmatprep.subr.bf16.mxu0 %v1995
    %2085 = vmatpush1.bf16.msra.mxu0 %v1994
    %2086 = vmatprep.subr.bf16.mxu0 %v1997
    %2087 = vmatpush1.bf16.msra.mxu0 %v1996
    %2088 = vmatprep.subr.bf16.mxu0 %v1999
    %2089 = vmatpush1.bf16.msra.mxu0 %v1998
    %2090 = vmatprep.subr.bf16.mxu0 %v2001
    %2091 = vmatpush1.bf16.msra.mxu0 %v2000
    %2092 = vmatprep.subr.bf16.mxu0 %v2003
    %2093 = vmatpush1.bf16.msra.mxu0 %v2002
    %2094 = vmatprep.subr.bf16.mxu0 %v2005
    %2095 = vmatpush1.bf16.msra.mxu0 %v2004
    %2096 = vmatprep.subr.bf16.mxu0 %v2007
    %2097 = vmatpush1.bf16.msra.mxu0 %v2006
    %2098 = vmatprep.subr.bf16.mxu0 %v2009
    %2099 = vmatpush1.bf16.msra.mxu0 %v2008
    %2100 = vmatprep.mubr.bf16.mxu0 %v2013
    %2101 = vmatmul.mubr.bf16.gmra.mrb[0].mxu0 %v2012
    %v2102 = vpop.f32.mrb[0].mxu0
    %v2103 = vadd.f32 %v2062, %v2102
    %v2104 = vpop.f32.mrb[0].mxu0
    %v2105 = vadd.f32 %v2064, %v2104
    %v2106 = vpop.f32.mrb[0].mxu0
    %v2107 = vpop.f32.mrb[0].mxu0
    %2108 = vdwg.mxu0
    %v2109 = vmul.f32 %v2103, %v2103
    %v2110 = vmul.f32 %v2105, %v2105
    %v2111 = vmul.f32 %v2103, %v2109
    %v2112 = vmul.f32 %v2105, %v2110
    %v2113 = vmul.f32 %v2111, 0.044715
    %v2114 = vmul.f32 %v2112, 0.044715
    %v2115 = vadd.f32 %v2103, %v2113
    %v2116 = vadd.f32 %v2105, %v2114
    %v2117 = vmul.f32 %v2115, 0.7978846
    %v2118 = vmul.f32 %v2116, 0.7978846
    %v2119 = vtanh.pop %v2117
    %v2120 = vtanh.pop %v2118
    %v2121 = vadd.f32 %v2119, 1.0
    %v2122 = vadd.f32 %v2120, 1.0
    %v2123 = vmul.f32 %v2121, 0.5
    %v2124 = vmul.f32 %v2122, 0.5
    %v2125 = vmul.f32 %v2103, %v2123
    %v2126 = vmul.f32 %v2105, %v2124
    %v2129 = vrot.slane %v2125, 2
    %v2130 = vrot.slane %v2126, 2
    %v2133 = vsel %vm783, 0.0, %v2129
    %v2134 = vsel %vm783, 0.0, %v2130
    %v2137 = vrot.slane %v2133, 2
    %v2138 = vrot.slane %v2129, 2
    %v2139 = vsel %vm783, %v2137, %v2138
    %v2140 = vrot.slane %v2134, 2
    %v2141 = vrot.slane %v2130, 2
    %v2142 = vsel %vm783, %v2140, %v2141
    %v2145 = vrot.slane %v2133, 4
    %v2146 = vrot.slane %v2129, 4
    %v2147 = vsel %vm797, %v2145, %v2146
    %v2148 = vrot.slane %v2134, 4
    %v2149 = vrot.slane %v2130, 4
    %v2150 = vsel %vm797, %v2148, %v2149
    %v2153 = vrot.slane %v2133, 6
    %v2154 = vrot.slane %v2129, 6
    %v2155 = vsel %vm811, %v2153, %v2154
    %v2156 = vrot.slane %v2134, 6
    %v2157 = vrot.slane %v2130, 6
    %v2158 = vsel %vm811, %v2156, %v2157
    %v2161 = vld [vmem:[#allocation2 + $0x200] sm:$0xff]
    %v2162 = vld [vmem:[#allocation2 + $0x208] sm:$0xff]
    %v2163 = vld [vmem:[#allocation2 + $0x210] sm:$0xff]
    %v2164 = vld [vmem:[#allocation2 + $0x218] sm:$0xff]
    %v2165 = vld [vmem:[#allocation2 + $0x220] sm:$0xff]
    %v2166 = vld [vmem:[#allocation2 + $0x228] sm:$0xff]
    %v2167 = vld [vmem:[#allocation2 + $0x230] sm:$0xff]
    %v2168 = vld [vmem:[#allocation2 + $0x238] sm:$0xff]
    %v2169 = vld [vmem:[#allocation2 + $0x240] sm:$0xff]
    %v2170 = vld [vmem:[#allocation2 + $0x248] sm:$0xff]
    %v2171 = vld [vmem:[#allocation2 + $0x250] sm:$0xff]
    %v2172 = vld [vmem:[#allocation2 + $0x258] sm:$0xff]
    %v2173 = vld [vmem:[#allocation2 + $0x260] sm:$0xff]
    %v2174 = vld [vmem:[#allocation2 + $0x268] sm:$0xff]
    %v2175 = vld [vmem:[#allocation2 + $0x270] sm:$0xff]
    %v2176 = vld [vmem:[#allocation2 + $0x278] sm:$0xff]
    %v2177 = vld [vmem:[#allocation2 + $0x280] sm:$0xff]
    %v2178 = vld [vmem:[#allocation2 + $0x288] sm:$0xff]
    %v2179 = vld [vmem:[#allocation2 + $0x290] sm:$0xff]
    %v2180 = vld [vmem:[#allocation2 + $0x298] sm:$0xff]
    %v2181 = vld [vmem:[#allocation2 + $0x2a0] sm:$0xff]
    %v2182 = vld [vmem:[#allocation2 + $0x2a8] sm:$0xff]
    %v2183 = vld [vmem:[#allocation2 + $0x2b0] sm:$0xff]
    %v2184 = vld [vmem:[#allocation2 + $0x2b8] sm:$0xff]
    %v2185 = vld [vmem:[#allocation2 + $0x2c0] sm:$0xff]
    %v2186 = vld [vmem:[#allocation2 + $0x2c8] sm:$0xff]
    %v2187 = vld [vmem:[#allocation2 + $0x2d0] sm:$0xff]
    %v2188 = vld [vmem:[#allocation2 + $0x2d8] sm:$0xff]
    %v2189 = vld [vmem:[#allocation2 + $0x2e0] sm:$0xff]
    %v2190 = vld [vmem:[#allocation2 + $0x2e8] sm:$0xff]
    %v2191 = vld [vmem:[#allocation2 + $0x2f0] sm:$0xff]
    %v2192 = vld [vmem:[#allocation2 + $0x2f8] sm:$0xff]
    %v2193 = vld [vmem:[#allocation2 + $0x300] sm:$0xff]
    %v2194 = vld [vmem:[#allocation2 + $0x308] sm:$0xff]
    %v2195 = vld [vmem:[#allocation2 + $0x310] sm:$0xff]
    %v2196 = vld [vmem:[#allocation2 + $0x318] sm:$0xff]
    %v2197 = vld [vmem:[#allocation2 + $0x320] sm:$0xff]
    %v2198 = vld [vmem:[#allocation2 + $0x328] sm:$0xff]
    %v2199 = vld [vmem:[#allocation2 + $0x330] sm:$0xff]
    %v2200 = vld [vmem:[#allocation2 + $0x338] sm:$0xff]
    %v2201 = vld [vmem:[#allocation2 + $0x340] sm:$0xff]
    %v2202 = vld [vmem:[#allocation2 + $0x348] sm:$0xff]
    %v2203 = vld [vmem:[#allocation2 + $0x350] sm:$0xff]
    %v2204 = vld [vmem:[#allocation2 + $0x358] sm:$0xff]
    %v2205 = vld [vmem:[#allocation2 + $0x360] sm:$0xff]
    %v2206 = vld [vmem:[#allocation2 + $0x368] sm:$0xff]
    %v2207 = vld [vmem:[#allocation2 + $0x370] sm:$0xff]
    %v2208 = vld [vmem:[#allocation2 + $0x378] sm:$0xff]
    %v2209 = vld [vmem:[#allocation2 + $0x380] sm:$0xff]
    %v2210 = vld [vmem:[#allocation2 + $0x388] sm:$0xff]
    %v2211 = vld [vmem:[#allocation2 + $0x390] sm:$0xff]
    %v2212 = vld [vmem:[#allocation2 + $0x398] sm:$0xff]
    %v2213 = vld [vmem:[#allocation2 + $0x3a0] sm:$0xff]
    %v2214 = vld [vmem:[#allocation2 + $0x3a8] sm:$0xff]
    %v2215 = vld [vmem:[#allocation2 + $0x3b0] sm:$0xff]
    %v2216 = vld [vmem:[#allocation2 + $0x3b8] sm:$0xff]
    %v2217 = vld [vmem:[#allocation2 + $0x3c0] sm:$0xff]
    %v2218 = vld [vmem:[#allocation2 + $0x3c8] sm:$0xff]
    %v2219 = vld [vmem:[#allocation2 + $0x3d0] sm:$0xff]
    %v2220 = vld [vmem:[#allocation2 + $0x3d8] sm:$0xff]
    %v2221 = vld [vmem:[#allocation2 + $0x3e0] sm:$0xff]
    %v2222 = vld [vmem:[#allocation2 + $0x3e8] sm:$0xff]
    %v2223 = vld [vmem:[#allocation2 + $0x3f0] sm:$0xff]
    %v2224 = vld [vmem:[#allocation2 + $0x3f8] sm:$0xff]
    %v2225 = vld [vmem:[#allocation2 + $0x400] sm:$0xff]
    %v2226 = vld [vmem:[#allocation2 + $0x408] sm:$0xff]
    %v2227 = vld [vmem:[#allocation2 + $0x410] sm:$0xff]
    %v2228 = vld [vmem:[#allocation2 + $0x418] sm:$0xff]
    %v2229 = vld [vmem:[#allocation2 + $0x420] sm:$0xff]
    %v2230 = vld [vmem:[#allocation2 + $0x428] sm:$0xff]
    %v2231 = vld [vmem:[#allocation2 + $0x430] sm:$0xff]
    %v2232 = vld [vmem:[#allocation2 + $0x438] sm:$0xff]
    %v2233 = vld [vmem:[#allocation2 + $0x440] sm:$0xff]
    %v2234 = vld [vmem:[#allocation2 + $0x448] sm:$0xff]
    %v2235 = vld [vmem:[#allocation2 + $0x450] sm:$0xff]
    %v2236 = vld [vmem:[#allocation2 + $0x458] sm:$0xff]
    %v2237 = vld [vmem:[#allocation2 + $0x460] sm:$0xff]
    %v2238 = vld [vmem:[#allocation2 + $0x468] sm:$0xff]
    %v2239 = vld [vmem:[#allocation2 + $0x470] sm:$0xff]
    %v2240 = vld [vmem:[#allocation2 + $0x478] sm:$0xff]
    %v2241 = vld [vmem:[#allocation2 + $0x480] sm:$0xff]
    %v2242 = vld [vmem:[#allocation2 + $0x488] sm:$0xff]
    %v2243 = vld [vmem:[#allocation2 + $0x490] sm:$0xff]
    %v2244 = vld [vmem:[#allocation2 + $0x498] sm:$0xff]
    %v2245 = vld [vmem:[#allocation2 + $0x4a0] sm:$0xff]
    %v2246 = vld [vmem:[#allocation2 + $0x4a8] sm:$0xff]
    %v2247 = vld [vmem:[#allocation2 + $0x4b0] sm:$0xff]
    %v2248 = vld [vmem:[#allocation2 + $0x4b8] sm:$0xff]
    %v2249 = vld [vmem:[#allocation2 + $0x4c0] sm:$0xff]
    %v2250 = vld [vmem:[#allocation2 + $0x4c8] sm:$0xff]
    %v2251 = vld [vmem:[#allocation2 + $0x4d0] sm:$0xff]
    %v2252 = vld [vmem:[#allocation2 + $0x4d8] sm:$0xff]
    %v2253 = vld [vmem:[#allocation2 + $0x4e0] sm:$0xff]
    %v2254 = vld [vmem:[#allocation2 + $0x4e8] sm:$0xff]
    %v2255 = vld [vmem:[#allocation2 + $0x4f0] sm:$0xff]
    %v2256 = vld [vmem:[#allocation2 + $0x4f8] sm:$0xff]
    %v2257 = vld [vmem:[#allocation2 + $0x500] sm:$0xff]
    %v2258 = vld [vmem:[#allocation2 + $0x508] sm:$0xff]
    %v2259 = vld [vmem:[#allocation2 + $0x510] sm:$0xff]
    %v2260 = vld [vmem:[#allocation2 + $0x518] sm:$0xff]
    %v2261 = vld [vmem:[#allocation2 + $0x520] sm:$0xff]
    %v2262 = vld [vmem:[#allocation2 + $0x528] sm:$0xff]
    %v2263 = vld [vmem:[#allocation2 + $0x530] sm:$0xff]
    %v2264 = vld [vmem:[#allocation2 + $0x538] sm:$0xff]
    %v2265 = vld [vmem:[#allocation2 + $0x540] sm:$0xff]
    %v2266 = vld [vmem:[#allocation2 + $0x548] sm:$0xff]
    %v2267 = vld [vmem:[#allocation2 + $0x550] sm:$0xff]
    %v2268 = vld [vmem:[#allocation2 + $0x558] sm:$0xff]
    %v2269 = vld [vmem:[#allocation2 + $0x560] sm:$0xff]
    %v2270 = vld [vmem:[#allocation2 + $0x568] sm:$0xff]
    %v2271 = vld [vmem:[#allocation2 + $0x570] sm:$0xff]
    %v2272 = vld [vmem:[#allocation2 + $0x578] sm:$0xff]
    %v2273 = vld [vmem:[#allocation2 + $0x580] sm:$0xff]
    %v2274 = vld [vmem:[#allocation2 + $0x588] sm:$0xff]
    %v2275 = vld [vmem:[#allocation2 + $0x590] sm:$0xff]
    %v2276 = vld [vmem:[#allocation2 + $0x598] sm:$0xff]
    %v2277 = vld [vmem:[#allocation2 + $0x5a0] sm:$0xff]
    %v2278 = vld [vmem:[#allocation2 + $0x5a8] sm:$0xff]
    %v2279 = vld [vmem:[#allocation2 + $0x5b0] sm:$0xff]
    %v2280 = vld [vmem:[#allocation2 + $0x5b8] sm:$0xff]
    %v2281 = vld [vmem:[#allocation2 + $0x5c0] sm:$0xff]
    %v2282 = vld [vmem:[#allocation2 + $0x5c8] sm:$0xff]
    %v2283 = vld [vmem:[#allocation2 + $0x5d0] sm:$0xff]
    %v2284 = vld [vmem:[#allocation2 + $0x5d8] sm:$0xff]
    %v2285 = vld [vmem:[#allocation2 + $0x5e0] sm:$0xff]
    %v2286 = vld [vmem:[#allocation2 + $0x5e8] sm:$0xff]
    %v2287 = vld [vmem:[#allocation2 + $0x5f0] sm:$0xff]
    %v2288 = vld [vmem:[#allocation2 + $0x5f8] sm:$0xff]
    %v2289 = vpack.c.bf16 %v2133, %v2133
    %v2290 = vpack.c.bf16 %v2134, %v2134
    %v2291 = vpack.c.bf16 %v2139, %v2139
    %v2292 = vpack.c.bf16 %v2142, %v2142
    %v2293 = vpack.c.bf16 %v2147, %v2147
    %v2294 = vpack.c.bf16 %v2150, %v2150
    %v2295 = vpack.c.bf16 %v2155, %v2155
    %v2296 = vpack.c.bf16 %v2158, %v2158
    %s2297 = scalar_lea.vmem %s6, 5
    %v2298 = vld [vmem:[%s2297] ss:$8 sm:$0x3]
    %v2300 = vlaneseq
    %v2301 = vshrl.u32 %v2300, 7
    %v2302 = vsub.s32 0, %v2301
    %v2303 = vrot.slane %v2298, %v2302
    %v2304 = vlaneseq
    %v2305 = vshrl.u32 %v2304, 7
    %v2306 = vsub.s32 1, %v2305
    %v2307 = vrot.slane %v2298, %v2306
    %2310 = vmatprep.subr.bf16.mxu0 %v2162
    %2311 = vmatpush1.bf16.msra.mxu0 %v2161
    %2312 = vmatprep.subr.bf16.mxu0 %v2164
    %2313 = vmatpush1.bf16.msra.mxu0 %v2163
    %2314 = vmatprep.subr.bf16.mxu0 %v2166
    %2315 = vmatpush1.bf16.msra.mxu0 %v2165
    %2316 = vmatprep.subr.bf16.mxu0 %v2168
    %2317 = vmatpush1.bf16.msra.mxu0 %v2167
    %2318 = vmatprep.subr.bf16.mxu0 %v2170
    %2319 = vmatpush1.bf16.msra.mxu0 %v2169
    %2320 = vmatprep.subr.bf16.mxu0 %v2172
    %2321 = vmatpush1.bf16.msra.mxu0 %v2171
    %2322 = vmatprep.subr.bf16.mxu0 %v2174
    %2323 = vmatpush1.bf16.msra.mxu0 %v2173
    %2324 = vmatprep.subr.bf16.mxu0 %v2176
    %2325 = vmatpush1.bf16.msra.mxu0 %v2175
    %2326 = vmatprep.subr.bf16.mxu0 %v2178
    %2327 = vmatpush1.bf16.msra.mxu0 %v2177
    %2328 = vmatprep.subr.bf16.mxu0 %v2180
    %2329 = vmatpush1.bf16.msra.mxu0 %v2179
    %2330 = vmatprep.subr.bf16.mxu0 %v2182
    %2331 = vmatpush1.bf16.msra.mxu0 %v2181
    %2332 = vmatprep.subr.bf16.mxu0 %v2184
    %2333 = vmatpush1.bf16.msra.mxu0 %v2183
    %2334 = vmatprep.subr.bf16.mxu0 %v2186
    %2335 = vmatpush1.bf16.msra.mxu0 %v2185
    %2336 = vmatprep.subr.bf16.mxu0 %v2188
    %2337 = vmatpush1.bf16.msra.mxu0 %v2187
    %2338 = vmatprep.subr.bf16.mxu0 %v2190
    %2339 = vmatpush1.bf16.msra.mxu0 %v2189
    %2340 = vmatprep.subr.bf16.mxu0 %v2192
    %2341 = vmatpush1.bf16.msra.mxu0 %v2191
    %2342 = vmatprep.mubr.bf16.mxu0 %v2290
    %2343 = vmatmul.mubr.bf16.gmra.mrb[0].mxu0 %v2289
    %v2344 = vpop.f32.mrb[0].mxu0
    %v2345 = vadd.f32 %v2303, %v2344
    %v2346 = vpop.f32.mrb[0].mxu0
    %v2347 = vadd.f32 %v2307, %v2346
    %v2348 = vpop.f32.mrb[0].mxu0
    %v2349 = vpop.f32.mrb[0].mxu0
    %2350 = vdwg.mxu0
    %2351 = vmatprep.subr.bf16.mxu0 %v2194
    %2352 = vmatpush1.bf16.msra.mxu0 %v2193
    %2353 = vmatprep.subr.bf16.mxu0 %v2196
    %2354 = vmatpush1.bf16.msra.mxu0 %v2195
    %2355 = vmatprep.subr.bf16.mxu0 %v2198
    %2356 = vmatpush1.bf16.msra.mxu0 %v2197
    %2357 = vmatprep.subr.bf16.mxu0 %v2200
    %2358 = vmatpush1.bf16.msra.mxu0 %v2199
    %2359 = vmatprep.subr.bf16.mxu0 %v2202
    %2360 = vmatpush1.bf16.msra.mxu0 %v2201
    %2361 = vmatprep.subr.bf16.mxu0 %v2204
    %2362 = vmatpush1.bf16.msra.mxu0 %v2203
    %2363 = vmatprep.subr.bf16.mxu0 %v2206
    %2364 = vmatpush1.bf16.msra.mxu0 %v2205
    %2365 = vmatprep.subr.bf16.mxu0 %v2208
    %2366 = vmatpush1.bf16.msra.mxu0 %v2207
    %2367 = vmatprep.subr.bf16.mxu0 %v2210
    %2368 = vmatpush1.bf16.msra.mxu0 %v2209
    %2369 = vmatprep.subr.bf16.mxu0 %v2212
    %2370 = vmatpush1.bf16.msra.mxu0 %v2211
    %2371 = vmatprep.subr.bf16.mxu0 %v2214
    %2372 = vmatpush1.bf16.msra.mxu0 %v2213
    %2373 = vmatprep.subr.bf16.mxu0 %v2216
    %2374 = vmatpush1.bf16.msra.mxu0 %v2215
    %2375 = vmatprep.subr.bf16.mxu0 %v2218
    %2376 = vmatpush1.bf16.msra.mxu0 %v2217
    %2377 = vmatprep.subr.bf16.mxu0 %v2220
    %2378 = vmatpush1.bf16.msra.mxu0 %v2219
    %2379 = vmatprep.subr.bf16.mxu0 %v2222
    %2380 = vmatpush1.bf16.msra.mxu0 %v2221
    %2381 = vmatprep.subr.bf16.mxu0 %v2224
    %2382 = vmatpush1.bf16.msra.mxu0 %v2223
    %2383 = vmatprep.mubr.bf16.mxu0 %v2292
    %2384 = vmatmul.mubr.bf16.gmra.mrb[0].mxu0 %v2291
    %v2385 = vpop.f32.mrb[0].mxu0
    %v2386 = vadd.f32 %v2345, %v2385
    %v2387 = vpop.f32.mrb[0].mxu0
    %v2388 = vadd.f32 %v2347, %v2387
    %v2389 = vpop.f32.mrb[0].mxu0
    %v2390 = vpop.f32.mrb[0].mxu0
    %2391 = vdwg.mxu0
    %2392 = vmatprep.subr.bf16.mxu0 %v2226
    %2393 = vmatpush1.bf16.msra.mxu0 %v2225
    %2394 = vmatprep.subr.bf16.mxu0 %v2228
    %2395 = vmatpush1.bf16.msra.mxu0 %v2227
    %2396 = vmatprep.subr.bf16.mxu0 %v2230
    %2397 = vmatpush1.bf16.msra.mxu0 %v2229
    %2398 = vmatprep.subr.bf16.mxu0 %v2232
    %2399 = vmatpush1.bf16.msra.mxu0 %v2231
    %2400 = vmatprep.subr.bf16.mxu0 %v2234
    %2401 = vmatpush1.bf16.msra.mxu0 %v2233
    %2402 = vmatprep.subr.bf16.mxu0 %v2236
    %2403 = vmatpush1.bf16.msra.mxu0 %v2235
    %2404 = vmatprep.subr.bf16.mxu0 %v2238
    %2405 = vmatpush1.bf16.msra.mxu0 %v2237
    %2406 = vmatprep.subr.bf16.mxu0 %v2240
    %2407 = vmatpush1.bf16.msra.mxu0 %v2239
    %2408 = vmatprep.subr.bf16.mxu0 %v2242
    %2409 = vmatpush1.bf16.msra.mxu0 %v2241
    %2410 = vmatprep.subr.bf16.mxu0 %v2244
    %2411 = vmatpush1.bf16.msra.mxu0 %v2243
    %2412 = vmatprep.subr.bf16.mxu0 %v2246
    %2413 = vmatpush1.bf16.msra.mxu0 %v2245
    %2414 = vmatprep.subr.bf16.mxu0 %v2248
    %2415 = vmatpush1.bf16.msra.mxu0 %v2247
    %2416 = vmatprep.subr.bf16.mxu0 %v2250
    %2417 = vmatpush1.bf16.msra.mxu0 %v2249
    %2418 = vmatprep.subr.bf16.mxu0 %v2252
    %2419 = vmatpush1.bf16.msra.mxu0 %v2251
    %2420 = vmatprep.subr.bf16.mxu0 %v2254
    %2421 = vmatpush1.bf16.msra.mxu0 %v2253
    %2422 = vmatprep.subr.bf16.mxu0 %v2256
    %2423 = vmatpush1.bf16.msra.mxu0 %v2255
    %2424 = vmatprep.mubr.bf16.mxu0 %v2294
    %2425 = vmatmul.mubr.bf16.gmra.mrb[0].mxu0 %v2293
    %v2426 = vpop.f32.mrb[0].mxu0
    %v2427 = vadd.f32 %v2386, %v2426
    %v2428 = vpop.f32.mrb[0].mxu0
    %v2429 = vadd.f32 %v2388, %v2428
    %v2430 = vpop.f32.mrb[0].mxu0
    %v2431 = vpop.f32.mrb[0].mxu0
    %2432 = vdwg.mxu0
    %2433 = vmatprep.subr.bf16.mxu0 %v2258
    %2434 = vmatpush1.bf16.msra.mxu0 %v2257
    %2435 = vmatprep.subr.bf16.mxu0 %v2260
    %2436 = vmatpush1.bf16.msra.mxu0 %v2259
    %2437 = vmatprep.subr.bf16.mxu0 %v2262
    %2438 = vmatpush1.bf16.msra.mxu0 %v2261
    %2439 = vmatprep.subr.bf16.mxu0 %v2264
    %2440 = vmatpush1.bf16.msra.mxu0 %v2263
    %2441 = vmatprep.subr.bf16.mxu0 %v2266
    %2442 = vmatpush1.bf16.msra.mxu0 %v2265
    %2443 = vmatprep.subr.bf16.mxu0 %v2268
    %2444 = vmatpush1.bf16.msra.mxu0 %v2267
    %2445 = vmatprep.subr.bf16.mxu0 %v2270
    %2446 = vmatpush1.bf16.msra.mxu0 %v2269
    %2447 = vmatprep.subr.bf16.mxu0 %v2272
    %2448 = vmatpush1.bf16.msra.mxu0 %v2271
    %2449 = vmatprep.subr.bf16.mxu0 %v2274
    %2450 = vmatpush1.bf16.msra.mxu0 %v2273
    %2451 = vmatprep.subr.bf16.mxu0 %v2276
    %2452 = vmatpush1.bf16.msra.mxu0 %v2275
    %2453 = vmatprep.subr.bf16.mxu0 %v2278
    %2454 = vmatpush1.bf16.msra.mxu0 %v2277
    %2455 = vmatprep.subr.bf16.mxu0 %v2280
    %2456 = vmatpush1.bf16.msra.mxu0 %v2279
    %2457 = vmatprep.subr.bf16.mxu0 %v2282
    %2458 = vmatpush1.bf16.msra.mxu0 %v2281
    %2459 = vmatprep.subr.bf16.mxu0 %v2284
    %2460 = vmatpush1.bf16.msra.mxu0 %v2283
    %2461 = vmatprep.subr.bf16.mxu0 %v2286
    %2462 = vmatpush1.bf16.msra.mxu0 %v2285
    %2463 = vmatprep.subr.bf16.mxu0 %v2288
    %2464 = vmatpush1.bf16.msra.mxu0 %v2287
    %2465 = vmatprep.mubr.bf16.mxu0 %v2296
    %2466 = vmatmul.mubr.bf16.gmra.mrb[0].mxu0 %v2295
    %v2467 = vpop.f32.mrb[0].mxu0
    %v2468 = vadd.f32 %v2427, %v2467
    %v2469 = vpop.f32.mrb[0].mxu0
    %v2470 = vadd.f32 %v2429, %v2469
    %v2471 = vpop.f32.mrb[0].mxu0
    %v2472 = vpop.f32.mrb[0].mxu0
    %2473 = vdwg.mxu0
    %v2474 = vmul.f32 %v2468, %v2468
    %v2475 = vmul.f32 %v2470, %v2470
    %v2476 = vmul.f32 %v2468, %v2474
    %v2477 = vmul.f32 %v2470, %v2475
    %v2478 = vmul.f32 %v2476, 0.044715
    %v2479 = vmul.f32 %v2477, 0.044715
    %v2480 = vadd.f32 %v2468, %v2478
    %v2481 = vadd.f32 %v2470, %v2479
    %v2482 = vmul.f32 %v2480, 0.7978846
    %v2483 = vmul.f32 %v2481, 0.7978846
    %v2484 = vtanh.pop %v2482
    %v2485 = vtanh.pop %v2483
    %v2486 = vadd.f32 %v2484, 1.0
    %v2487 = vadd.f32 %v2485, 1.0
    %v2488 = vmul.f32 %v2486, 0.5
    %v2489 = vmul.f32 %v2487, 0.5
    %v2490 = vmul.f32 %v2468, %v2488
    %v2491 = vmul.f32 %v2470, %v2489
    %v2492 = vld [vmem:[#allocation2 + $0x600] sm:$0xff]
    %v2493 = vld [vmem:[#allocation2 + $0x608] sm:$0xff]
    %v2494 = vld [vmem:[#allocation2 + $0x610] sm:$0xff]
    %v2495 = vld [vmem:[#allocation2 + $0x618] sm:$0xff]
    %v2496 = vld [vmem:[#allocation2 + $0x620] sm:$0xff]
    %v2497 = vld [vmem:[#allocation2 + $0x628] sm:$0xff]
    %v2498 = vld [vmem:[#allocation2 + $0x630] sm:$0xff]
    %v2499 = vld [vmem:[#allocation2 + $0x638] sm:$0xff]
    %v2500 = vld [vmem:[#allocation2 + $0x640] sm:$0xff]
    %v2501 = vld [vmem:[#allocation2 + $0x648] sm:$0xff]
    %v2502 = vld [vmem:[#allocation2 + $0x650] sm:$0xff]
    %v2503 = vld [vmem:[#allocation2 + $0x658] sm:$0xff]
    %v2504 = vld [vmem:[#allocation2 + $0x660] sm:$0xff]
    %v2505 = vld [vmem:[#allocation2 + $0x668] sm:$0xff]
    %v2506 = vld [vmem:[#allocation2 + $0x670] sm:$0xff]
    %v2507 = vld [vmem:[#allocation2 + $0x678] sm:$0xff]
    %v2508 = vpack.c.bf16 %v1924, %v1924
    %s2509 = scalar_lea.vmem %s6, 6
    %v2510 = vld [vmem:[%s2509] ss:$8 sm:$0x3]
    %v2512 = vlaneseq
    %v2513 = vshrl.u32 %v2512, 7
    %v2514 = vsub.s32 0, %v2513
    %v2515 = vrot.slane %v2510, %v2514
    %v2516 = vlaneseq
    %v2517 = vshrl.u32 %v2516, 7
    %v2518 = vsub.s32 1, %v2517
    %v2519 = vrot.slane %v2510, %v2518
    %2522 = vmatprep.subr.bf16.mxu0 %v2493
    %2523 = vmatpush1.bf16.msra.mxu0 %v2492
    %2524 = vmatprep.subr.bf16.mxu0 %v2495
    %2525 = vmatpush1.bf16.msra.mxu0 %v2494
    %2526 = vmatprep.subr.bf16.mxu0 %v2497
    %2527 = vmatpush1.bf16.msra.mxu0 %v2496
    %2528 = vmatprep.subr.bf16.mxu0 %v2499
    %2529 = vmatpush1.bf16.msra.mxu0 %v2498
    %2530 = vmatprep.subr.bf16.mxu0 %v2501
    %2531 = vmatpush1.bf16.msra.mxu0 %v2500
    %2532 = vmatprep.subr.bf16.mxu0 %v2503
    %2533 = vmatpush1.bf16.msra.mxu0 %v2502
    %2534 = vmatprep.subr.bf16.mxu0 %v2505
    %2535 = vmatpush1.bf16.msra.mxu0 %v2504
    %2536 = vmatprep.subr.bf16.mxu0 %v2507
    %2537 = vmatpush1.bf16.msra.mxu0 %v2506
    %2538 = vmatprep.subr.bf16.mxu0 0
    %2539 = vmatpush1.bf16.msra.mxu0 0
    %2540 = vmatprep.subr.bf16.mxu0 0
    %2541 = vmatpush1.bf16.msra.mxu0 0
    %2542 = vmatprep.subr.bf16.mxu0 0
    %2543 = vmatpush1.bf16.msra.mxu0 0
    %2544 = vmatprep.subr.bf16.mxu0 0
    %2545 = vmatpush1.bf16.msra.mxu0 0
    %2546 = vmatprep.subr.bf16.mxu0 0
    %2547 = vmatpush1.bf16.msra.mxu0 0
    %2548 = vmatprep.subr.bf16.mxu0 0
    %2549 = vmatpush1.bf16.msra.mxu0 0
    %2550 = vmatprep.subr.bf16.mxu0 0
    %2551 = vmatpush1.bf16.msra.mxu0 0
    %2552 = vmatprep.subr.bf16.mxu0 0
    %2553 = vmatpush1.bf16.msra.mxu0 0
    %2554 = vmatprep.mubr.bf16.mxu0 0
    %2555 = vmatmul.mubr.bf16.gmra.mrb[0].mxu0 %v2508
    %v2556 = vpop.f32.mrb[0].mxu0
    %v2557 = vadd.f32 %v2515, %v2556
    %v2558 = vpop.f32.mrb[0].mxu0
    %v2559 = vadd.f32 %v2519, %v2558
    %v2560 = vpop.f32.mrb[0].mxu0
    %v2561 = vpop.f32.mrb[0].mxu0
    %2562 = vdwg.mxu0
    %v2563 = vadd.f32 %v2490, %v2557
    %v2564 = vadd.f32 %v2491, %v2559
    %v2565 = vmul.f32 %v2563, %v2563
    %v2566 = vmul.f32 %v2564, %v2564
    %v2567 = vmul.f32 %v2563, %v2565
    %v2568 = vmul.f32 %v2564, %v2566
    %v2569 = vmul.f32 %v2567, 0.044715
    %v2570 = vmul.f32 %v2568, 0.044715
    %v2571 = vadd.f32 %v2563, %v2569
    %v2572 = vadd.f32 %v2564, %v2570
    %v2573 = vmul.f32 %v2571, 0.7978846
    %v2574 = vmul.f32 %v2572, 0.7978846
    %v2575 = vtanh.pop %v2573
    %v2576 = vtanh.pop %v2574
    %v2577 = vadd.f32 %v2575, 1.0
    %v2578 = vadd.f32 %v2576, 1.0
    %v2579 = vmul.f32 %v2577, 0.5
    %v2580 = vmul.f32 %v2578, 0.5
    %v2581 = vmul.f32 %v2563, %v2579
    %v2582 = vmul.f32 %v2564, %v2580
    %s2583 = smul.u32 4, 160
    %s2584 = smul.u32 %s2583, 1
    %s2585 = sshll.u32 %s2584, 4
    %2586 = dma.done %s61, %s2585
    %v2589 = vrot.slane %v2581, 4
    %v2590 = vrot.slane %v2582, 4
    %v2593 = vsel %vm797, 0.0, %v2589
    %v2594 = vsel %vm797, 0.0, %v2590
    %v2597 = vrot.slane %v2593, 4
    %v2598 = vrot.slane %v2589, 4
    %v2599 = vsel %vm797, %v2597, %v2598
    %v2600 = vrot.slane %v2594, 4
    %v2601 = vrot.slane %v2590, 4
    %v2602 = vsel %vm797, %v2600, %v2601
    %v2605 = vld [vmem:[#allocation3] sm:$0xff]
    %v2606 = vld [vmem:[#allocation3 + $0x8] sm:$0xff]
    %v2607 = vld [vmem:[#allocation3 + $0x10] sm:$0xff]
    %v2608 = vld [vmem:[#allocation3 + $0x18] sm:$0xff]
    %v2609 = vld [vmem:[#allocation3 + $0x20] sm:$0xff]
    %v2610 = vld [vmem:[#allocation3 + $0x28] sm:$0xff]
    %v2611 = vld [vmem:[#allocation3 + $0x30] sm:$0xff]
    %v2612 = vld [vmem:[#allocation3 + $0x38] sm:$0xff]
    %v2613 = vld [vmem:[#allocation3 + $0x40] sm:$0xff]
    %v2614 = vld [vmem:[#allocation3 + $0x48] sm:$0xff]
    %v2615 = vld [vmem:[#allocation3 + $0x50] sm:$0xff]
    %v2616 = vld [vmem:[#allocation3 + $0x58] sm:$0xff]
    %v2617 = vld [vmem:[#allocation3 + $0x60] sm:$0xff]
    %v2618 = vld [vmem:[#allocation3 + $0x68] sm:$0xff]
    %v2619 = vld [vmem:[#allocation3 + $0x70] sm:$0xff]
    %v2620 = vld [vmem:[#allocation3 + $0x78] sm:$0xff]
    %v2621 = vld [vmem:[#allocation3 + $0x80] sm:$0xff]
    %v2622 = vld [vmem:[#allocation3 + $0x88] sm:$0xff]
    %v2623 = vld [vmem:[#allocation3 + $0x90] sm:$0xff]
    %v2624 = vld [vmem:[#allocation3 + $0x98] sm:$0xff]
    %v2625 = vld [vmem:[#allocation3 + $0xa0] sm:$0xff]
    %v2626 = vld [vmem:[#allocation3 + $0xa8] sm:$0xff]
    %v2627 = vld [vmem:[#allocation3 + $0xb0] sm:$0xff]
    %v2628 = vld [vmem:[#allocation3 + $0xb8] sm:$0xff]
    %v2629 = vld [vmem:[#allocation3 + $0xc0] sm:$0xff]
    %v2630 = vld [vmem:[#allocation3 + $0xc8] sm:$0xff]
    %v2631 = vld [vmem:[#allocation3 + $0xd0] sm:$0xff]
    %v2632 = vld [vmem:[#allocation3 + $0xd8] sm:$0xff]
    %v2633 = vld [vmem:[#allocation3 + $0xe0] sm:$0xff]
    %v2634 = vld [vmem:[#allocation3 + $0xe8] sm:$0xff]
    %v2635 = vld [vmem:[#allocation3 + $0xf0] sm:$0xff]
    %v2636 = vld [vmem:[#allocation3 + $0xf8] sm:$0xff]
    %v2637 = vpack.c.bf16 %v2593, %v2593
    %v2638 = vpack.c.bf16 %v2594, %v2594
    %v2639 = vpack.c.bf16 %v2599, %v2599
    %v2640 = vpack.c.bf16 %v2602, %v2602
    %v2641 = vld [vmem:[%s6 + $0x7] ss:$0 sm:$0xff]
    %2642 = vmatprep.subr.bf16.mxu0 0
    %2643 = vmatpush1.bf16.msra.mxu0 %v2605
    %2644 = vmatprep.subr.bf16.mxu0 0
    %2645 = vmatpush1.bf16.msra.mxu0 %v2606
    %2646 = vmatprep.subr.bf16.mxu0 0
    %2647 = vmatpush1.bf16.msra.mxu0 %v2607
    %2648 = vmatprep.subr.bf16.mxu0 0
    %2649 = vmatpush1.bf16.msra.mxu0 %v2608
    %2650 = vmatprep.subr.bf16.mxu0 0
    %2651 = vmatpush1.bf16.msra.mxu0 %v2609
    %2652 = vmatprep.subr.bf16.mxu0 0
    %2653 = vmatpush1.bf16.msra.mxu0 %v2610
    %2654 = vmatprep.subr.bf16.mxu0 0
    %2655 = vmatpush1.bf16.msra.mxu0 %v2611
    %2656 = vmatprep.subr.bf16.mxu0 0
    %2657 = vmatpush1.bf16.msra.mxu0 %v2612
    %2658 = vmatprep.subr.bf16.mxu0 0
    %2659 = vmatpush1.bf16.msra.mxu0 %v2613
    %2660 = vmatprep.subr.bf16.mxu0 0
    %2661 = vmatpush1.bf16.msra.mxu0 %v2614
    %2662 = vmatprep.subr.bf16.mxu0 0
    %2663 = vmatpush1.bf16.msra.mxu0 %v2615
    %2664 = vmatprep.subr.bf16.mxu0 0
    %2665 = vmatpush1.bf16.msra.mxu0 %v2616
    %2666 = vmatprep.subr.bf16.mxu0 0
    %2667 = vmatpush1.bf16.msra.mxu0 %v2617
    %2668 = vmatprep.subr.bf16.mxu0 0
    %2669 = vmatpush1.bf16.msra.mxu0 %v2618
    %2670 = vmatprep.subr.bf16.mxu0 0
    %2671 = vmatpush1.bf16.msra.mxu0 %v2619
    %2672 = vmatprep.subr.bf16.mxu0 0
    %2673 = vmatpush1.bf16.msra.mxu0 %v2620
    %2674 = vmatprep.mubr.bf16.mxu0 %v2638
    %2675 = vmatmul.mubr.bf16.gmra.mrb[0].mxu0 %v2637
    %v2676 = vpop.f32.mrb[0].mxu0
    %v2677 = vadd.f32 %v2641, %v2676
    %v2678 = vpop.f32.mrb[0].mxu0
    %v2679 = vpop.f32.mrb[0].mxu0
    %v2680 = vpop.f32.mrb[0].mxu0
    %2681 = vdwg.mxu0
    %2682 = vmatprep.subr.bf16.mxu0 0
    %2683 = vmatpush1.bf16.msra.mxu0 %v2621
    %2684 = vmatprep.subr.bf16.mxu0 0
    %2685 = vmatpush1.bf16.msra.mxu0 %v2622
    %2686 = vmatprep.subr.bf16.mxu0 0
    %2687 = vmatpush1.bf16.msra.mxu0 %v2623
    %2688 = vmatprep.subr.bf16.mxu0 0
    %2689 = vmatpush1.bf16.msra.mxu0 %v2624
    %2690 = vmatprep.subr.bf16.mxu0 0
    %2691 = vmatpush1.bf16.msra.mxu0 %v2625
    %2692 = vmatprep.subr.bf16.mxu0 0
    %2693 = vmatpush1.bf16.msra.mxu0 %v2626
    %2694 = vmatprep.subr.bf16.mxu0 0
    %2695 = vmatpush1.bf16.msra.mxu0 %v2627
    %2696 = vmatprep.subr.bf16.mxu0 0
    %2697 = vmatpush1.bf16.msra.mxu0 %v2628
    %2698 = vmatprep.subr.bf16.mxu0 0
    %2699 = vmatpush1.bf16.msra.mxu0 %v2629
    %2700 = vmatprep.subr.bf16.mxu0 0
    %2701 = vmatpush1.bf16.msra.mxu0 %v2630
    %2702 = vmatprep.subr.bf16.mxu0 0
    %2703 = vmatpush1.bf16.msra.mxu0 %v2631
    %2704 = vmatprep.subr.bf16.mxu0 0
    %2705 = vmatpush1.bf16.msra.mxu0 %v2632
    %2706 = vmatprep.subr.bf16.mxu0 0
    %2707 = vmatpush1.bf16.msra.mxu0 %v2633
    %2708 = vmatprep.subr.bf16.mxu0 0
    %2709 = vmatpush1.bf16.msra.mxu0 %v2634
    %2710 = vmatprep.subr.bf16.mxu0 0
    %2711 = vmatpush1.bf16.msra.mxu0 %v2635
    %2712 = vmatprep.subr.bf16.mxu0 0
    %2713 = vmatpush1.bf16.msra.mxu0 %v2636
    %2714 = vmatprep.mubr.bf16.mxu0 %v2640
    %2715 = vmatmul.mubr.bf16.gmra.mrb[0].mxu0 %v2639
    %v2716 = vpop.f32.mrb[0].mxu0
    %v2717 = vadd.f32 %v2677, %v2716
    %v2718 = vpop.f32.mrb[0].mxu0
    %v2719 = vpop.f32.mrb[0].mxu0
    %v2720 = vpop.f32.mrb[0].mxu0
    %2721 = vdwg.mxu0
    %v2722 = vmul.f32 %v2717, %v2717
    %v2723 = vmul.f32 %v2717, %v2722
    %v2724 = vmul.f32 %v2723, 0.044715
    %v2725 = vadd.f32 %v2717, %v2724
    %v2726 = vmul.f32 %v2725, 0.7978846
    %v2727 = vtanh.pop %v2726
    %v2728 = vadd.f32 %v2727, 1.0
    %v2729 = vmul.f32 %v2728, 0.5
    %v2730 = vmul.f32 %v2717, %v2729
    %v2732 = vrot.slane %v2730, 4
    %v2734 = vsel %vm797, 0.0, %v2732
    %v2736 = vrot.slane %v2734, 4
    %v2737 = vrot.slane %v2732, 4
    %v2738 = vsel %vm797, %v2736, %v2737
    %v2740 = vld [vmem:[#allocation3 + $0x100] sm:$0xff]
    %v2741 = vld [vmem:[#allocation3 + $0x108] sm:$0xff]
    %v2742 = vld [vmem:[#allocation3 + $0x110] sm:$0xff]
    %v2743 = vld [vmem:[#allocation3 + $0x118] sm:$0xff]
    %v2744 = vld [vmem:[#allocation3 + $0x120] sm:$0xff]
    %v2745 = vld [vmem:[#allocation3 + $0x128] sm:$0xff]
    %v2746 = vld [vmem:[#allocation3 + $0x130] sm:$0xff]
    %v2747 = vld [vmem:[#allocation3 + $0x138] sm:$0xff]
    %v2748 = vld [vmem:[#allocation3 + $0x140] sm:$0xff]
    %v2749 = vld [vmem:[#allocation3 + $0x148] sm:$0xff]
    %v2750 = vld [vmem:[#allocation3 + $0x150] sm:$0xff]
    %v2751 = vld [vmem:[#allocation3 + $0x158] sm:$0xff]
    %v2752 = vld [vmem:[#allocation3 + $0x160] sm:$0xff]
    %v2753 = vld [vmem:[#allocation3 + $0x168] sm:$0xff]
    %v2754 = vld [vmem:[#allocation3 + $0x170] sm:$0xff]
    %v2755 = vld [vmem:[#allocation3 + $0x178] sm:$0xff]
    %v2756 = vpack.c.bf16 %v2734, %v2734
    %v2757 = vpack.c.bf16 %v2738, %v2738
    %v2758 = vld [vmem:[%s6 + $0x10] ss:$0 sm:$0xff]
    %2759 = vmatprep.subr.bf16.mxu0 0
    %2760 = vmatpush1.bf16.msra.mxu0 %v2740
    %2761 = vmatprep.subr.bf16.mxu0 0
    %2762 = vmatpush1.bf16.msra.mxu0 %v2741
    %2763 = vmatprep.subr.bf16.mxu0 0
    %2764 = vmatpush1.bf16.msra.mxu0 %v2742
    %2765 = vmatprep.subr.bf16.mxu0 0
    %2766 = vmatpush1.bf16.msra.mxu0 %v2743
    %2767 = vmatprep.subr.bf16.mxu0 0
    %2768 = vmatpush1.bf16.msra.mxu0 %v2744
    %2769 = vmatprep.subr.bf16.mxu0 0
    %2770 = vmatpush1.bf16.msra.mxu0 %v2745
    %2771 = vmatprep.subr.bf16.mxu0 0
    %2772 = vmatpush1.bf16.msra.mxu0 %v2746
    %2773 = vmatprep.subr.bf16.mxu0 0
    %2774 = vmatpush1.bf16.msra.mxu0 %v2747
    %2775 = vmatprep.subr.bf16.mxu0 0
    %2776 = vmatpush1.bf16.msra.mxu0 %v2748
    %2777 = vmatprep.subr.bf16.mxu0 0
    %2778 = vmatpush1.bf16.msra.mxu0 %v2749
    %2779 = vmatprep.subr.bf16.mxu0 0
    %2780 = vmatpush1.bf16.msra.mxu0 %v2750
    %2781 = vmatprep.subr.bf16.mxu0 0
    %2782 = vmatpush1.bf16.msra.mxu0 %v2751
    %2783 = vmatprep.subr.bf16.mxu0 0
    %2784 = vmatpush1.bf16.msra.mxu0 %v2752
    %2785 = vmatprep.subr.bf16.mxu0 0
    %2786 = vmatpush1.bf16.msra.mxu0 %v2753
    %2787 = vmatprep.subr.bf16.mxu0 0
    %2788 = vmatpush1.bf16.msra.mxu0 %v2754
    %2789 = vmatprep.subr.bf16.mxu0 0
    %2790 = vmatpush1.bf16.msra.mxu0 %v2755
    %2791 = vmatprep.mubr.bf16.mxu0 %v2757
    %2792 = vmatmul.mubr.bf16.gmra.mrb[0].mxu0 %v2756
    %v2793 = vpop.f32.mrb[0].mxu0
    %v2794 = vadd.f32 %v2758, %v2793
    %v2795 = vpop.f32.mrb[0].mxu0
    %v2796 = vpop.f32.mrb[0].mxu0
    %v2797 = vpop.f32.mrb[0].mxu0
    %2798 = vdwg.mxu0
    %v2799 = vmul.f32 %v2794, %v2794
    %v2800 = vmul.f32 %v2794, %v2799
    %v2801 = vmul.f32 %v2800, 0.044715
    %v2802 = vadd.f32 %v2794, %v2801
    %v2803 = vmul.f32 %v2802, 0.7978846
    %v2804 = vtanh.pop %v2803
    %v2805 = vadd.f32 %v2804, 1.0
    %v2806 = vmul.f32 %v2805, 0.5
    %v2807 = vmul.f32 %v2794, %v2806
    %v2808 = vld [vmem:[#allocation3 + $0x180] sm:$0xff]
    %v2809 = vld [vmem:[#allocation3 + $0x188] sm:$0xff]
    %v2810 = vld [vmem:[#allocation3 + $0x190] sm:$0xff]
    %v2811 = vld [vmem:[#allocation3 + $0x198] sm:$0xff]
    %v2812 = vld [vmem:[#allocation3 + $0x1a0] sm:$0xff]
    %v2813 = vld [vmem:[#allocation3 + $0x1a8] sm:$0xff]
    %v2814 = vld [vmem:[#allocation3 + $0x1b0] sm:$0xff]
    %v2815 = vld [vmem:[#allocation3 + $0x1b8] sm:$0xff]
    %v2816 = vld [vmem:[#allocation3 + $0x1c0] sm:$0xff]
    %v2817 = vld [vmem:[#allocation3 + $0x1c8] sm:$0xff]
    %v2818 = vld [vmem:[#allocation3 + $0x1d0] sm:$0xff]
    %v2819 = vld [vmem:[#allocation3 + $0x1d8] sm:$0xff]
    %v2820 = vld [vmem:[#allocation3 + $0x1e0] sm:$0xff]
    %v2821 = vld [vmem:[#allocation3 + $0x1e8] sm:$0xff]
    %v2822 = vld [vmem:[#allocation3 + $0x1f0] sm:$0xff]
    %v2823 = vld [vmem:[#allocation3 + $0x1f8] sm:$0xff]
    %v2824 = vpack.c.bf16 %v2581, %v2581
    %v2825 = vpack.c.bf16 %v2582, %v2582
    %v2826 = vld [vmem:[%s6 + $0x11] ss:$0 sm:$0xff]
    %2827 = vmatprep.subr.bf16.mxu0 0
    %2828 = vmatpush1.bf16.msra.mxu0 %v2808
    %2829 = vmatprep.subr.bf16.mxu0 0
    %2830 = vmatpush1.bf16.msra.mxu0 %v2809
    %2831 = vmatprep.subr.bf16.mxu0 0
    %2832 = vmatpush1.bf16.msra.mxu0 %v2810
    %2833 = vmatprep.subr.bf16.mxu0 0
    %2834 = vmatpush1.bf16.msra.mxu0 %v2811
    %2835 = vmatprep.subr.bf16.mxu0 0
    %2836 = vmatpush1.bf16.msra.mxu0 %v2812
    %2837 = vmatprep.subr.bf16.mxu0 0
    %2838 = vmatpush1.bf16.msra.mxu0 %v2813
    %2839 = vmatprep.subr.bf16.mxu0 0
    %2840 = vmatpush1.bf16.msra.mxu0 %v2814
    %2841 = vmatprep.subr.bf16.mxu0 0
    %2842 = vmatpush1.bf16.msra.mxu0 %v2815
    %2843 = vmatprep.subr.bf16.mxu0 0
    %2844 = vmatpush1.bf16.msra.mxu0 %v2816
    %2845 = vmatprep.subr.bf16.mxu0 0
    %2846 = vmatpush1.bf16.msra.mxu0 %v2817
    %2847 = vmatprep.subr.bf16.mxu0 0
    %2848 = vmatpush1.bf16.msra.mxu0 %v2818
    %2849 = vmatprep.subr.bf16.mxu0 0
    %2850 = vmatpush1.bf16.msra.mxu0 %v2819
    %2851 = vmatprep.subr.bf16.mxu0 0
    %2852 = vmatpush1.bf16.msra.mxu0 %v2820
    %2853 = vmatprep.subr.bf16.mxu0 0
    %2854 = vmatpush1.bf16.msra.mxu0 %v2821
    %2855 = vmatprep.subr.bf16.mxu0 0
    %2856 = vmatpush1.bf16.msra.mxu0 %v2822
    %2857 = vmatprep.subr.bf16.mxu0 0
    %2858 = vmatpush1.bf16.msra.mxu0 %v2823
    %2859 = vmatprep.mubr.bf16.mxu0 %v2825
    %2860 = vmatmul.mubr.bf16.gmra.mrb[0].mxu0 %v2824
    %v2861 = vpop.f32.mrb[0].mxu0
    %v2862 = vadd.f32 %v2826, %v2861
    %v2863 = vpop.f32.mrb[0].mxu0
    %v2864 = vpop.f32.mrb[0].mxu0
    %v2865 = vpop.f32.mrb[0].mxu0
    %2866 = vdwg.mxu0
    %v2867 = vadd.f32 %v2807, %v2862
    %v2868 = vmul.f32 %v2867, %v2867
    %v2869 = vmul.f32 %v2867, %v2868
    %v2870 = vmul.f32 %v2869, 0.044715
    %v2871 = vadd.f32 %v2867, %v2870
    %v2872 = vmul.f32 %v2871, 0.7978846
    %v2873 = vtanh.pop %v2872
    %v2874 = vadd.f32 %v2873, 1.0
    %v2875 = vmul.f32 %v2874, 0.5
    %v2876 = vmul.f32 %v2867, %v2875
    %2877 = vst [vmem:[#allocation5] sm:$0xff] %v2876
    %v2878 = vld [vmem:[#allocation3 + $0x200] sm:$0xff]
    %v2879 = vld [vmem:[#allocation3 + $0x208] sm:$0xff]
    %v2880 = vld [vmem:[#allocation3 + $0x210] sm:$0xff]
    %v2881 = vld [vmem:[#allocation3 + $0x218] sm:$0xff]
    %v2882 = vld [vmem:[#allocation3 + $0x220] sm:$0xff]
    %v2883 = vld [vmem:[#allocation3 + $0x228] sm:$0xff]
    %v2884 = vld [vmem:[#allocation3 + $0x230] sm:$0xff]
    %v2885 = vld [vmem:[#allocation3 + $0x238] sm:$0xff]
    %v2886 = vpack.c.bf16 %v2876, %v2876
    %v2887 = vld [vmem:[%s6 + $0x12] ss:$0 sm:$0xff]
    %2888 = vmatprep.subr.bf16.mxu0 0
    %2889 = vmatpush1.bf16.msra.mxu0 %v2878
    %2890 = vmatprep.subr.bf16.mxu0 0
    %2891 = vmatpush1.bf16.msra.mxu0 %v2879
    %2892 = vmatprep.subr.bf16.mxu0 0
    %2893 = vmatpush1.bf16.msra.mxu0 %v2880
    %2894 = vmatprep.subr.bf16.mxu0 0
    %2895 = vmatpush1.bf16.msra.mxu0 %v2881
    %2896 = vmatprep.subr.bf16.mxu0 0
    %2897 = vmatpush1.bf16.msra.mxu0 %v2882
    %2898 = vmatprep.subr.bf16.mxu0 0
    %2899 = vmatpush1.bf16.msra.mxu0 %v2883
    %2900 = vmatprep.subr.bf16.mxu0 0
    %2901 = vmatpush1.bf16.msra.mxu0 %v2884
    %2902 = vmatprep.subr.bf16.mxu0 0
    %2903 = vmatpush1.bf16.msra.mxu0 %v2885
    %2904 = vmatprep.subr.bf16.mxu0 0
    %2905 = vmatpush1.bf16.msra.mxu0 0
    %2906 = vmatprep.subr.bf16.mxu0 0
    %2907 = vmatpush1.bf16.msra.mxu0 0
    %2908 = vmatprep.subr.bf16.mxu0 0
    %2909 = vmatpush1.bf16.msra.mxu0 0
    %2910 = vmatprep.subr.bf16.mxu0 0
    %2911 = vmatpush1.bf16.msra.mxu0 0
    %2912 = vmatprep.subr.bf16.mxu0 0
    %2913 = vmatpush1.bf16.msra.mxu0 0
    %2914 = vmatprep.subr.bf16.mxu0 0
    %2915 = vmatpush1.bf16.msra.mxu0 0
    %2916 = vmatprep.subr.bf16.mxu0 0
    %2917 = vmatpush1.bf16.msra.mxu0 0
    %2918 = vmatprep.subr.bf16.mxu0 0
    %2919 = vmatpush1.bf16.msra.mxu0 0
    %2920 = vmatprep.mubr.bf16.mxu0 0
    %2921 = vmatmul.mubr.bf16.gmra.mrb[0].mxu0 %v2886
    %v2922 = vpop.f32.mrb[0].mxu0
    %v2923 = vadd.f32 %v2887, %v2922
    %v2924 = vpop.f32.mrb[0].mxu0
    %v2925 = vpop.f32.mrb[0].mxu0
    %v2926 = vpop.f32.mrb[0].mxu0
    %2927 = vdwg.mxu0
    %vm2928 = vcmp.ge.f32.partialorder %v2923, 0.0
    %v2929 = vmul.f32 %v2923, 0.2
    %v2930 = vsel %vm2928, %v2923, %v2929
    %v2931 = vld [vmem:[#allocation3 + $0x240] sm:$0xff]
    %v2932 = vld [vmem:[#allocation3 + $0x248] sm:$0xff]
    %v2933 = vld [vmem:[#allocation3 + $0x250] sm:$0xff]
    %v2934 = vld [vmem:[#allocation3 + $0x258] sm:$0xff]
    %v2935 = vld [vmem:[#allocation3 + $0x260] sm:$0xff]
    %v2936 = vld [vmem:[#allocation3 + $0x268] sm:$0xff]
    %v2937 = vld [vmem:[#allocation3 + $0x270] sm:$0xff]
    %v2938 = vld [vmem:[#allocation3 + $0x278] sm:$0xff]
    %v2939 = vpack.c.bf16 %v2930, %v2930
    %v2940 = vld [vmem:[%s6 + $0x13] ss:$0 sm:$0xff]
    %2941 = vmatprep.subr.bf16.mxu0 0
    %2942 = vmatpush1.bf16.msra.mxu0 %v2931
    %2943 = vmatprep.subr.bf16.mxu0 0
    %2944 = vmatpush1.bf16.msra.mxu0 %v2932
    %2945 = vmatprep.subr.bf16.mxu0 0
    %2946 = vmatpush1.bf16.msra.mxu0 %v2933
    %2947 = vmatprep.subr.bf16.mxu0 0
    %2948 = vmatpush1.bf16.msra.mxu0 %v2934
    %2949 = vmatprep.subr.bf16.mxu0 0
    %2950 = vmatpush1.bf16.msra.mxu0 %v2935
    %2951 = vmatprep.subr.bf16.mxu0 0
    %2952 = vmatpush1.bf16.msra.mxu0 %v2936
    %2953 = vmatprep.subr.bf16.mxu0 0
    %2954 = vmatpush1.bf16.msra.mxu0 %v2937
    %2955 = vmatprep.subr.bf16.mxu0 0
    %2956 = vmatpush1.bf16.msra.mxu0 %v2938
    %2957 = vmatprep.subr.bf16.mxu0 0
    %2958 = vmatpush1.bf16.msra.mxu0 0
    %2959 = vmatprep.subr.bf16.mxu0 0
    %2960 = vmatpush1.bf16.msra.mxu0 0
    %2961 = vmatprep.subr.bf16.mxu0 0
    %2962 = vmatpush1.bf16.msra.mxu0 0
    %2963 = vmatprep.subr.bf16.mxu0 0
    %2964 = vmatpush1.bf16.msra.mxu0 0
    %2965 = vmatprep.subr.bf16.mxu0 0
    %2966 = vmatpush1.bf16.msra.mxu0 0
    %2967 = vmatprep.subr.bf16.mxu0 0
    %2968 = vmatpush1.bf16.msra.mxu0 0
    %2969 = vmatprep.subr.bf16.mxu0 0
    %2970 = vmatpush1.bf16.msra.mxu0 0
    %2971 = vmatprep.subr.bf16.mxu0 0
    %2972 = vmatpush1.bf16.msra.mxu0 0
    %2973 = vmatprep.mubr.bf16.mxu0 0
    %2974 = vmatmul.mubr.bf16.gmra.mrb[0].mxu0 %v2939
    %v2975 = vpop.f32.mrb[0].mxu0
    %v2976 = vadd.f32 %v2940, %v2975
    %v2977 = vpop.f32.mrb[0].mxu0
    %v2978 = vpop.f32.mrb[0].mxu0
    %v2979 = vpop.f32.mrb[0].mxu0
    %2980 = vdwg.mxu0
    %2981 = vst [vmem:[%s8] sm:$0xff] %v2976
    // Predicated region
    $region26: #{quadrotor_forward.1} parent=1 // pred_check
      _
    $region27: #{quadrotor_forward.1} parent=1 // pred_check_branch
      %2983 = sbr.rel (0) target = $region29
    $region28: #{quadrotor_forward.1} parent=1 // pred_region
      %s2985 = ssub.s32 128, 128
      %2986 = vsyncadd [#allocation6], %s2985
      %s2988 = sshll.u32 [#allocation5], 4
      %s2989 = int_to_ptr.vmem [resolvable:$true] %s2988
      %2991 = dma.vmem_to_hbm [thread:$0]  %s2989, 128, %s7, [#allocation6]
    $region29: #{quadrotor_forward.1} parent=1 // pred_fallthru
      _
    // Predicated region
    $region30: #{quadrotor_forward.1} parent=1 // pred_check
      _
    $region31: #{quadrotor_forward.1} parent=1 // pred_check_branch
      %2993 = sbr.rel (0) target = $region33
    $region32: #{quadrotor_forward.1} parent=1 // pred_region
      _
    $region33: #{quadrotor_forward.1} parent=1 // pred_fallthru
      _
    // Predicated region
    $region34: #{quadrotor_forward.1} parent=1 // pred_check
      _
    $region35: #{quadrotor_forward.1} parent=1 // pred_check_branch
      %2995 = sbr.rel (0) target = $region37
    $region36: #{quadrotor_forward.1} parent=1 // pred_region
      %2996 = dma.done [#allocation6], 128
    $region37: #{quadrotor_forward.1} parent=1 // pred_fallthru
      _
    // Predicated region
    $region38: #{quadrotor_forward.1} parent=1 // pred_check
      _
    $region39: #{quadrotor_forward.1} parent=1 // pred_check_branch
      %2998 = sbr.rel (0) target = $region41
    $region40: #{quadrotor_forward.1} parent=1 // pred_region
      _
    $region41: #{quadrotor_forward.1} parent=1 // pred_fallthru
      _
    %2999 = vsyncpa [#allocation6], 1
  %3000 = vsyncmov [#allocation4]
  %s3001 = vpop.sfrf %3000
  %p3002 = scmp.eq.s32.totalorder %s3001, 0
  %p3003 = pneg %p3002
  %3005 = shalt.err (%p3003)
  %s3006 = scalar_lea.sflag [#allocation4], 1
  %3007 = vsyncmov %s3006
  %s3008 = vpop.sfrf %3007
  %p3009 = scmp.eq.s32.totalorder %s3008, 0
  %p3010 = pneg %p3009
  %3012 = shalt.err (%p3010)

</llo_original>
